<compile_context>
chip_gen: v5e
topology: v5e:2x2
jax: 0.10.0
libtpu: 0.0.40
codegen_flags: <defaults>
</compile_context>

<pallas_src>
import jax
import jax.numpy as jnp
from jax import lax
from jax.experimental import pallas as pl
from jax.experimental.pallas import tpu as pltpu

# ----- model hyper-parameters (module defaults) ------------------------------
DATALEN = 64              # n_samples (datalen)
CLASSNUM = 10
NB = 3                    # filter banks  -> in_channels of block_1
NK = 3                    # DSP subspaces -> spatial height of the input
C1, C2, C3 = 15, 30, 12   # channel counts of block_1 / block_2 / block_3
C1P = 16                  # C1 padded to 16 -> per-row feature block = 16*64 = 1024 lanes
KW = 25                   # temporal kernel width
PAD = KW // 2             # 'same' padding for the odd temporal kernel
BN_EPS = 1e-5
TB = 8                    # samples processed per grid step (batch tile)

F1 = C1P * DATALEN        # 1024  (block_1 features per spatial row, lane-aligned)
F2 = 2 * F1               # 2048  (block_2 features: 2 grouped-conv branches)
F3 = C3 * DATALEN         # 768   (block_3 features = flattened linear input)


def _elu(v):
    return jnp.where(v > 0, v, jnp.exp(jnp.minimum(v, 0.0)) - 1.0)


# --------------------------------- kernel ------------------------------------
def _kernel(x_ref, b1_ref, bias1_ref, w2_ref, t2_ref,
            b3_ref, bias3_ref, wl_ref, bl_ref, out_ref):
    # block_1: Conv2d(Nb->15,(1,25),same) + BN1 + ELU, all Nk rows and TB
    # samples in ONE banded matmul: (Nk*TB, Nb*W) @ (Nb*W, C1P*W).
    h1 = _elu(jnp.dot(x_ref[...], b1_ref[...],
                      preferred_element_type=jnp.float32) + bias1_ref[...])

    # block_2: Conv2d(15->30,(Nk,1),groups=15) + BN2 + ELU.  Rows of h1 are
    # grouped h-major, so the three spatial rows are aligned sublane slices.
    h1a = h1[0 * TB:1 * TB]
    h1b = h1[1 * TB:2 * TB]
    h1c = h1[2 * TB:3 * TB]
    h2a = _elu(h1a * w2_ref[0, 0] + h1b * w2_ref[0, 1] + h1c * w2_ref[0, 2]
               + t2_ref[0])
    h2b = _elu(h1a * w2_ref[1, 0] + h1b * w2_ref[1, 1] + h1c * w2_ref[1, 2]
               + t2_ref[1])
    h2 = jnp.concatenate([h2a, h2b], axis=1)                       # (TB, F2)

    # block_3: Conv2d(30->12,(1,25),same,bias) + BN3 + ELU as one banded
    # matmul (conv bias + BN3 folded into bias3 / B3).
    h3 = _elu(jnp.dot(h2, b3_ref[...],
                      preferred_element_type=jnp.float32) + bias3_ref[...])

    # out1: Linear(12*datalen -> classnum) as a single contraction.
    out_ref[...] = (jnp.dot(h3, wl_ref[...],
                            preferred_element_type=jnp.float32) + bl_ref[...])


# -------------------- wrapper: fold BN / build banded weights ----------------
def _fold_params(params):
    (w1, g1, b1, m1, v1,
     w2, g2, b2, m2, v2,
     w3, b3c, g3, b3, m3, v3,
     wl, bl) = params
    W = DATALEN

    # eval-mode BatchNorm -> per-channel scale / shift (conv3 bias folded).
    s1 = g1 / jnp.sqrt(v1 + BN_EPS); t1 = b1 - m1 * s1
    s2 = g2 / jnp.sqrt(v2 + BN_EPS); t2 = b2 - m2 * s2
    s3 = g3 / jnp.sqrt(v3 + BN_EPS); t3 = b3 - m3 * s3 + s3 * b3c

    # banded ('same' conv) index helpers: tap k = u - t + PAD
    u = jnp.arange(W)[:, None]
    t = jnp.arange(W)[None, :]
    k = u - t + PAD
    valid = ((k >= 0) & (k < KW)).astype(jnp.float32)              # (W, W)
    kc = jnp.clip(k, 0, KW - 1)

    # ---- B1: (Nb*W, C1P*W) banded matrix, BN1 scale folded -----------------
    w1s = jnp.transpose(w1[:, :, 0, :], (1, 0, 2))                 # (Nb, C1, KW)
    band1 = jnp.take(w1s, kc, axis=2) * valid[None, None]          # (Nb, C1, W, W)
    band1 = band1 * s1[None, :, None, None]
    band1 = jnp.transpose(band1, (0, 2, 1, 3))                     # (cb, u, c1, t)
    band1 = jnp.pad(band1, ((0, 0), (0, 0), (0, C1P - C1), (0, 0)))
    B1 = band1.reshape(NB * W, F1)

    bias1 = jnp.pad(jnp.broadcast_to(t1[:, None], (C1, W)),
                    ((0, C1P - C1), (0, 0))).reshape(1, F1)

    # ---- block_2 per-column weight/shift vectors (BN2 scale folded) --------
    w2r = w2[:, 0, :, 0]                                           # (30, Nk)
    w2f = (w2r * s2[:, None]).reshape(C1, 2, NK)                   # (c1, j, h)
    w2f = jnp.transpose(w2f, (1, 2, 0))                            # (j, h, c1)
    w2f = jnp.pad(w2f, ((0, 0), (0, 0), (0, C1P - C1)))            # (2, Nk, 16)
    w2cols = jnp.broadcast_to(w2f[..., None],
                              (2, NK, C1P, W)).reshape(2, NK, 1, F1)

    t2f = jnp.pad(t2.reshape(C1, 2).T, ((0, 0), (0, C1P - C1)))    # (2, 16)
    t2cols = jnp.broadcast_to(t2f[..., None], (2, C1P, W)).reshape(2, 1, F1)

    # ---- B3: (2*C1P*W, C3*W) banded matrix, BN3 scale folded ---------------
    w3s = jnp.transpose(w3[:, :, 0, :], (1, 0, 2))                 # (C2, C3, KW)
    band3 = jnp.take(w3s, kc, axis=2) * valid[None, None]          # (C2, C3, W, W)
    band3 = band3 * s3[None, :, None, None]
    band3 = band3.reshape(C1, 2, C3, W, W)                         # (g, j, c3, u, t)
    band3 = jnp.transpose(band3, (1, 0, 3, 2, 4))                  # (j, g, u, c3, t)
    band3 = jnp.pad(band3, ((0, 0), (0, C1P - C1), (0, 0), (0, 0), (0, 0)))
    B3 = band3.reshape(F2, F3)

    bias3 = jnp.broadcast_to(t3[:, None], (C3, W)).reshape(1, F3)

    # ---- linear -------------------------------------------------------------
    wlr = jnp.transpose(wl, (1, 0))                                # (12*W, classnum)
    blr = bl.reshape(1, CLASSNUM)

    return B1, bias1, w2cols, t2cols, B3, bias3, wlr, blr


def _const_spec(shape):
    zeros = (0,) * len(shape)
    return pl.BlockSpec(shape, lambda i, _z=zeros: _z)


def dis_comnet_forward(x, params):
    """x: (B, Nb, Nk, datalen) float32 (PyTorch NCHW).  Returns (B, classnum)."""
    B, Nb, Nk, W = x.shape
    assert (Nb, Nk, W) == (NB, NK, DATALEN)

    B1, bias1, w2cols, t2cols, B3, bias3, wlr, blr = _fold_params(params)

    # batch tiling: TB samples per grid step, padded up to a multiple of TB
    G = (B + TB - 1) // TB
    Bp = G * TB
    xp = jnp.pad(x.astype(jnp.float32), ((0, Bp - B), (0, 0), (0, 0), (0, 0)))
    # per step: rows grouped h-major -> (G, Nk*TB, Nb*W)
    xr = jnp.transpose(xp.reshape(G, TB, NB, NK, W),
                       (0, 3, 1, 2, 4)).reshape(G, NK * TB, NB * W)

    grid_spec = pltpu.PrefetchScalarGridSpec(
        num_scalar_prefetch=0,
        grid=(G,),
        in_specs=[
            pl.BlockSpec((None, NK * TB, NB * W), lambda i: (i, 0, 0)),  # x tile
            _const_spec((NB * W, F1)),          # B1   (banded conv1, BN1 folded)
            _const_spec((1, F1)),               # bias1
            _const_spec((2, NK, 1, F1)),        # grouped conv2 weights (BN2 scale folded)
            _const_spec((2, 1, F1)),            # BN2 shift
            _const_spec((F2, F3)),              # B3   (banded conv3, BN3+bias folded)
            _const_spec((1, F3)),               # bias3
            _const_spec((F3, CLASSNUM)),        # linear weight
            _const_spec((1, CLASSNUM)),         # linear bias
        ],
        out_specs=pl.BlockSpec((TB, CLASSNUM), lambda i: (i, 0)),
    )

    out = pl.pallas_call(
        _kernel,
        out_shape=jax.ShapeDtypeStruct((Bp, CLASSNUM), jnp.float32),
        grid_spec=grid_spec,
        compiler_params=pltpu.CompilerParams(
            dimension_semantics=("parallel",),        # shard batch tiles across TCs (v7x)
            vmem_limit_bytes=32 * 1024 * 1024,        # ~16 MB worst case incl. double buffers
        ),
    )(xr, B1, bias1, w2cols, t2cols, B3, bias3, wlr, blr)
    return out[:B]


# ---------------- deterministic parameter initialization ---------------------
def init_params(key):
    keys = iter(jax.random.split(key, 24))

    def nrm(shape, s=0.1):
        return s * jax.random.normal(next(keys), shape, jnp.float32)

    def uni(shape):
        return jax.random.uniform(next(keys), shape, jnp.float32, 0.5, 1.5)

    w1 = nrm((C1, NB, 1, KW), 0.2)                 # Conv2d(Nb,15,(1,25)), no bias
    g1, b1, m1, v1 = 1.0 + nrm((C1,)), nrm((C1,)), nrm((C1,)), uni((C1,))
    w2 = nrm((C2, 1, NK, 1), 0.3)                  # Conv2d(15,30,(Nk,1),groups=15)
    g2, b2, m2, v2 = 1.0 + nrm((C2,)), nrm((C2,)), nrm((C2,)), uni((C2,))
    w3 = nrm((C3, C2, 1, KW), 0.15)                # Conv2d(30,12,(1,25)), with bias
    b3c = nrm((C3,))
    g3, b3, m3, v3 = 1.0 + nrm((C3,)), nrm((C3,)), nrm((C3,)), uni((C3,))
    wl = nrm((CLASSNUM, C3 * DATALEN), 0.05)       # Linear(12*datalen, classnum)
    bl = nrm((CLASSNUM,))
    return (w1, g1, b1, m1, v1, w2, g2, b2, m2, v2,
            w3, b3c, g3, b3, m3, v3, wl, bl)


# ---------------- plain-JAX reference for validation -------------------------
def reference_forward(x, params):
    (w1, g1, b1, m1, v1, w2, g2, b2, m2, v2,
     w3, b3c, g3, b3, m3, v3, wl, bl) = params
    dn = ('NCHW', 'OIHW', 'NCHW')
    hp = lax.Precision.HIGHEST

    def bn(y, g, b, m, v):
        inv = g / jnp.sqrt(v + BN_EPS)
        return y * inv[None, :, None, None] + (b - m * inv)[None, :, None, None]

    y = lax.conv_general_dilated(x, w1, (1, 1), 'SAME',
                                 dimension_numbers=dn, precision=hp)
    y = _elu(bn(y, g1, b1, m1, v1))
    y = lax.conv_general_dilated(y, w2, (1, 1), 'VALID',
                                 dimension_numbers=dn,
                                 feature_group_count=C1, precision=hp)
    y = _elu(bn(y, g2, b2, m2, v2))
    y = lax.conv_general_dilated(y, w3, (1, 1), 'SAME',
                                 dimension_numbers=dn, precision=hp)
    y = y + b3c[None, :, None, None]
    y = _elu(bn(y, g3, b3, m3, v3))
    y = y.reshape(y.shape[0], -1)
    return jnp.dot(y, wl.T, precision=hp) + bl[None, :]


if __name__ == "__main__":
    key = jax.random.PRNGKey(0)
    kx, kp = jax.random.split(key)
    # Input: (batch, Nb, Nk, datalen) — the 4-D NCHW tensor block_1 expects.
    # B=13 deliberately not a multiple of TB to exercise batch padding.
    B = 13
    x = jax.random.normal(kx, (B, NB, NK, DATALEN), jnp.float32)
    params = init_params(kp)

    fwd = jax.jit(dis_comnet_forward)
    out = jax.block_until_ready(fwd(x, params))
    assert out.shape == (B, CLASSNUM)

    ref = reference_forward(x, params)
    if not jnp.allclose(out, ref, atol=2e-3, rtol=2e-3):
        raise AssertionError("Pallas kernel output mismatch vs JAX reference")
    print("KERNEL_OK")
</pallas_src>

<mosaic_0001>
module attributes {stable_mosaic.version = 11 : i64} {
  func.func @_kernel(%arg0: i32, %arg1: memref<1x24x192xf32, #tpu.memory_space<vmem>>, %arg2: memref<192x1024xf32, #tpu.memory_space<vmem>>, %arg3: memref<1x1024xf32, #tpu.memory_space<vmem>>, %arg4: memref<2x3x1x1024xf32, #tpu.memory_space<vmem>>, %arg5: memref<2x1x1024xf32, #tpu.memory_space<vmem>>, %arg6: memref<2048x768xf32, #tpu.memory_space<vmem>>, %arg7: memref<1x768xf32, #tpu.memory_space<vmem>>, %arg8: memref<768x10xf32, #tpu.memory_space<vmem>>, %arg9: memref<1x10xf32, #tpu.memory_space<vmem>>, %arg10: memref<8x10xf32, #tpu.memory_space<vmem>>) attributes {dimension_semantics = [#tpu.dimension_semantics<parallel>], iteration_bounds = array<i64: 2>, scalar_prefetch = 0 : i64, scratch_operands = 0 : i64, tpu.core_type = #tpu.core_type<tc>, window_params = [{transform_indices = @transform_0, window_bounds = array<i64: 1, 24, 192>}, {pipeline_mode = #tpu.pipeline_mode<synchronous>, transform_indices = @transform_1, window_bounds = array<i64: 192, 1024>}, {pipeline_mode = #tpu.pipeline_mode<synchronous>, transform_indices = @transform_2, window_bounds = array<i64: 1, 1024>}, {pipeline_mode = #tpu.pipeline_mode<synchronous>, transform_indices = @transform_3, window_bounds = array<i64: 2, 3, 1, 1024>}, {pipeline_mode = #tpu.pipeline_mode<synchronous>, transform_indices = @transform_4, window_bounds = array<i64: 2, 1, 1024>}, {pipeline_mode = #tpu.pipeline_mode<synchronous>, transform_indices = @transform_5, window_bounds = array<i64: 2048, 768>}, {pipeline_mode = #tpu.pipeline_mode<synchronous>, transform_indices = @transform_6, window_bounds = array<i64: 1, 768>}, {pipeline_mode = #tpu.pipeline_mode<synchronous>, transform_indices = @transform_7, window_bounds = array<i64: 768, 10>}, {pipeline_mode = #tpu.pipeline_mode<synchronous>, transform_indices = @transform_8, window_bounds = array<i64: 1, 10>}, {transform_indices = @transform_9, window_bounds = array<i64: 8, 10>}]} {
    %c0 = arith.constant 0 : index
    %c0_0 = arith.constant 0 : index
    %c0_1 = arith.constant 0 : index
    %0 = vector.load %arg1[%c0, %c0_0, %c0_1] : memref<1x24x192xf32, #tpu.memory_space<vmem>>, vector<1x24x192xf32>
    %1 = vector.shape_cast %0 : vector<1x24x192xf32> to vector<24x192xf32>
    %c0_2 = arith.constant 0 : index
    %c0_3 = arith.constant 0 : index
    %2 = vector.load %arg2[%c0_2, %c0_3] : memref<192x1024xf32, #tpu.memory_space<vmem>>, vector<192x1024xf32>
    %cst = arith.constant dense<0.000000e+00> : vector<24x1024xf32>
    %3 = tpu.matmul %1, %2, %cst {dimension_numbers = #tpu.dot_dimension_numbers<[1], [0], [0], [1], [0, 0, 1, 1], [], []>} : vector<24x192xf32>, vector<192x1024xf32>, vector<24x1024xf32> -> vector<24x1024xf32>
    %c0_4 = arith.constant 0 : index
    %c0_5 = arith.constant 0 : index
    %4 = vector.load %arg3[%c0_4, %c0_5] : memref<1x1024xf32, #tpu.memory_space<vmem>>, vector<1x1024xf32>
    %5 = vector.broadcast %4 : vector<1x1024xf32> to vector<24x1024xf32>
    %6 = arith.addf %3, %5 : vector<24x1024xf32>
    %cst_6 = arith.constant 0.000000e+00 : f32
    %7 = vector.broadcast %cst_6 : f32 to vector<24x1024xf32>
    %8 = arith.cmpf ogt, %6, %7 : vector<24x1024xf32>
    %cst_7 = arith.constant 0.000000e+00 : f32
    %9 = vector.broadcast %cst_7 : f32 to vector<24x1024xf32>
    %10 = arith.minimumf %6, %9 : vector<24x1024xf32>
    %11 = math.exp %10 : vector<24x1024xf32>
    %cst_8 = arith.constant 1.000000e+00 : f32
    %12 = vector.broadcast %cst_8 : f32 to vector<24x1024xf32>
    %13 = arith.subf %11, %12 : vector<24x1024xf32>
    %14 = arith.select %8, %6, %13 : vector<24x1024xi1>, vector<24x1024xf32>
    %15 = vector.extract_strided_slice %14 {offsets = [0, 0], sizes = [8, 1024], strides = [1, 1]} : vector<24x1024xf32> to vector<8x1024xf32>
    %16 = vector.extract_strided_slice %14 {offsets = [8, 0], sizes = [8, 1024], strides = [1, 1]} : vector<24x1024xf32> to vector<8x1024xf32>
    %17 = vector.extract_strided_slice %14 {offsets = [16, 0], sizes = [8, 1024], strides = [1, 1]} : vector<24x1024xf32> to vector<8x1024xf32>
    %c0_9 = arith.constant 0 : index
    %c0_10 = arith.constant 0 : index
    %c0_11 = arith.constant 0 : index
    %c0_12 = arith.constant 0 : index
    %18 = vector.load %arg4[%c0_9, %c0_10, %c0_11, %c0_12] : memref<2x3x1x1024xf32, #tpu.memory_space<vmem>>, vector<1x1x1x1024xf32>
    %19 = vector.shape_cast %18 : vector<1x1x1x1024xf32> to vector<1x1024xf32>
    %20 = vector.broadcast %19 : vector<1x1024xf32> to vector<8x1024xf32>
    %21 = arith.mulf %15, %20 : vector<8x1024xf32>
    %c0_13 = arith.constant 0 : index
    %c1 = arith.constant 1 : index
    %c0_14 = arith.constant 0 : index
    %c0_15 = arith.constant 0 : index
    %22 = vector.load %arg4[%c0_13, %c1, %c0_14, %c0_15] : memref<2x3x1x1024xf32, #tpu.memory_space<vmem>>, vector<1x1x1x1024xf32>
    %23 = vector.shape_cast %22 : vector<1x1x1x1024xf32> to vector<1x1024xf32>
    %24 = vector.broadcast %23 : vector<1x1024xf32> to vector<8x1024xf32>
    %25 = arith.mulf %16, %24 : vector<8x1024xf32>
    %26 = arith.addf %21, %25 : vector<8x1024xf32>
    %c0_16 = arith.constant 0 : index
    %c2 = arith.constant 2 : index
    %c0_17 = arith.constant 0 : index
    %c0_18 = arith.constant 0 : index
    %27 = vector.load %arg4[%c0_16, %c2, %c0_17, %c0_18] : memref<2x3x1x1024xf32, #tpu.memory_space<vmem>>, vector<1x1x1x1024xf32>
    %28 = vector.shape_cast %27 : vector<1x1x1x1024xf32> to vector<1x1024xf32>
    %29 = vector.broadcast %28 : vector<1x1024xf32> to vector<8x1024xf32>
    %30 = arith.mulf %17, %29 : vector<8x1024xf32>
    %31 = arith.addf %26, %30 : vector<8x1024xf32>
    %c0_19 = arith.constant 0 : index
    %c0_20 = arith.constant 0 : index
    %c0_21 = arith.constant 0 : index
    %32 = vector.load %arg5[%c0_19, %c0_20, %c0_21] : memref<2x1x1024xf32, #tpu.memory_space<vmem>>, vector<1x1x1024xf32>
    %33 = vector.shape_cast %32 : vector<1x1x1024xf32> to vector<1x1024xf32>
    %34 = vector.broadcast %33 : vector<1x1024xf32> to vector<8x1024xf32>
    %35 = arith.addf %31, %34 : vector<8x1024xf32>
    %cst_22 = arith.constant 0.000000e+00 : f32
    %36 = vector.broadcast %cst_22 : f32 to vector<8x1024xf32>
    %37 = arith.cmpf ogt, %35, %36 : vector<8x1024xf32>
    %cst_23 = arith.constant 0.000000e+00 : f32
    %38 = vector.broadcast %cst_23 : f32 to vector<8x1024xf32>
    %39 = arith.minimumf %35, %38 : vector<8x1024xf32>
    %40 = math.exp %39 : vector<8x1024xf32>
    %cst_24 = arith.constant 1.000000e+00 : f32
    %41 = vector.broadcast %cst_24 : f32 to vector<8x1024xf32>
    %42 = arith.subf %40, %41 : vector<8x1024xf32>
    %43 = arith.select %37, %35, %42 : vector<8x1024xi1>, vector<8x1024xf32>
    %c1_25 = arith.constant 1 : index
    %c0_26 = arith.constant 0 : index
    %c0_27 = arith.constant 0 : index
    %c0_28 = arith.constant 0 : index
    %44 = vector.load %arg4[%c1_25, %c0_26, %c0_27, %c0_28] : memref<2x3x1x1024xf32, #tpu.memory_space<vmem>>, vector<1x1x1x1024xf32>
    %45 = vector.shape_cast %44 : vector<1x1x1x1024xf32> to vector<1x1024xf32>
    %46 = vector.broadcast %45 : vector<1x1024xf32> to vector<8x1024xf32>
    %47 = arith.mulf %15, %46 : vector<8x1024xf32>
    %c1_29 = arith.constant 1 : index
    %c1_30 = arith.constant 1 : index
    %c0_31 = arith.constant 0 : index
    %c0_32 = arith.constant 0 : index
    %48 = vector.load %arg4[%c1_29, %c1_30, %c0_31, %c0_32] : memref<2x3x1x1024xf32, #tpu.memory_space<vmem>>, vector<1x1x1x1024xf32>
    %49 = vector.shape_cast %48 : vector<1x1x1x1024xf32> to vector<1x1024xf32>
    %50 = vector.broadcast %49 : vector<1x1024xf32> to vector<8x1024xf32>
    %51 = arith.mulf %16, %50 : vector<8x1024xf32>
    %52 = arith.addf %47, %51 : vector<8x1024xf32>
    %c1_33 = arith.constant 1 : index
    %c2_34 = arith.constant 2 : index
    %c0_35 = arith.constant 0 : index
    %c0_36 = arith.constant 0 : index
    %53 = vector.load %arg4[%c1_33, %c2_34, %c0_35, %c0_36] : memref<2x3x1x1024xf32, #tpu.memory_space<vmem>>, vector<1x1x1x1024xf32>
    %54 = vector.shape_cast %53 : vector<1x1x1x1024xf32> to vector<1x1024xf32>
    %55 = vector.broadcast %54 : vector<1x1024xf32> to vector<8x1024xf32>
    %56 = arith.mulf %17, %55 : vector<8x1024xf32>
    %57 = arith.addf %52, %56 : vector<8x1024xf32>
    %c1_37 = arith.constant 1 : index
    %c0_38 = arith.constant 0 : index
    %c0_39 = arith.constant 0 : index
    %58 = vector.load %arg5[%c1_37, %c0_38, %c0_39] : memref<2x1x1024xf32, #tpu.memory_space<vmem>>, vector<1x1x1024xf32>
    %59 = vector.shape_cast %58 : vector<1x1x1024xf32> to vector<1x1024xf32>
    %60 = vector.broadcast %59 : vector<1x1024xf32> to vector<8x1024xf32>
    %61 = arith.addf %57, %60 : vector<8x1024xf32>
    %cst_40 = arith.constant 0.000000e+00 : f32
    %62 = vector.broadcast %cst_40 : f32 to vector<8x1024xf32>
    %63 = arith.cmpf ogt, %61, %62 : vector<8x1024xf32>
    %cst_41 = arith.constant 0.000000e+00 : f32
    %64 = vector.broadcast %cst_41 : f32 to vector<8x1024xf32>
    %65 = arith.minimumf %61, %64 : vector<8x1024xf32>
    %66 = math.exp %65 : vector<8x1024xf32>
    %cst_42 = arith.constant 1.000000e+00 : f32
    %67 = vector.broadcast %cst_42 : f32 to vector<8x1024xf32>
    %68 = arith.subf %66, %67 : vector<8x1024xf32>
    %69 = arith.select %63, %61, %68 : vector<8x1024xi1>, vector<8x1024xf32>
    %70 = tpu.concatenate %43, %69 in 1 : vector<8x1024xf32>, vector<8x1024xf32> -> vector<8x2048xf32>
    %c0_43 = arith.constant 0 : index
    %c0_44 = arith.constant 0 : index
    %71 = vector.load %arg6[%c0_43, %c0_44] : memref<2048x768xf32, #tpu.memory_space<vmem>>, vector<2048x768xf32>
    %cst_45 = arith.constant dense<0.000000e+00> : vector<8x768xf32>
    %72 = tpu.matmul %70, %71, %cst_45 {dimension_numbers = #tpu.dot_dimension_numbers<[1], [0], [0], [1], [0, 0, 1, 1], [], []>} : vector<8x2048xf32>, vector<2048x768xf32>, vector<8x768xf32> -> vector<8x768xf32>
    %c0_46 = arith.constant 0 : index
    %c0_47 = arith.constant 0 : index
    %73 = vector.load %arg7[%c0_46, %c0_47] : memref<1x768xf32, #tpu.memory_space<vmem>>, vector<1x768xf32>
    %74 = vector.broadcast %73 : vector<1x768xf32> to vector<8x768xf32>
    %75 = arith.addf %72, %74 : vector<8x768xf32>
    %cst_48 = arith.constant 0.000000e+00 : f32
    %76 = vector.broadcast %cst_48 : f32 to vector<8x768xf32>
    %77 = arith.cmpf ogt, %75, %76 : vector<8x768xf32>
    %cst_49 = arith.constant 0.000000e+00 : f32
    %78 = vector.broadcast %cst_49 : f32 to vector<8x768xf32>
    %79 = arith.minimumf %75, %78 : vector<8x768xf32>
    %80 = math.exp %79 : vector<8x768xf32>
    %cst_50 = arith.constant 1.000000e+00 : f32
    %81 = vector.broadcast %cst_50 : f32 to vector<8x768xf32>
    %82 = arith.subf %80, %81 : vector<8x768xf32>
    %83 = arith.select %77, %75, %82 : vector<8x768xi1>, vector<8x768xf32>
    %c0_51 = arith.constant 0 : index
    %c0_52 = arith.constant 0 : index
    %84 = vector.load %arg8[%c0_51, %c0_52] : memref<768x10xf32, #tpu.memory_space<vmem>>, vector<768x10xf32>
    %cst_53 = arith.constant dense<0.000000e+00> : vector<8x10xf32>
    %85 = tpu.matmul %83, %84, %cst_53 {dimension_numbers = #tpu.dot_dimension_numbers<[1], [0], [0], [1], [0, 0, 1, 1], [], []>} : vector<8x768xf32>, vector<768x10xf32>, vector<8x10xf32> -> vector<8x10xf32>
    %c0_54 = arith.constant 0 : index
    %c0_55 = arith.constant 0 : index
    %86 = vector.load %arg9[%c0_54, %c0_55] : memref<1x10xf32, #tpu.memory_space<vmem>>, vector<1x10xf32>
    %87 = vector.broadcast %86 : vector<1x10xf32> to vector<8x10xf32>
    %88 = arith.addf %85, %87 : vector<8x10xf32>
    %c0_56 = arith.constant 0 : index
    %c0_57 = arith.constant 0 : index
    %89 = vector.load %arg10[%c0_56, %c0_57] : memref<8x10xf32, #tpu.memory_space<vmem>>, vector<8x10xf32>
    tpu.vector_store %arg10[%c0_56, %c0_57], %88 {strides = array<i32>} : memref<8x10xf32, #tpu.memory_space<vmem>>, vector<8x10xf32>,
    return
  }
  func.func @transform_0(%arg0: i32) -> (i32, i32, i32) {
    %c0_i32 = arith.constant 0 : i32
    %c0_i32_0 = arith.constant 0 : i32
    %c0_i32_1 = arith.constant 0 : i32
    return %arg0, %c0_i32, %c0_i32_0 : i32, i32, i32
  }
  func.func @transform_1(%arg0: i32) -> (i32, i32) {
    %c0_i32 = arith.constant 0 : i32
    %c0_i32_0 = arith.constant 0 : i32
    %c0_i32_1 = arith.constant 0 : i32
    return %c0_i32, %c0_i32_0 : i32, i32
  }
  func.func @transform_2(%arg0: i32) -> (i32, i32) {
    %c0_i32 = arith.constant 0 : i32
    %c0_i32_0 = arith.constant 0 : i32
    %c0_i32_1 = arith.constant 0 : i32
    return %c0_i32, %c0_i32_0 : i32, i32
  }
  func.func @transform_3(%arg0: i32) -> (i32, i32, i32, i32) {
    %c0_i32 = arith.constant 0 : i32
    %c0_i32_0 = arith.constant 0 : i32
    %c0_i32_1 = arith.constant 0 : i32
    %c0_i32_2 = arith.constant 0 : i32
    %c0_i32_3 = arith.constant 0 : i32
    return %c0_i32, %c0_i32_0, %c0_i32_1, %c0_i32_2 : i32, i32, i32, i32
  }
  func.func @transform_4(%arg0: i32) -> (i32, i32, i32) {
    %c0_i32 = arith.constant 0 : i32
    %c0_i32_0 = arith.constant 0 : i32
    %c0_i32_1 = arith.constant 0 : i32
    %c0_i32_2 = arith.constant 0 : i32
    return %c0_i32, %c0_i32_0, %c0_i32_1 : i32, i32, i32
  }
  func.func @transform_5(%arg0: i32) -> (i32, i32) {
    %c0_i32 = arith.constant 0 : i32
    %c0_i32_0 = arith.constant 0 : i32
    %c0_i32_1 = arith.constant 0 : i32
    return %c0_i32, %c0_i32_0 : i32, i32
  }
  func.func @transform_6(%arg0: i32) -> (i32, i32) {
    %c0_i32 = arith.constant 0 : i32
    %c0_i32_0 = arith.constant 0 : i32
    %c0_i32_1 = arith.constant 0 : i32
    return %c0_i32, %c0_i32_0 : i32, i32
  }
  func.func @transform_7(%arg0: i32) -> (i32, i32) {
    %c0_i32 = arith.constant 0 : i32
    %c0_i32_0 = arith.constant 0 : i32
    %c0_i32_1 = arith.constant 0 : i32
    return %c0_i32, %c0_i32_0 : i32, i32
  }
  func.func @transform_8(%arg0: i32) -> (i32, i32) {
    %c0_i32 = arith.constant 0 : i32
    %c0_i32_0 = arith.constant 0 : i32
    %c0_i32_1 = arith.constant 0 : i32
    return %c0_i32, %c0_i32_0 : i32, i32
  }
  func.func @transform_9(%arg0: i32) -> (i32, i32) {
    %c0_i32 = arith.constant 0 : i32
    %c0_i32_0 = arith.constant 0 : i32
    return %arg0, %c0_i32 : i32, i32
  }
}

</mosaic_0001>

<llo_original>
// kernel: dis_comnet_forward.1
$region0: #{dis_comnet_forward.1}
  #allocation0 [shape = 'u32[]', space=smem, size = 0x4, offset = 0x4, fixed_abs, tag = 'smem constant byte address 0x4 - core index']
  #allocation1 [shape = 'u32[72,128]{1,0:T(1,128)}', space=vmem, size = 0x9000, scoped, tag = 'internal scratch']
  %s0 = inlined_call_operand.vmem [shape: f32[2,24,192], index: 0, kind: input, shape index: {}]
  %s1 = inlined_call_operand.vmem [shape: f32[192,1024], index: 1, kind: input, shape index: {}]
  %s2 = inlined_call_operand.vmem [shape: f32[1,1024], index: 2, kind: input, shape index: {}]
  %s3 = inlined_call_operand.vmem [shape: f32[2,3,1,1024], index: 3, kind: input, shape index: {}]
  %s4 = inlined_call_operand.vmem [shape: f32[2,1,1024], index: 4, kind: input, shape index: {}]
  %s5 = inlined_call_operand.vmem [shape: f32[2048,768], index: 5, kind: input, shape index: {}]
  %s6 = inlined_call_operand.vmem [shape: f32[1,768], index: 6, kind: input, shape index: {}]
  %s7 = inlined_call_operand.vmem [shape: f32[768,10], index: 7, kind: input, shape index: {}]
  %s8 = inlined_call_operand.vmem [shape: f32[1,10], index: 8, kind: input, shape index: {}]
  %s9 = inlined_call_operand.hbm [shape: f32[16,10], index: 9, kind: output, shape index: {}]
  %s10 = sld [smem:[#allocation0]]
  $region69: #{dis_comnet_forward.1} parent=0
    _
  %s12 = ssub.s32 1, %s10
  %s13 = scalar_select 0, %s12, %s10
  $region1: #{dis_comnet_forward.1} parent=0
    #allocation2 [shape = 'u8[8192]{0}', space=vmem, size = 0x2000, scoped, tag = 'output window, operand 0']
    #allocation3 [shape = 's32[2]{0}', space=sflag, size = 0x8, scoped, tag = 'scoped memory for dis_comnet_forward.1']
    %14 = vsyncpa [#allocation3], 0
    %s15 = scalar_lea.sflag [#allocation3], 1
    %16 = vsyncpa %s15, 0
    loop: start=0, step=1, limit=4
    $region2: #{dis_comnet_forward.1} parent=1 // loop_pre_header
      _
    $region3: #{dis_comnet_forward.1} parent=1 // loop_header
      %s18 = sphi 0, %s22
      %p19 = scmp.ge.s32.totalorder %s18, 4
      %s28 = sphi 0, %s30
      %s31 = sphi 0, %s28
      %s32 = sphi 0, %s31
      %s48 = sphi 0, %s32
      %s52 = sphi 0, %s52
      %s54 = sphi 0, %s52
      %s55 = sphi 0, %s54
      %s69 = sphi 0, %s55
      %s73 = sphi 0, %s73
      %s75 = sphi 0, %s73
      %s76 = sphi 0, %s75
      %s90 = sphi 0, %s76
      %s94 = sphi 0, %s94
      %s96 = sphi 0, %s94
      %s97 = sphi 0, %s96
      %s111 = sphi 0, %s97
      %s115 = sphi 0, %s115
      %s117 = sphi 0, %s115
      %s118 = sphi 0, %s117
      %s132 = sphi 0, %s118
      %s136 = sphi 0, %s136
      %s138 = sphi 0, %s136
      %s139 = sphi 0, %s138
      %s153 = sphi 0, %s139
      %s157 = sphi 0, %s157
      %s159 = sphi 0, %s157
      %s160 = sphi 0, %s159
      %s174 = sphi 0, %s160
      %s178 = sphi 0, %s178
      %s180 = sphi 0, %s178
      %s181 = sphi 0, %s180
      %s195 = sphi 0, %s181
      %s199 = sphi 0, %s199
      %s201 = sphi 0, %s199
      %s202 = sphi 0, %s201
      %s216 = sphi 0, %s202
      %s222 = sphi 0, %s224
      %s225 = sphi 0, %s222
      %s226 = sphi 0, %s225
      %s242 = sphi 0, %s226
    $region4: #{dis_comnet_forward.1} parent=1 // loop_header_branch
      %21 = sbr.rel (%p19) target = $region8
    $region5: #{dis_comnet_forward.1} parent=1 // loop_body
      %s23 = ssub.s32 %s18, 1
      %s24 = ssub.s32 %s18, 2
      %s25 = sadd.s32 %s18, 1
      %s26 = ssub.s32 %s18, %s25
      %p27 = scmp.eq.s32.totalorder %s26, 0
      %s29 = sadd.s32 %s28, 1
      %s30 = scalar_select %p27, %s28, %s29
      %p33 = pneg %p27
      %p34 = scmp.eq.s32.totalorder %s18, 1
      %p35 = por %p33, %p34
      %p36 = scmp.ne.s32.totalorder %s28, %s31
      %p37 = scmp.eq.s32.totalorder %s18, 0
      %p38 = por %p36, %p37
      %p39 = scmp.ne.s32.totalorder %s28, %s31
      %p40 = scmp.eq.s32.totalorder %s23, 1
      %p41 = por %p39, %p40
      %p42 = scmp.ne.s32.totalorder %s31, %s32
      %p43 = scmp.eq.s32.totalorder %s23, 0
      %p44 = por %p42, %p43
      %p45 = scmp.ne.s32.totalorder %s31, %s32
      %p46 = scmp.eq.s32.totalorder %s24, 1
      %p47 = por %p45, %p46
      %p49 = scmp.ne.s32.totalorder %s32, %s48
      %p50 = scmp.eq.s32.totalorder %s24, 0
      %p51 = por %p49, %p50
      %s53 = sadd.s32 %s52, 1
      %p56 = scmp.eq.s32.totalorder %s18, 1
      %p57 = scmp.ne.s32.totalorder %s52, %s54
      %p58 = scmp.eq.s32.totalorder %s18, 0
      %p59 = por %p57, %p58
      %p60 = scmp.ne.s32.totalorder %s52, %s54
      %p61 = scmp.eq.s32.totalorder %s23, 1
      %p62 = por %p60, %p61
      %p63 = scmp.ne.s32.totalorder %s54, %s55
      %p64 = scmp.eq.s32.totalorder %s23, 0
      %p65 = por %p63, %p64
      %p66 = scmp.ne.s32.totalorder %s54, %s55
      %p67 = scmp.eq.s32.totalorder %s24, 1
      %p68 = por %p66, %p67
      %p70 = scmp.ne.s32.totalorder %s55, %s69
      %p71 = scmp.eq.s32.totalorder %s24, 0
      %p72 = por %p70, %p71
      %s74 = sadd.s32 %s73, 1
      %p77 = scmp.eq.s32.totalorder %s18, 1
      %p78 = scmp.ne.s32.totalorder %s73, %s75
      %p79 = scmp.eq.s32.totalorder %s18, 0
      %p80 = por %p78, %p79
      %p81 = scmp.ne.s32.totalorder %s73, %s75
      %p82 = scmp.eq.s32.totalorder %s23, 1
      %p83 = por %p81, %p82
      %p84 = scmp.ne.s32.totalorder %s75, %s76
      %p85 = scmp.eq.s32.totalorder %s23, 0
      %p86 = por %p84, %p85
      %p87 = scmp.ne.s32.totalorder %s75, %s76
      %p88 = scmp.eq.s32.totalorder %s24, 1
      %p89 = por %p87, %p88
      %p91 = scmp.ne.s32.totalorder %s76, %s90
      %p92 = scmp.eq.s32.totalorder %s24, 0
      %p93 = por %p91, %p92
      %s95 = sadd.s32 %s94, 1
      %p98 = scmp.eq.s32.totalorder %s18, 1
      %p99 = scmp.ne.s32.totalorder %s94, %s96
      %p100 = scmp.eq.s32.totalorder %s18, 0
      %p101 = por %p99, %p100
      %p102 = scmp.ne.s32.totalorder %s94, %s96
      %p103 = scmp.eq.s32.totalorder %s23, 1
      %p104 = por %p102, %p103
      %p105 = scmp.ne.s32.totalorder %s96, %s97
      %p106 = scmp.eq.s32.totalorder %s23, 0
      %p107 = por %p105, %p106
      %p108 = scmp.ne.s32.totalorder %s96, %s97
      %p109 = scmp.eq.s32.totalorder %s24, 1
      %p110 = por %p108, %p109
      %p112 = scmp.ne.s32.totalorder %s97, %s111
      %p113 = scmp.eq.s32.totalorder %s24, 0
      %p114 = por %p112, %p113
      %s116 = sadd.s32 %s115, 1
      %p119 = scmp.eq.s32.totalorder %s18, 1
      %p120 = scmp.ne.s32.totalorder %s115, %s117
      %p121 = scmp.eq.s32.totalorder %s18, 0
      %p122 = por %p120, %p121
      %p123 = scmp.ne.s32.totalorder %s115, %s117
      %p124 = scmp.eq.s32.totalorder %s23, 1
      %p125 = por %p123, %p124
      %p126 = scmp.ne.s32.totalorder %s117, %s118
      %p127 = scmp.eq.s32.totalorder %s23, 0
      %p128 = por %p126, %p127
      %p129 = scmp.ne.s32.totalorder %s117, %s118
      %p130 = scmp.eq.s32.totalorder %s24, 1
      %p131 = por %p129, %p130
      %p133 = scmp.ne.s32.totalorder %s118, %s132
      %p134 = scmp.eq.s32.totalorder %s24, 0
      %p135 = por %p133, %p134
      %s137 = sadd.s32 %s136, 1
      %p140 = scmp.eq.s32.totalorder %s18, 1
      %p141 = scmp.ne.s32.totalorder %s136, %s138
      %p142 = scmp.eq.s32.totalorder %s18, 0
      %p143 = por %p141, %p142
      %p144 = scmp.ne.s32.totalorder %s136, %s138
      %p145 = scmp.eq.s32.totalorder %s23, 1
      %p146 = por %p144, %p145
      %p147 = scmp.ne.s32.totalorder %s138, %s139
      %p148 = scmp.eq.s32.totalorder %s23, 0
      %p149 = por %p147, %p148
      %p150 = scmp.ne.s32.totalorder %s138, %s139
      %p151 = scmp.eq.s32.totalorder %s24, 1
      %p152 = por %p150, %p151
      %p154 = scmp.ne.s32.totalorder %s139, %s153
      %p155 = scmp.eq.s32.totalorder %s24, 0
      %p156 = por %p154, %p155
      %s158 = sadd.s32 %s157, 1
      %p161 = scmp.eq.s32.totalorder %s18, 1
      %p162 = scmp.ne.s32.totalorder %s157, %s159
      %p163 = scmp.eq.s32.totalorder %s18, 0
      %p164 = por %p162, %p163
      %p165 = scmp.ne.s32.totalorder %s157, %s159
      %p166 = scmp.eq.s32.totalorder %s23, 1
      %p167 = por %p165, %p166
      %p168 = scmp.ne.s32.totalorder %s159, %s160
      %p169 = scmp.eq.s32.totalorder %s23, 0
      %p170 = por %p168, %p169
      %p171 = scmp.ne.s32.totalorder %s159, %s160
      %p172 = scmp.eq.s32.totalorder %s24, 1
      %p173 = por %p171, %p172
      %p175 = scmp.ne.s32.totalorder %s160, %s174
      %p176 = scmp.eq.s32.totalorder %s24, 0
      %p177 = por %p175, %p176
      %s179 = sadd.s32 %s178, 1
      %p182 = scmp.eq.s32.totalorder %s18, 1
      %p183 = scmp.ne.s32.totalorder %s178, %s180
      %p184 = scmp.eq.s32.totalorder %s18, 0
      %p185 = por %p183, %p184
      %p186 = scmp.ne.s32.totalorder %s178, %s180
      %p187 = scmp.eq.s32.totalorder %s23, 1
      %p188 = por %p186, %p187
      %p189 = scmp.ne.s32.totalorder %s180, %s181
      %p190 = scmp.eq.s32.totalorder %s23, 0
      %p191 = por %p189, %p190
      %p192 = scmp.ne.s32.totalorder %s180, %s181
      %p193 = scmp.eq.s32.totalorder %s24, 1
      %p194 = por %p192, %p193
      %p196 = scmp.ne.s32.totalorder %s181, %s195
      %p197 = scmp.eq.s32.totalorder %s24, 0
      %p198 = por %p196, %p197
      %s200 = sadd.s32 %s199, 1
      %p203 = scmp.eq.s32.totalorder %s18, 1
      %p204 = scmp.ne.s32.totalorder %s199, %s201
      %p205 = scmp.eq.s32.totalorder %s18, 0
      %p206 = por %p204, %p205
      %p207 = scmp.ne.s32.totalorder %s199, %s201
      %p208 = scmp.eq.s32.totalorder %s23, 1
      %p209 = por %p207, %p208
      %p210 = scmp.ne.s32.totalorder %s201, %s202
      %p211 = scmp.eq.s32.totalorder %s23, 0
      %p212 = por %p210, %p211
      %p213 = scmp.ne.s32.totalorder %s201, %s202
      %p214 = scmp.eq.s32.totalorder %s24, 1
      %p215 = por %p213, %p214
      %p217 = scmp.ne.s32.totalorder %s202, %s216
      %p218 = scmp.eq.s32.totalorder %s24, 0
      %p219 = por %p217, %p218
      %s220 = ssub.s32 %s18, %s25
      %p221 = scmp.eq.s32.totalorder %s220, 0
      %s223 = sadd.s32 %s222, 1
      %s224 = scalar_select %p221, %s222, %s223
      %p227 = pneg %p221
      %p228 = scmp.eq.s32.totalorder %s18, 1
      %p229 = por %p227, %p228
      %p230 = scmp.ne.s32.totalorder %s222, %s225
      %p231 = scmp.eq.s32.totalorder %s18, 0
      %p232 = por %p230, %p231
      %p233 = scmp.ne.s32.totalorder %s222, %s225
      %p234 = scmp.eq.s32.totalorder %s23, 1
      %p235 = por %p233, %p234
      %p236 = scmp.ne.s32.totalorder %s225, %s226
      %p237 = scmp.eq.s32.totalorder %s23, 0
      %p238 = por %p236, %p237
      %p239 = scmp.ne.s32.totalorder %s225, %s226
      %p240 = scmp.eq.s32.totalorder %s24, 1
      %p241 = por %p239, %p240
      %p243 = scmp.ne.s32.totalorder %s226, %s242
      %p244 = scmp.eq.s32.totalorder %s24, 0
      %p245 = por %p243, %p244
      %p246 = scmp.le.s32.totalorder 1, %s18
      %p247 = scmp.lt.s32.totalorder %s18, 3
      %p248 = pnand %p246, %p247
      %p249 = pneg %p248
      // Predicated region
      $region9: #{dis_comnet_forward.1} parent=5 // pred_check
        _
      $region10: #{dis_comnet_forward.1} parent=5 // pred_check_branch
        %251 = sbr.rel (%p248) target = $region12
      $region11: #{dis_comnet_forward.1} parent=5 // pred_region
        %s252 = ssub.s32 %s18, 1
        // Predicated region
        $region13: #{dis_comnet_forward.1} parent=11 // pred_check
          %p253 = pneg %p65
        $region14: #{dis_comnet_forward.1} parent=11 // pred_check_branch
          %255 = sbr.rel (%p253) target = $region16
        $region15: #{dis_comnet_forward.1} parent=11 // pred_region
          _
        $region16: #{dis_comnet_forward.1} parent=11 // pred_fallthru
          _
        // Predicated region
        $region17: #{dis_comnet_forward.1} parent=11 // pred_check
          %p256 = pneg %p86
        $region18: #{dis_comnet_forward.1} parent=11 // pred_check_branch
          %258 = sbr.rel (%p256) target = $region20
        $region19: #{dis_comnet_forward.1} parent=11 // pred_region
          _
        $region20: #{dis_comnet_forward.1} parent=11 // pred_fallthru
          _
        // Predicated region
        $region21: #{dis_comnet_forward.1} parent=11 // pred_check
          %p259 = pneg %p107
        $region22: #{dis_comnet_forward.1} parent=11 // pred_check_branch
          %261 = sbr.rel (%p259) target = $region24
        $region23: #{dis_comnet_forward.1} parent=11 // pred_region
          _
        $region24: #{dis_comnet_forward.1} parent=11 // pred_fallthru
          _
        // Predicated region
        $region25: #{dis_comnet_forward.1} parent=11 // pred_check
          %p262 = pneg %p128
        $region26: #{dis_comnet_forward.1} parent=11 // pred_check_branch
          %264 = sbr.rel (%p262) target = $region28
        $region27: #{dis_comnet_forward.1} parent=11 // pred_region
          _
        $region28: #{dis_comnet_forward.1} parent=11 // pred_fallthru
          _
        // Predicated region
        $region29: #{dis_comnet_forward.1} parent=11 // pred_check
          %p265 = pneg %p149
        $region30: #{dis_comnet_forward.1} parent=11 // pred_check_branch
          %267 = sbr.rel (%p265) target = $region32
        $region31: #{dis_comnet_forward.1} parent=11 // pred_region
          _
        $region32: #{dis_comnet_forward.1} parent=11 // pred_fallthru
          _
        // Predicated region
        $region33: #{dis_comnet_forward.1} parent=11 // pred_check
          %p268 = pneg %p170
        $region34: #{dis_comnet_forward.1} parent=11 // pred_check_branch
          %270 = sbr.rel (%p268) target = $region36
        $region35: #{dis_comnet_forward.1} parent=11 // pred_region
          _
        $region36: #{dis_comnet_forward.1} parent=11 // pred_fallthru
          _
        // Predicated region
        $region37: #{dis_comnet_forward.1} parent=11 // pred_check
          %p271 = pneg %p191
        $region38: #{dis_comnet_forward.1} parent=11 // pred_check_branch
          %273 = sbr.rel (%p271) target = $region40
        $region39: #{dis_comnet_forward.1} parent=11 // pred_region
          _
        $region40: #{dis_comnet_forward.1} parent=11 // pred_fallthru
          _
        // Predicated region
        $region41: #{dis_comnet_forward.1} parent=11 // pred_check
          %p274 = pneg %p212
        $region42: #{dis_comnet_forward.1} parent=11 // pred_check_branch
          %276 = sbr.rel (%p274) target = $region44
        $region43: #{dis_comnet_forward.1} parent=11 // pred_region
          _
        $region44: #{dis_comnet_forward.1} parent=11 // pred_fallthru
          _
      $region12: #{dis_comnet_forward.1} parent=5 // pred_fallthru
        _
      %p277 = scmp.lt.s32.totalorder %s18, 2
      // Predicated region
      $region45: #{dis_comnet_forward.1} parent=5 // pred_check
        %p278 = pneg %p277
      $region46: #{dis_comnet_forward.1} parent=5 // pred_check_branch
        %280 = sbr.rel (%p278) target = $region48
      $region47: #{dis_comnet_forward.1} parent=5 // pred_region
        // Predicated region
        $region49: #{dis_comnet_forward.1} parent=47 // pred_check
          %p281 = pneg %p38
        $region50: #{dis_comnet_forward.1} parent=47 // pred_check_branch
          %283 = sbr.rel (%p281) target = $region52
        $region51: #{dis_comnet_forward.1} parent=47 // pred_region
          %p284 = scmp.lt.s32.totalorder %s18, 1
          %s285 = scalar_select %p284, %s18, 1
          %s286 = smul.addr %s285, 6
          %s287 = smul.addr %s286, 8
          %s288 = scalar_lea.vmem %s0, %s287
        $region52: #{dis_comnet_forward.1} parent=47 // pred_fallthru
          _
      $region48: #{dis_comnet_forward.1} parent=5 // pred_fallthru
        _
      %p289 = scmp.le.s32.totalorder 1, %s18
      %p290 = scmp.lt.s32.totalorder %s18, 3
      %p291 = pnand %p289, %p290
      %p292 = pneg %p291
      // Predicated region
      $region53: #{dis_comnet_forward.1} parent=5 // pred_check
        _
      $region54: #{dis_comnet_forward.1} parent=5 // pred_check_branch
        %294 = sbr.rel (%p291) target = $region56
      $region55: #{dis_comnet_forward.1} parent=5 // pred_region
        %s295 = ssub.s32 %s18, 1
        %p296 = scmp.lt.s32.totalorder %s23, 1
        %s297 = scalar_select %p296, %s23, 1
        %s298 = smul.addr %s297, 6
        %s299 = smul.addr %s298, 8
        %s300 = scalar_lea.vmem %s0, %s299
        %p301 = pneg %p44
        %p302 = pneg %p41
        %p303 = pneg %p65
        %p304 = pneg %p62
        %p305 = pneg %p86
        %p306 = pneg %p83
        %p307 = pneg %p107
        %p308 = pneg %p104
        %p309 = pneg %p128
        %p310 = pneg %p125
        %p311 = pneg %p149
        %p312 = pneg %p146
        %p313 = pneg %p170
        %p314 = pneg %p167
        %p315 = pneg %p191
        %p316 = pneg %p188
        %p317 = pneg %p212
        %p318 = pneg %p209
        %p319 = pneg %p238
        %p320 = pneg %p235
        %s321 = sand.u32 %s225, 1
        %s322 = scalar_lea.sflag [#allocation3], %s321
        %s323 = sand.u32 %s225, 1
        %s324 = smul.addr %s323, 8
        %s325 = scalar_lea.vmem [#allocation2], %s324
        %p326 = scmp.lt.s32.totalorder %s23, 1
        %s327 = scalar_select %p326, %s23, 1
        %s328 = smul.addr %s327, 6
        %s329 = smul.addr %s328, 8
        %s330 = scalar_lea.vmem %s0, %s329
        %v331 = vld [vmem:[%s330] sm:$0xff]
        %v332 = vld [vmem:[%s330 + $0x8] sm:$0xff]
        %v333 = vld [vmem:[%s330 + $0x10] sm:$0xff]
        %v334 = vld [vmem:[%s330 + $0x18] sm:$0xff]
        %v335 = vld [vmem:[%s330 + $0x20] sm:$0xff]
        %v336 = vld [vmem:[%s330 + $0x28] sm:$0xff]
        %v337 = vld [vmem:[%s1] sm:$0xff]
        %v338 = vld [vmem:[%s1 + $0x8] sm:$0xff]
        %v339 = vld [vmem:[%s1 + $0x10] sm:$0xff]
        %v340 = vld [vmem:[%s1 + $0x18] sm:$0xff]
        %v341 = vld [vmem:[%s1 + $0x20] sm:$0xff]
        %v342 = vld [vmem:[%s1 + $0x28] sm:$0xff]
        %v343 = vld [vmem:[%s1 + $0x30] sm:$0xff]
        %v344 = vld [vmem:[%s1 + $0x38] sm:$0xff]
        %v345 = vld [vmem:[%s1 + $0x40] sm:$0xff]
        %v346 = vld [vmem:[%s1 + $0x48] sm:$0xff]
        %v347 = vld [vmem:[%s1 + $0x50] sm:$0xff]
        %v348 = vld [vmem:[%s1 + $0x58] sm:$0xff]
        %v349 = vld [vmem:[%s1 + $0x60] sm:$0xff]
        %v350 = vld [vmem:[%s1 + $0x68] sm:$0xff]
        %v351 = vld [vmem:[%s1 + $0x70] sm:$0xff]
        %v352 = vld [vmem:[%s1 + $0x78] sm:$0xff]
        %v353 = vld [vmem:[%s1 + $0x80] sm:$0xff]
        %v354 = vld [vmem:[%s1 + $0x88] sm:$0xff]
        %v355 = vld [vmem:[%s1 + $0x90] sm:$0xff]
        %v356 = vld [vmem:[%s1 + $0x98] sm:$0xff]
        %v357 = vld [vmem:[%s1 + $0xa0] sm:$0xff]
        %v358 = vld [vmem:[%s1 + $0xa8] sm:$0xff]
        %v359 = vld [vmem:[%s1 + $0xb0] sm:$0xff]
        %v360 = vld [vmem:[%s1 + $0xb8] sm:$0xff]
        %v361 = vld [vmem:[%s1 + $0xc0] sm:$0xff]
        %v362 = vld [vmem:[%s1 + $0xc8] sm:$0xff]
        %v363 = vld [vmem:[%s1 + $0xd0] sm:$0xff]
        %v364 = vld [vmem:[%s1 + $0xd8] sm:$0xff]
        %v365 = vld [vmem:[%s1 + $0xe0] sm:$0xff]
        %v366 = vld [vmem:[%s1 + $0xe8] sm:$0xff]
        %v367 = vld [vmem:[%s1 + $0xf0] sm:$0xff]
        %v368 = vld [vmem:[%s1 + $0xf8] sm:$0xff]
        %v369 = vld [vmem:[%s1 + $0x100] sm:$0xff]
        %v370 = vld [vmem:[%s1 + $0x108] sm:$0xff]
        %v371 = vld [vmem:[%s1 + $0x110] sm:$0xff]
        %v372 = vld [vmem:[%s1 + $0x118] sm:$0xff]
        %v373 = vld [vmem:[%s1 + $0x120] sm:$0xff]
        %v374 = vld [vmem:[%s1 + $0x128] sm:$0xff]
        %v375 = vld [vmem:[%s1 + $0x130] sm:$0xff]
        %v376 = vld [vmem:[%s1 + $0x138] sm:$0xff]
        %v377 = vld [vmem:[%s1 + $0x140] sm:$0xff]
        %v378 = vld [vmem:[%s1 + $0x148] sm:$0xff]
        %v379 = vld [vmem:[%s1 + $0x150] sm:$0xff]
        %v380 = vld [vmem:[%s1 + $0x158] sm:$0xff]
        %v381 = vld [vmem:[%s1 + $0x160] sm:$0xff]
        %v382 = vld [vmem:[%s1 + $0x168] sm:$0xff]
        %v383 = vld [vmem:[%s1 + $0x170] sm:$0xff]
        %v384 = vld [vmem:[%s1 + $0x178] sm:$0xff]
        %v385 = vld [vmem:[%s1 + $0x180] sm:$0xff]
        %v386 = vld [vmem:[%s1 + $0x188] sm:$0xff]
        %v387 = vld [vmem:[%s1 + $0x190] sm:$0xff]
        %v388 = vld [vmem:[%s1 + $0x198] sm:$0xff]
        %v389 = vld [vmem:[%s1 + $0x1a0] sm:$0xff]
        %v390 = vld [vmem:[%s1 + $0x1a8] sm:$0xff]
        %v391 = vld [vmem:[%s1 + $0x1b0] sm:$0xff]
        %v392 = vld [vmem:[%s1 + $0x1b8] sm:$0xff]
        %v393 = vld [vmem:[%s1 + $0x1c0] sm:$0xff]
        %v394 = vld [vmem:[%s1 + $0x1c8] sm:$0xff]
        %v395 = vld [vmem:[%s1 + $0x1d0] sm:$0xff]
        %v396 = vld [vmem:[%s1 + $0x1d8] sm:$0xff]
        %v397 = vld [vmem:[%s1 + $0x1e0] sm:$0xff]
        %v398 = vld [vmem:[%s1 + $0x1e8] sm:$0xff]
        %v399 = vld [vmem:[%s1 + $0x1f0] sm:$0xff]
        %v400 = vld [vmem:[%s1 + $0x1f8] sm:$0xff]
        %v401 = vld [vmem:[%s1 + $0x200] sm:$0xff]
        %v402 = vld [vmem:[%s1 + $0x208] sm:$0xff]
        %v403 = vld [vmem:[%s1 + $0x210] sm:$0xff]
        %v404 = vld [vmem:[%s1 + $0x218] sm:$0xff]
        %v405 = vld [vmem:[%s1 + $0x220] sm:$0xff]
        %v406 = vld [vmem:[%s1 + $0x228] sm:$0xff]
        %v407 = vld [vmem:[%s1 + $0x230] sm:$0xff]
        %v408 = vld [vmem:[%s1 + $0x238] sm:$0xff]
        %v409 = vld [vmem:[%s1 + $0x240] sm:$0xff]
        %v410 = vld [vmem:[%s1 + $0x248] sm:$0xff]
        %v411 = vld [vmem:[%s1 + $0x250] sm:$0xff]
        %v412 = vld [vmem:[%s1 + $0x258] sm:$0xff]
        %v413 = vld [vmem:[%s1 + $0x260] sm:$0xff]
        %v414 = vld [vmem:[%s1 + $0x268] sm:$0xff]
        %v415 = vld [vmem:[%s1 + $0x270] sm:$0xff]
        %v416 = vld [vmem:[%s1 + $0x278] sm:$0xff]
        %v417 = vld [vmem:[%s1 + $0x280] sm:$0xff]
        %v418 = vld [vmem:[%s1 + $0x288] sm:$0xff]
        %v419 = vld [vmem:[%s1 + $0x290] sm:$0xff]
        %v420 = vld [vmem:[%s1 + $0x298] sm:$0xff]
        %v421 = vld [vmem:[%s1 + $0x2a0] sm:$0xff]
        %v422 = vld [vmem:[%s1 + $0x2a8] sm:$0xff]
        %v423 = vld [vmem:[%s1 + $0x2b0] sm:$0xff]
        %v424 = vld [vmem:[%s1 + $0x2b8] sm:$0xff]
        %v425 = vld [vmem:[%s1 + $0x2c0] sm:$0xff]
        %v426 = vld [vmem:[%s1 + $0x2c8] sm:$0xff]
        %v427 = vld [vmem:[%s1 + $0x2d0] sm:$0xff]
        %v428 = vld [vmem:[%s1 + $0x2d8] sm:$0xff]
        %v429 = vld [vmem:[%s1 + $0x2e0] sm:$0xff]
        %v430 = vld [vmem:[%s1 + $0x2e8] sm:$0xff]
        %v431 = vld [vmem:[%s1 + $0x2f0] sm:$0xff]
        %v432 = vld [vmem:[%s1 + $0x2f8] sm:$0xff]
        %v433 = vld [vmem:[%s1 + $0x300] sm:$0xff]
        %v434 = vld [vmem:[%s1 + $0x308] sm:$0xff]
        %v435 = vld [vmem:[%s1 + $0x310] sm:$0xff]
        %v436 = vld [vmem:[%s1 + $0x318] sm:$0xff]
        %v437 = vld [vmem:[%s1 + $0x320] sm:$0xff]
        %v438 = vld [vmem:[%s1 + $0x328] sm:$0xff]
        %v439 = vld [vmem:[%s1 + $0x330] sm:$0xff]
        %v440 = vld [vmem:[%s1 + $0x338] sm:$0xff]
        %v441 = vld [vmem:[%s1 + $0x340] sm:$0xff]
        %v442 = vld [vmem:[%s1 + $0x348] sm:$0xff]
        %v443 = vld [vmem:[%s1 + $0x350] sm:$0xff]
        %v444 = vld [vmem:[%s1 + $0x358] sm:$0xff]
        %v445 = vld [vmem:[%s1 + $0x360] sm:$0xff]
        %v446 = vld [vmem:[%s1 + $0x368] sm:$0xff]
        %v447 = vld [vmem:[%s1 + $0x370] sm:$0xff]
        %v448 = vld [vmem:[%s1 + $0x378] sm:$0xff]
        %v449 = vld [vmem:[%s1 + $0x380] sm:$0xff]
        %v450 = vld [vmem:[%s1 + $0x388] sm:$0xff]
        %v451 = vld [vmem:[%s1 + $0x390] sm:$0xff]
        %v452 = vld [vmem:[%s1 + $0x398] sm:$0xff]
        %v453 = vld [vmem:[%s1 + $0x3a0] sm:$0xff]
        %v454 = vld [vmem:[%s1 + $0x3a8] sm:$0xff]
        %v455 = vld [vmem:[%s1 + $0x3b0] sm:$0xff]
        %v456 = vld [vmem:[%s1 + $0x3b8] sm:$0xff]
        %v457 = vld [vmem:[%s1 + $0x3c0] sm:$0xff]
        %v458 = vld [vmem:[%s1 + $0x3c8] sm:$0xff]
        %v459 = vld [vmem:[%s1 + $0x3d0] sm:$0xff]
        %v460 = vld [vmem:[%s1 + $0x3d8] sm:$0xff]
        %v461 = vld [vmem:[%s1 + $0x3e0] sm:$0xff]
        %v462 = vld [vmem:[%s1 + $0x3e8] sm:$0xff]
        %v463 = vld [vmem:[%s1 + $0x3f0] sm:$0xff]
        %v464 = vld [vmem:[%s1 + $0x3f8] sm:$0xff]
        %v465 = vld [vmem:[%s1 + $0x400] sm:$0xff]
        %v466 = vld [vmem:[%s1 + $0x408] sm:$0xff]
        %v467 = vld [vmem:[%s1 + $0x410] sm:$0xff]
        %v468 = vld [vmem:[%s1 + $0x418] sm:$0xff]
        %v469 = vld [vmem:[%s1 + $0x420] sm:$0xff]
        %v470 = vld [vmem:[%s1 + $0x428] sm:$0xff]
        %v471 = vld [vmem:[%s1 + $0x430] sm:$0xff]
        %v472 = vld [vmem:[%s1 + $0x438] sm:$0xff]
        %v473 = vld [vmem:[%s1 + $0x440] sm:$0xff]
        %v474 = vld [vmem:[%s1 + $0x448] sm:$0xff]
        %v475 = vld [vmem:[%s1 + $0x450] sm:$0xff]
        %v476 = vld [vmem:[%s1 + $0x458] sm:$0xff]
        %v477 = vld [vmem:[%s1 + $0x460] sm:$0xff]
        %v478 = vld [vmem:[%s1 + $0x468] sm:$0xff]
        %v479 = vld [vmem:[%s1 + $0x470] sm:$0xff]
        %v480 = vld [vmem:[%s1 + $0x478] sm:$0xff]
        %v481 = vld [vmem:[%s1 + $0x480] sm:$0xff]
        %v482 = vld [vmem:[%s1 + $0x488] sm:$0xff]
        %v483 = vld [vmem:[%s1 + $0x490] sm:$0xff]
        %v484 = vld [vmem:[%s1 + $0x498] sm:$0xff]
        %v485 = vld [vmem:[%s1 + $0x4a0] sm:$0xff]
        %v486 = vld [vmem:[%s1 + $0x4a8] sm:$0xff]
        %v487 = vld [vmem:[%s1 + $0x4b0] sm:$0xff]
        %v488 = vld [vmem:[%s1 + $0x4b8] sm:$0xff]
        %v489 = vld [vmem:[%s1 + $0x4c0] sm:$0xff]
        %v490 = vld [vmem:[%s1 + $0x4c8] sm:$0xff]
        %v491 = vld [vmem:[%s1 + $0x4d0] sm:$0xff]
        %v492 = vld [vmem:[%s1 + $0x4d8] sm:$0xff]
        %v493 = vld [vmem:[%s1 + $0x4e0] sm:$0xff]
        %v494 = vld [vmem:[%s1 + $0x4e8] sm:$0xff]
        %v495 = vld [vmem:[%s1 + $0x4f0] sm:$0xff]
        %v496 = vld [vmem:[%s1 + $0x4f8] sm:$0xff]
        %v497 = vld [vmem:[%s1 + $0x500] sm:$0xff]
        %v498 = vld [vmem:[%s1 + $0x508] sm:$0xff]
        %v499 = vld [vmem:[%s1 + $0x510] sm:$0xff]
        %v500 = vld [vmem:[%s1 + $0x518] sm:$0xff]
        %v501 = vld [vmem:[%s1 + $0x520] sm:$0xff]
        %v502 = vld [vmem:[%s1 + $0x528] sm:$0xff]
        %v503 = vld [vmem:[%s1 + $0x530] sm:$0xff]
        %v504 = vld [vmem:[%s1 + $0x538] sm:$0xff]
        %v505 = vld [vmem:[%s1 + $0x540] sm:$0xff]
        %v506 = vld [vmem:[%s1 + $0x548] sm:$0xff]
        %v507 = vld [vmem:[%s1 + $0x550] sm:$0xff]
        %v508 = vld [vmem:[%s1 + $0x558] sm:$0xff]
        %v509 = vld [vmem:[%s1 + $0x560] sm:$0xff]
        %v510 = vld [vmem:[%s1 + $0x568] sm:$0xff]
        %v511 = vld [vmem:[%s1 + $0x570] sm:$0xff]
        %v512 = vld [vmem:[%s1 + $0x578] sm:$0xff]
        %v513 = vld [vmem:[%s1 + $0x580] sm:$0xff]
        %v514 = vld [vmem:[%s1 + $0x588] sm:$0xff]
        %v515 = vld [vmem:[%s1 + $0x590] sm:$0xff]
        %v516 = vld [vmem:[%s1 + $0x598] sm:$0xff]
        %v517 = vld [vmem:[%s1 + $0x5a0] sm:$0xff]
        %v518 = vld [vmem:[%s1 + $0x5a8] sm:$0xff]
        %v519 = vld [vmem:[%s1 + $0x5b0] sm:$0xff]
        %v520 = vld [vmem:[%s1 + $0x5b8] sm:$0xff]
        %v521 = vld [vmem:[%s1 + $0x5c0] sm:$0xff]
        %v522 = vld [vmem:[%s1 + $0x5c8] sm:$0xff]
        %v523 = vld [vmem:[%s1 + $0x5d0] sm:$0xff]
        %v524 = vld [vmem:[%s1 + $0x5d8] sm:$0xff]
        %v525 = vld [vmem:[%s1 + $0x5e0] sm:$0xff]
        %v526 = vld [vmem:[%s1 + $0x5e8] sm:$0xff]
        %v527 = vld [vmem:[%s1 + $0x5f0] sm:$0xff]
        %v528 = vld [vmem:[%s1 + $0x5f8] sm:$0xff]
        %v529 = vld [vmem:[%s2] sm:$0xff]
        %v531 = vperm.slane %v529, 0
        %v532 = vperm.slane %v529, 1
        %v533 = vperm.slane %v529, 2
        %v534 = vperm.slane %v529, 3
        %v535 = vperm.slane %v529, 4
        %v536 = vperm.slane %v529, 5
        %v537 = vperm.slane %v529, 6
        %v538 = vperm.slane %v529, 7
        %vm547 = vcmask 523264
        %v549 = vsel %vm547, %v332, 0
        %v552 = vsel %vm547, %v334, 0
        %v555 = vsel %vm547, %v336, 0
        %557 = vmatpush.msra.mxu0 %v457
        %558 = vmatpush.msra.mxu0 %v449
        %559 = vmatpush.msra.mxu0 %v441
        %560 = vmatpush.msra.mxu0 %v433
        %561 = vmatpush.msra.mxu0 %v425
        %562 = vmatpush.msra.mxu0 %v417
        %563 = vmatpush.msra.mxu0 %v409
        %564 = vmatpush.msra.mxu0 %v401
        %565 = vmatpush.msra.mxu0 %v393
        %566 = vmatpush.msra.mxu0 %v385
        %567 = vmatpush.msra.mxu0 %v377
        %568 = vmatpush.msra.mxu0 %v369
        %569 = vmatpush.msra.mxu0 %v361
        %570 = vmatpush.msra.mxu0 %v353
        %571 = vmatpush.msra.mxu0 %v345
        %572 = vmatpush.msra.mxu0 %v337
        %573 = vmatmul.f32.gmra.mxu0 %v331
        %v574 = vpop.f32.mrf.mxu0
        %v575 = vadd.f32 %v531, %v574
        %576 = vmatmul.f32.gmra.mxu0 %v333
        %v577 = vpop.f32.mrf.mxu0
        %v578 = vadd.f32 %v531, %v577
        %579 = vmatmul.f32.gmra.mxu0 %v335
        %v580 = vpop.f32.mrf.mxu0
        %v581 = vadd.f32 %v531, %v580
        %582 = vdwg.mxu0
        %583 = vmatpush.msra.mxu0 0.0
        %584 = vmatpush.msra.mxu0 0.0
        %585 = vmatpush.msra.mxu0 0.0
        %586 = vmatpush.msra.mxu0 0.0
        %587 = vmatpush.msra.mxu0 0.0
        %588 = vmatpush.msra.mxu0 0.0
        %589 = vmatpush.msra.mxu0 0.0
        %590 = vmatpush.msra.mxu0 0.0
        %591 = vmatpush.msra.mxu0 %v521
        %592 = vmatpush.msra.mxu0 %v513
        %593 = vmatpush.msra.mxu0 %v505
        %594 = vmatpush.msra.mxu0 %v497
        %595 = vmatpush.msra.mxu0 %v489
        %596 = vmatpush.msra.mxu0 %v481
        %597 = vmatpush.msra.mxu0 %v473
        %598 = vmatpush.msra.mxu0 %v465
        %599 = vmatmul.f32.gmra.mxu0 %v549
        %v600 = vpop.f32.mrf.mxu0
        %v601 = vadd.f32 %v575, %v600
        %602 = vmatmul.f32.gmra.mxu0 %v552
        %v603 = vpop.f32.mrf.mxu0
        %v604 = vadd.f32 %v578, %v603
        %605 = vmatmul.f32.gmra.mxu0 %v555
        %v606 = vpop.f32.mrf.mxu0
        %v607 = vadd.f32 %v581, %v606
        %608 = vdwg.mxu0
        %609 = vmatpush.msra.mxu0 %v458
        %610 = vmatpush.msra.mxu0 %v450
        %611 = vmatpush.msra.mxu0 %v442
        %612 = vmatpush.msra.mxu0 %v434
        %613 = vmatpush.msra.mxu0 %v426
        %614 = vmatpush.msra.mxu0 %v418
        %615 = vmatpush.msra.mxu0 %v410
        %616 = vmatpush.msra.mxu0 %v402
        %617 = vmatpush.msra.mxu0 %v394
        %618 = vmatpush.msra.mxu0 %v386
        %619 = vmatpush.msra.mxu0 %v378
        %620 = vmatpush.msra.mxu0 %v370
        %621 = vmatpush.msra.mxu0 %v362
        %622 = vmatpush.msra.mxu0 %v354
        %623 = vmatpush.msra.mxu0 %v346
        %624 = vmatpush.msra.mxu0 %v338
        %625 = vmatmul.f32.gmra.mxu0 %v331
        %v626 = vpop.f32.mrf.mxu0
        %v627 = vadd.f32 %v532, %v626
        %628 = vmatmul.f32.gmra.mxu0 %v333
        %v629 = vpop.f32.mrf.mxu0
        %v630 = vadd.f32 %v532, %v629
        %631 = vmatmul.f32.gmra.mxu0 %v335
        %v632 = vpop.f32.mrf.mxu0
        %v633 = vadd.f32 %v532, %v632
        %634 = vdwg.mxu0
        %635 = vmatpush.msra.mxu0 0.0
        %636 = vmatpush.msra.mxu0 0.0
        %637 = vmatpush.msra.mxu0 0.0
        %638 = vmatpush.msra.mxu0 0.0
        %639 = vmatpush.msra.mxu0 0.0
        %640 = vmatpush.msra.mxu0 0.0
        %641 = vmatpush.msra.mxu0 0.0
        %642 = vmatpush.msra.mxu0 0.0
        %643 = vmatpush.msra.mxu0 %v522
        %644 = vmatpush.msra.mxu0 %v514
        %645 = vmatpush.msra.mxu0 %v506
        %646 = vmatpush.msra.mxu0 %v498
        %647 = vmatpush.msra.mxu0 %v490
        %648 = vmatpush.msra.mxu0 %v482
        %649 = vmatpush.msra.mxu0 %v474
        %650 = vmatpush.msra.mxu0 %v466
        %651 = vmatmul.f32.gmra.mxu0 %v549
        %v652 = vpop.f32.mrf.mxu0
        %v653 = vadd.f32 %v627, %v652
        %654 = vmatmul.f32.gmra.mxu0 %v552
        %v655 = vpop.f32.mrf.mxu0
        %v656 = vadd.f32 %v630, %v655
        %657 = vmatmul.f32.gmra.mxu0 %v555
        %v658 = vpop.f32.mrf.mxu0
        %v659 = vadd.f32 %v633, %v658
        %660 = vdwg.mxu0
        %661 = vmatpush.msra.mxu0 %v459
        %662 = vmatpush.msra.mxu0 %v451
        %663 = vmatpush.msra.mxu0 %v443
        %664 = vmatpush.msra.mxu0 %v435
        %665 = vmatpush.msra.mxu0 %v427
        %666 = vmatpush.msra.mxu0 %v419
        %667 = vmatpush.msra.mxu0 %v411
        %668 = vmatpush.msra.mxu0 %v403
        %669 = vmatpush.msra.mxu0 %v395
        %670 = vmatpush.msra.mxu0 %v387
        %671 = vmatpush.msra.mxu0 %v379
        %672 = vmatpush.msra.mxu0 %v371
        %673 = vmatpush.msra.mxu0 %v363
        %674 = vmatpush.msra.mxu0 %v355
        %675 = vmatpush.msra.mxu0 %v347
        %676 = vmatpush.msra.mxu0 %v339
        %677 = vmatmul.f32.gmra.mxu0 %v331
        %v678 = vpop.f32.mrf.mxu0
        %v679 = vadd.f32 %v533, %v678
        %680 = vmatmul.f32.gmra.mxu0 %v333
        %v681 = vpop.f32.mrf.mxu0
        %v682 = vadd.f32 %v533, %v681
        %683 = vmatmul.f32.gmra.mxu0 %v335
        %v684 = vpop.f32.mrf.mxu0
        %v685 = vadd.f32 %v533, %v684
        %686 = vdwg.mxu0
        %687 = vmatpush.msra.mxu0 0.0
        %688 = vmatpush.msra.mxu0 0.0
        %689 = vmatpush.msra.mxu0 0.0
        %690 = vmatpush.msra.mxu0 0.0
        %691 = vmatpush.msra.mxu0 0.0
        %692 = vmatpush.msra.mxu0 0.0
        %693 = vmatpush.msra.mxu0 0.0
        %694 = vmatpush.msra.mxu0 0.0
        %695 = vmatpush.msra.mxu0 %v523
        %696 = vmatpush.msra.mxu0 %v515
        %697 = vmatpush.msra.mxu0 %v507
        %698 = vmatpush.msra.mxu0 %v499
        %699 = vmatpush.msra.mxu0 %v491
        %700 = vmatpush.msra.mxu0 %v483
        %701 = vmatpush.msra.mxu0 %v475
        %702 = vmatpush.msra.mxu0 %v467
        %703 = vmatmul.f32.gmra.mxu0 %v549
        %v704 = vpop.f32.mrf.mxu0
        %v705 = vadd.f32 %v679, %v704
        %706 = vmatmul.f32.gmra.mxu0 %v552
        %v707 = vpop.f32.mrf.mxu0
        %v708 = vadd.f32 %v682, %v707
        %709 = vmatmul.f32.gmra.mxu0 %v555
        %v710 = vpop.f32.mrf.mxu0
        %v711 = vadd.f32 %v685, %v710
        %712 = vdwg.mxu0
        %713 = vmatpush.msra.mxu0 %v460
        %714 = vmatpush.msra.mxu0 %v452
        %715 = vmatpush.msra.mxu0 %v444
        %716 = vmatpush.msra.mxu0 %v436
        %717 = vmatpush.msra.mxu0 %v428
        %718 = vmatpush.msra.mxu0 %v420
        %719 = vmatpush.msra.mxu0 %v412
        %720 = vmatpush.msra.mxu0 %v404
        %721 = vmatpush.msra.mxu0 %v396
        %722 = vmatpush.msra.mxu0 %v388
        %723 = vmatpush.msra.mxu0 %v380
        %724 = vmatpush.msra.mxu0 %v372
        %725 = vmatpush.msra.mxu0 %v364
        %726 = vmatpush.msra.mxu0 %v356
        %727 = vmatpush.msra.mxu0 %v348
        %728 = vmatpush.msra.mxu0 %v340
        %729 = vmatmul.f32.gmra.mxu0 %v331
        %v730 = vpop.f32.mrf.mxu0
        %v731 = vadd.f32 %v534, %v730
        %732 = vmatmul.f32.gmra.mxu0 %v333
        %v733 = vpop.f32.mrf.mxu0
        %v734 = vadd.f32 %v534, %v733
        %735 = vmatmul.f32.gmra.mxu0 %v335
        %v736 = vpop.f32.mrf.mxu0
        %v737 = vadd.f32 %v534, %v736
        %738 = vdwg.mxu0
        %739 = vmatpush.msra.mxu0 0.0
        %740 = vmatpush.msra.mxu0 0.0
        %741 = vmatpush.msra.mxu0 0.0
        %742 = vmatpush.msra.mxu0 0.0
        %743 = vmatpush.msra.mxu0 0.0
        %744 = vmatpush.msra.mxu0 0.0
        %745 = vmatpush.msra.mxu0 0.0
        %746 = vmatpush.msra.mxu0 0.0
        %747 = vmatpush.msra.mxu0 %v524
        %748 = vmatpush.msra.mxu0 %v516
        %749 = vmatpush.msra.mxu0 %v508
        %750 = vmatpush.msra.mxu0 %v500
        %751 = vmatpush.msra.mxu0 %v492
        %752 = vmatpush.msra.mxu0 %v484
        %753 = vmatpush.msra.mxu0 %v476
        %754 = vmatpush.msra.mxu0 %v468
        %755 = vmatmul.f32.gmra.mxu0 %v549
        %v756 = vpop.f32.mrf.mxu0
        %v757 = vadd.f32 %v731, %v756
        %758 = vmatmul.f32.gmra.mxu0 %v552
        %v759 = vpop.f32.mrf.mxu0
        %v760 = vadd.f32 %v734, %v759
        %761 = vmatmul.f32.gmra.mxu0 %v555
        %v762 = vpop.f32.mrf.mxu0
        %v763 = vadd.f32 %v737, %v762
        %764 = vdwg.mxu0
        %765 = vmatpush.msra.mxu0 %v461
        %766 = vmatpush.msra.mxu0 %v453
        %767 = vmatpush.msra.mxu0 %v445
        %768 = vmatpush.msra.mxu0 %v437
        %769 = vmatpush.msra.mxu0 %v429
        %770 = vmatpush.msra.mxu0 %v421
        %771 = vmatpush.msra.mxu0 %v413
        %772 = vmatpush.msra.mxu0 %v405
        %773 = vmatpush.msra.mxu0 %v397
        %774 = vmatpush.msra.mxu0 %v389
        %775 = vmatpush.msra.mxu0 %v381
        %776 = vmatpush.msra.mxu0 %v373
        %777 = vmatpush.msra.mxu0 %v365
        %778 = vmatpush.msra.mxu0 %v357
        %779 = vmatpush.msra.mxu0 %v349
        %780 = vmatpush.msra.mxu0 %v341
        %781 = vmatmul.f32.gmra.mxu0 %v331
        %v782 = vpop.f32.mrf.mxu0
        %v783 = vadd.f32 %v535, %v782
        %784 = vmatmul.f32.gmra.mxu0 %v333
        %v785 = vpop.f32.mrf.mxu0
        %v786 = vadd.f32 %v535, %v785
        %787 = vmatmul.f32.gmra.mxu0 %v335
        %v788 = vpop.f32.mrf.mxu0
        %v789 = vadd.f32 %v535, %v788
        %790 = vdwg.mxu0
        %791 = vmatpush.msra.mxu0 0.0
        %792 = vmatpush.msra.mxu0 0.0
        %793 = vmatpush.msra.mxu0 0.0
        %794 = vmatpush.msra.mxu0 0.0
        %795 = vmatpush.msra.mxu0 0.0
        %796 = vmatpush.msra.mxu0 0.0
        %797 = vmatpush.msra.mxu0 0.0
        %798 = vmatpush.msra.mxu0 0.0
        %799 = vmatpush.msra.mxu0 %v525
        %800 = vmatpush.msra.mxu0 %v517
        %801 = vmatpush.msra.mxu0 %v509
        %802 = vmatpush.msra.mxu0 %v501
        %803 = vmatpush.msra.mxu0 %v493
        %804 = vmatpush.msra.mxu0 %v485
        %805 = vmatpush.msra.mxu0 %v477
        %806 = vmatpush.msra.mxu0 %v469
        %807 = vmatmul.f32.gmra.mxu0 %v549
        %v808 = vpop.f32.mrf.mxu0
        %v809 = vadd.f32 %v783, %v808
        %810 = vmatmul.f32.gmra.mxu0 %v552
        %v811 = vpop.f32.mrf.mxu0
        %v812 = vadd.f32 %v786, %v811
        %813 = vmatmul.f32.gmra.mxu0 %v555
        %v814 = vpop.f32.mrf.mxu0
        %v815 = vadd.f32 %v789, %v814
        %816 = vdwg.mxu0
        %817 = vmatpush.msra.mxu0 %v462
        %818 = vmatpush.msra.mxu0 %v454
        %819 = vmatpush.msra.mxu0 %v446
        %820 = vmatpush.msra.mxu0 %v438
        %821 = vmatpush.msra.mxu0 %v430
        %822 = vmatpush.msra.mxu0 %v422
        %823 = vmatpush.msra.mxu0 %v414
        %824 = vmatpush.msra.mxu0 %v406
        %825 = vmatpush.msra.mxu0 %v398
        %826 = vmatpush.msra.mxu0 %v390
        %827 = vmatpush.msra.mxu0 %v382
        %828 = vmatpush.msra.mxu0 %v374
        %829 = vmatpush.msra.mxu0 %v366
        %830 = vmatpush.msra.mxu0 %v358
        %831 = vmatpush.msra.mxu0 %v350
        %832 = vmatpush.msra.mxu0 %v342
        %833 = vmatmul.f32.gmra.mxu0 %v331
        %v834 = vpop.f32.mrf.mxu0
        %v835 = vadd.f32 %v536, %v834
        %836 = vmatmul.f32.gmra.mxu0 %v333
        %v837 = vpop.f32.mrf.mxu0
        %v838 = vadd.f32 %v536, %v837
        %839 = vmatmul.f32.gmra.mxu0 %v335
        %v840 = vpop.f32.mrf.mxu0
        %v841 = vadd.f32 %v536, %v840
        %842 = vdwg.mxu0
        %843 = vmatpush.msra.mxu0 0.0
        %844 = vmatpush.msra.mxu0 0.0
        %845 = vmatpush.msra.mxu0 0.0
        %846 = vmatpush.msra.mxu0 0.0
        %847 = vmatpush.msra.mxu0 0.0
        %848 = vmatpush.msra.mxu0 0.0
        %849 = vmatpush.msra.mxu0 0.0
        %850 = vmatpush.msra.mxu0 0.0
        %851 = vmatpush.msra.mxu0 %v526
        %852 = vmatpush.msra.mxu0 %v518
        %853 = vmatpush.msra.mxu0 %v510
        %854 = vmatpush.msra.mxu0 %v502
        %855 = vmatpush.msra.mxu0 %v494
        %856 = vmatpush.msra.mxu0 %v486
        %857 = vmatpush.msra.mxu0 %v478
        %858 = vmatpush.msra.mxu0 %v470
        %859 = vmatmul.f32.gmra.mxu0 %v549
        %v860 = vpop.f32.mrf.mxu0
        %v861 = vadd.f32 %v835, %v860
        %862 = vmatmul.f32.gmra.mxu0 %v552
        %v863 = vpop.f32.mrf.mxu0
        %v864 = vadd.f32 %v838, %v863
        %865 = vmatmul.f32.gmra.mxu0 %v555
        %v866 = vpop.f32.mrf.mxu0
        %v867 = vadd.f32 %v841, %v866
        %868 = vdwg.mxu0
        %869 = vmatpush.msra.mxu0 %v463
        %870 = vmatpush.msra.mxu0 %v455
        %871 = vmatpush.msra.mxu0 %v447
        %872 = vmatpush.msra.mxu0 %v439
        %873 = vmatpush.msra.mxu0 %v431
        %874 = vmatpush.msra.mxu0 %v423
        %875 = vmatpush.msra.mxu0 %v415
        %876 = vmatpush.msra.mxu0 %v407
        %877 = vmatpush.msra.mxu0 %v399
        %878 = vmatpush.msra.mxu0 %v391
        %879 = vmatpush.msra.mxu0 %v383
        %880 = vmatpush.msra.mxu0 %v375
        %881 = vmatpush.msra.mxu0 %v367
        %882 = vmatpush.msra.mxu0 %v359
        %883 = vmatpush.msra.mxu0 %v351
        %884 = vmatpush.msra.mxu0 %v343
        %885 = vmatmul.f32.gmra.mxu0 %v331
        %v886 = vpop.f32.mrf.mxu0
        %v887 = vadd.f32 %v537, %v886
        %888 = vmatmul.f32.gmra.mxu0 %v333
        %v889 = vpop.f32.mrf.mxu0
        %v890 = vadd.f32 %v537, %v889
        %891 = vmatmul.f32.gmra.mxu0 %v335
        %v892 = vpop.f32.mrf.mxu0
        %v893 = vadd.f32 %v537, %v892
        %894 = vdwg.mxu0
        %895 = vmatpush.msra.mxu0 0.0
        %896 = vmatpush.msra.mxu0 0.0
        %897 = vmatpush.msra.mxu0 0.0
        %898 = vmatpush.msra.mxu0 0.0
        %899 = vmatpush.msra.mxu0 0.0
        %900 = vmatpush.msra.mxu0 0.0
        %901 = vmatpush.msra.mxu0 0.0
        %902 = vmatpush.msra.mxu0 0.0
        %903 = vmatpush.msra.mxu0 %v527
        %904 = vmatpush.msra.mxu0 %v519
        %905 = vmatpush.msra.mxu0 %v511
        %906 = vmatpush.msra.mxu0 %v503
        %907 = vmatpush.msra.mxu0 %v495
        %908 = vmatpush.msra.mxu0 %v487
        %909 = vmatpush.msra.mxu0 %v479
        %910 = vmatpush.msra.mxu0 %v471
        %911 = vmatmul.f32.gmra.mxu0 %v549
        %v912 = vpop.f32.mrf.mxu0
        %v913 = vadd.f32 %v887, %v912
        %914 = vmatmul.f32.gmra.mxu0 %v552
        %v915 = vpop.f32.mrf.mxu0
        %v916 = vadd.f32 %v890, %v915
        %917 = vmatmul.f32.gmra.mxu0 %v555
        %v918 = vpop.f32.mrf.mxu0
        %v919 = vadd.f32 %v893, %v918
        %920 = vdwg.mxu0
        %921 = vmatpush.msra.mxu0 %v464
        %922 = vmatpush.msra.mxu0 %v456
        %923 = vmatpush.msra.mxu0 %v448
        %924 = vmatpush.msra.mxu0 %v440
        %925 = vmatpush.msra.mxu0 %v432
        %926 = vmatpush.msra.mxu0 %v424
        %927 = vmatpush.msra.mxu0 %v416
        %928 = vmatpush.msra.mxu0 %v408
        %929 = vmatpush.msra.mxu0 %v400
        %930 = vmatpush.msra.mxu0 %v392
        %931 = vmatpush.msra.mxu0 %v384
        %932 = vmatpush.msra.mxu0 %v376
        %933 = vmatpush.msra.mxu0 %v368
        %934 = vmatpush.msra.mxu0 %v360
        %935 = vmatpush.msra.mxu0 %v352
        %936 = vmatpush.msra.mxu0 %v344
        %937 = vmatmul.f32.gmra.mxu0 %v331
        %v938 = vpop.f32.mrf.mxu0
        %v939 = vadd.f32 %v538, %v938
        %940 = vmatmul.f32.gmra.mxu0 %v333
        %v941 = vpop.f32.mrf.mxu0
        %v942 = vadd.f32 %v538, %v941
        %943 = vmatmul.f32.gmra.mxu0 %v335
        %v944 = vpop.f32.mrf.mxu0
        %v945 = vadd.f32 %v538, %v944
        %946 = vdwg.mxu0
        %947 = vmatpush.msra.mxu0 0.0
        %948 = vmatpush.msra.mxu0 0.0
        %949 = vmatpush.msra.mxu0 0.0
        %950 = vmatpush.msra.mxu0 0.0
        %951 = vmatpush.msra.mxu0 0.0
        %952 = vmatpush.msra.mxu0 0.0
        %953 = vmatpush.msra.mxu0 0.0
        %954 = vmatpush.msra.mxu0 0.0
        %955 = vmatpush.msra.mxu0 %v528
        %956 = vmatpush.msra.mxu0 %v520
        %957 = vmatpush.msra.mxu0 %v512
        %958 = vmatpush.msra.mxu0 %v504
        %959 = vmatpush.msra.mxu0 %v496
        %960 = vmatpush.msra.mxu0 %v488
        %961 = vmatpush.msra.mxu0 %v480
        %962 = vmatpush.msra.mxu0 %v472
        %963 = vmatmul.f32.gmra.mxu0 %v549
        %v964 = vpop.f32.mrf.mxu0
        %v965 = vadd.f32 %v939, %v964
        %966 = vmatmul.f32.gmra.mxu0 %v552
        %v967 = vpop.f32.mrf.mxu0
        %v968 = vadd.f32 %v942, %v967
        %969 = vmatmul.f32.gmra.mxu0 %v555
        %v970 = vpop.f32.mrf.mxu0
        %v971 = vadd.f32 %v945, %v970
        %972 = vdwg.mxu0
        %vm973 = vcmp.gt.f32.partialorder %v601, 0.0
        %vm974 = vcmp.gt.f32.partialorder %v653, 0.0
        %vm975 = vcmp.gt.f32.partialorder %v705, 0.0
        %vm976 = vcmp.gt.f32.partialorder %v757, 0.0
        %vm977 = vcmp.gt.f32.partialorder %v809, 0.0
        %vm978 = vcmp.gt.f32.partialorder %v861, 0.0
        %vm979 = vcmp.gt.f32.partialorder %v913, 0.0
        %vm980 = vcmp.gt.f32.partialorder %v965, 0.0
        %vm981 = vcmp.gt.f32.partialorder %v604, 0.0
        %vm982 = vcmp.gt.f32.partialorder %v656, 0.0
        %vm983 = vcmp.gt.f32.partialorder %v708, 0.0
        %vm984 = vcmp.gt.f32.partialorder %v760, 0.0
        %vm985 = vcmp.gt.f32.partialorder %v812, 0.0
        %vm986 = vcmp.gt.f32.partialorder %v864, 0.0
        %vm987 = vcmp.gt.f32.partialorder %v916, 0.0
        %vm988 = vcmp.gt.f32.partialorder %v968, 0.0
        %vm989 = vcmp.gt.f32.partialorder %v607, 0.0
        %vm990 = vcmp.gt.f32.partialorder %v659, 0.0
        %vm991 = vcmp.gt.f32.partialorder %v711, 0.0
        %vm992 = vcmp.gt.f32.partialorder %v763, 0.0
        %vm993 = vcmp.gt.f32.partialorder %v815, 0.0
        %vm994 = vcmp.gt.f32.partialorder %v867, 0.0
        %vm995 = vcmp.gt.f32.partialorder %v919, 0.0
        %vm996 = vcmp.gt.f32.partialorder %v971, 0.0
        %v997 = vmin.f32 %v601, 0.0
        %v998 = vmin.f32 %v653, 0.0
        %v999 = vmin.f32 %v705, 0.0
        %v1000 = vmin.f32 %v757, 0.0
        %v1001 = vmin.f32 %v809, 0.0
        %v1002 = vmin.f32 %v861, 0.0
        %v1003 = vmin.f32 %v913, 0.0
        %v1004 = vmin.f32 %v965, 0.0
        %v1005 = vmin.f32 %v604, 0.0
        %v1006 = vmin.f32 %v656, 0.0
        %v1007 = vmin.f32 %v708, 0.0
        %v1008 = vmin.f32 %v760, 0.0
        %v1009 = vmin.f32 %v812, 0.0
        %v1010 = vmin.f32 %v864, 0.0
        %v1011 = vmin.f32 %v916, 0.0
        %v1012 = vmin.f32 %v968, 0.0
        %v1013 = vmin.f32 %v607, 0.0
        %v1014 = vmin.f32 %v659, 0.0
        %v1015 = vmin.f32 %v711, 0.0
        %v1016 = vmin.f32 %v763, 0.0
        %v1017 = vmin.f32 %v815, 0.0
        %v1018 = vmin.f32 %v867, 0.0
        %v1019 = vmin.f32 %v919, 0.0
        %v1020 = vmin.f32 %v971, 0.0
        %v1021 = vmul.f32 %v997, 1.442695
        %v1022 = vpow.pop %v1021
        %v1023 = vmul.f32 %v998, 1.442695
        %v1024 = vpow.pop %v1023
        %v1025 = vmul.f32 %v999, 1.442695
        %v1026 = vpow.pop %v1025
        %v1027 = vmul.f32 %v1000, 1.442695
        %v1028 = vpow.pop %v1027
        %v1029 = vmul.f32 %v1001, 1.442695
        %v1030 = vpow.pop %v1029
        %v1031 = vmul.f32 %v1002, 1.442695
        %v1032 = vpow.pop %v1031
        %v1033 = vmul.f32 %v1003, 1.442695
        %v1034 = vpow.pop %v1033
        %v1035 = vmul.f32 %v1004, 1.442695
        %v1036 = vpow.pop %v1035
        %v1037 = vmul.f32 %v1005, 1.442695
        %v1038 = vpow.pop %v1037
        %v1039 = vmul.f32 %v1006, 1.442695
        %v1040 = vpow.pop %v1039
        %v1041 = vmul.f32 %v1007, 1.442695
        %v1042 = vpow.pop %v1041
        %v1043 = vmul.f32 %v1008, 1.442695
        %v1044 = vpow.pop %v1043
        %v1045 = vmul.f32 %v1009, 1.442695
        %v1046 = vpow.pop %v1045
        %v1047 = vmul.f32 %v1010, 1.442695
        %v1048 = vpow.pop %v1047
        %v1049 = vmul.f32 %v1011, 1.442695
        %v1050 = vpow.pop %v1049
        %v1051 = vmul.f32 %v1012, 1.442695
        %v1052 = vpow.pop %v1051
        %v1053 = vmul.f32 %v1013, 1.442695
        %v1054 = vpow.pop %v1053
        %v1055 = vmul.f32 %v1014, 1.442695
        %v1056 = vpow.pop %v1055
        %v1057 = vmul.f32 %v1015, 1.442695
        %v1058 = vpow.pop %v1057
        %v1059 = vmul.f32 %v1016, 1.442695
        %v1060 = vpow.pop %v1059
        %v1061 = vmul.f32 %v1017, 1.442695
        %v1062 = vpow.pop %v1061
        %v1063 = vmul.f32 %v1018, 1.442695
        %v1064 = vpow.pop %v1063
        %v1065 = vmul.f32 %v1019, 1.442695
        %v1066 = vpow.pop %v1065
        %v1067 = vmul.f32 %v1020, 1.442695
        %v1068 = vpow.pop %v1067
        %v1069 = vsub.f32 %v1022, 1.0
        %v1070 = vsub.f32 %v1024, 1.0
        %v1071 = vsub.f32 %v1026, 1.0
        %v1072 = vsub.f32 %v1028, 1.0
        %v1073 = vsub.f32 %v1030, 1.0
        %v1074 = vsub.f32 %v1032, 1.0
        %v1075 = vsub.f32 %v1034, 1.0
        %v1076 = vsub.f32 %v1036, 1.0
        %v1077 = vsub.f32 %v1038, 1.0
        %v1078 = vsub.f32 %v1040, 1.0
        %v1079 = vsub.f32 %v1042, 1.0
        %v1080 = vsub.f32 %v1044, 1.0
        %v1081 = vsub.f32 %v1046, 1.0
        %v1082 = vsub.f32 %v1048, 1.0
        %v1083 = vsub.f32 %v1050, 1.0
        %v1084 = vsub.f32 %v1052, 1.0
        %v1085 = vsub.f32 %v1054, 1.0
        %v1086 = vsub.f32 %v1056, 1.0
        %v1087 = vsub.f32 %v1058, 1.0
        %v1088 = vsub.f32 %v1060, 1.0
        %v1089 = vsub.f32 %v1062, 1.0
        %v1090 = vsub.f32 %v1064, 1.0
        %v1091 = vsub.f32 %v1066, 1.0
        %v1092 = vsub.f32 %v1068, 1.0
        %v1093 = vsel %vm973, %v601, %v1069
        %v1094 = vsel %vm974, %v653, %v1070
        %v1095 = vsel %vm975, %v705, %v1071
        %v1096 = vsel %vm976, %v757, %v1072
        %v1097 = vsel %vm977, %v809, %v1073
        %v1098 = vsel %vm978, %v861, %v1074
        %v1099 = vsel %vm979, %v913, %v1075
        %v1100 = vsel %vm980, %v965, %v1076
        %v1101 = vsel %vm981, %v604, %v1077
        %v1102 = vsel %vm982, %v656, %v1078
        %v1103 = vsel %vm983, %v708, %v1079
        %v1104 = vsel %vm984, %v760, %v1080
        %v1105 = vsel %vm985, %v812, %v1081
        %v1106 = vsel %vm986, %v864, %v1082
        %v1107 = vsel %vm987, %v916, %v1083
        %v1108 = vsel %vm988, %v968, %v1084
        %v1109 = vsel %vm989, %v607, %v1085
        %v1110 = vsel %vm990, %v659, %v1086
        %v1111 = vsel %vm991, %v711, %v1087
        %v1112 = vsel %vm992, %v763, %v1088
        %v1113 = vsel %vm993, %v815, %v1089
        %v1114 = vsel %vm994, %v867, %v1090
        %v1115 = vsel %vm995, %v919, %v1091
        %v1116 = vsel %vm996, %v971, %v1092
        %v1117 = vld [vmem:[%s3] sm:$0xff]
        %v1119 = vperm.slane %v1117, 0
        %v1120 = vperm.slane %v1117, 1
        %v1121 = vperm.slane %v1117, 2
        %v1122 = vperm.slane %v1117, 3
        %v1123 = vperm.slane %v1117, 4
        %v1124 = vperm.slane %v1117, 5
        %v1125 = vperm.slane %v1117, 6
        %v1126 = vperm.slane %v1117, 7
        %v1135 = vmul.f32 %v1093, %v1119
        %v1136 = vmul.f32 %v1094, %v1120
        %v1137 = vmul.f32 %v1095, %v1121
        %v1138 = vmul.f32 %v1096, %v1122
        %v1139 = vmul.f32 %v1097, %v1123
        %v1140 = vmul.f32 %v1098, %v1124
        %v1141 = vmul.f32 %v1099, %v1125
        %v1142 = vmul.f32 %v1100, %v1126
        %s1143 = scalar_lea.vmem %s3, 8
        %v1144 = vld [vmem:[%s1143] sm:$0xff]
        %v1146 = vperm.slane %v1144, 0
        %v1147 = vperm.slane %v1144, 1
        %v1148 = vperm.slane %v1144, 2
        %v1149 = vperm.slane %v1144, 3
        %v1150 = vperm.slane %v1144, 4
        %v1151 = vperm.slane %v1144, 5
        %v1152 = vperm.slane %v1144, 6
        %v1153 = vperm.slane %v1144, 7
        %v1162 = vmul.f32 %v1101, %v1146
        %v1163 = vmul.f32 %v1102, %v1147
        %v1164 = vmul.f32 %v1103, %v1148
        %v1165 = vmul.f32 %v1104, %v1149
        %v1166 = vmul.f32 %v1105, %v1150
        %v1167 = vmul.f32 %v1106, %v1151
        %v1168 = vmul.f32 %v1107, %v1152
        %v1169 = vmul.f32 %v1108, %v1153
        %v1170 = vadd.f32 %v1135, %v1162
        %v1171 = vadd.f32 %v1136, %v1163
        %v1172 = vadd.f32 %v1137, %v1164
        %v1173 = vadd.f32 %v1138, %v1165
        %v1174 = vadd.f32 %v1139, %v1166
        %v1175 = vadd.f32 %v1140, %v1167
        %v1176 = vadd.f32 %v1141, %v1168
        %v1177 = vadd.f32 %v1142, %v1169
        %s1178 = scalar_lea.vmem %s3, 16
        %v1179 = vld [vmem:[%s1178] sm:$0xff]
        %v1181 = vperm.slane %v1179, 0
        %v1182 = vperm.slane %v1179, 1
        %v1183 = vperm.slane %v1179, 2
        %v1184 = vperm.slane %v1179, 3
        %v1185 = vperm.slane %v1179, 4
        %v1186 = vperm.slane %v1179, 5
        %v1187 = vperm.slane %v1179, 6
        %v1188 = vperm.slane %v1179, 7
        %v1197 = vmul.f32 %v1109, %v1181
        %v1198 = vmul.f32 %v1110, %v1182
        %v1199 = vmul.f32 %v1111, %v1183
        %v1200 = vmul.f32 %v1112, %v1184
        %v1201 = vmul.f32 %v1113, %v1185
        %v1202 = vmul.f32 %v1114, %v1186
        %v1203 = vmul.f32 %v1115, %v1187
        %v1204 = vmul.f32 %v1116, %v1188
        %v1205 = vadd.f32 %v1170, %v1197
        %v1206 = vadd.f32 %v1171, %v1198
        %v1207 = vadd.f32 %v1172, %v1199
        %v1208 = vadd.f32 %v1173, %v1200
        %v1209 = vadd.f32 %v1174, %v1201
        %v1210 = vadd.f32 %v1175, %v1202
        %v1211 = vadd.f32 %v1176, %v1203
        %v1212 = vadd.f32 %v1177, %v1204
        %v1213 = vld [vmem:[%s4] sm:$0xff]
        %v1215 = vperm.slane %v1213, 0
        %v1216 = vperm.slane %v1213, 1
        %v1217 = vperm.slane %v1213, 2
        %v1218 = vperm.slane %v1213, 3
        %v1219 = vperm.slane %v1213, 4
        %v1220 = vperm.slane %v1213, 5
        %v1221 = vperm.slane %v1213, 6
        %v1222 = vperm.slane %v1213, 7
        %v1231 = vadd.f32 %v1205, %v1215
        %v1232 = vadd.f32 %v1206, %v1216
        %v1233 = vadd.f32 %v1207, %v1217
        %v1234 = vadd.f32 %v1208, %v1218
        %v1235 = vadd.f32 %v1209, %v1219
        %v1236 = vadd.f32 %v1210, %v1220
        %v1237 = vadd.f32 %v1211, %v1221
        %v1238 = vadd.f32 %v1212, %v1222
        %vm1239 = vcmp.gt.f32.partialorder %v1231, 0.0
        %vm1240 = vcmp.gt.f32.partialorder %v1232, 0.0
        %vm1241 = vcmp.gt.f32.partialorder %v1233, 0.0
        %vm1242 = vcmp.gt.f32.partialorder %v1234, 0.0
        %vm1243 = vcmp.gt.f32.partialorder %v1235, 0.0
        %vm1244 = vcmp.gt.f32.partialorder %v1236, 0.0
        %vm1245 = vcmp.gt.f32.partialorder %v1237, 0.0
        %vm1246 = vcmp.gt.f32.partialorder %v1238, 0.0
        %v1247 = vmin.f32 %v1231, 0.0
        %v1248 = vmin.f32 %v1232, 0.0
        %v1249 = vmin.f32 %v1233, 0.0
        %v1250 = vmin.f32 %v1234, 0.0
        %v1251 = vmin.f32 %v1235, 0.0
        %v1252 = vmin.f32 %v1236, 0.0
        %v1253 = vmin.f32 %v1237, 0.0
        %v1254 = vmin.f32 %v1238, 0.0
        %v1255 = vmul.f32 %v1247, 1.442695
        %v1256 = vpow.pop %v1255
        %v1257 = vmul.f32 %v1248, 1.442695
        %v1258 = vpow.pop %v1257
        %v1259 = vmul.f32 %v1249, 1.442695
        %v1260 = vpow.pop %v1259
        %v1261 = vmul.f32 %v1250, 1.442695
        %v1262 = vpow.pop %v1261
        %v1263 = vmul.f32 %v1251, 1.442695
        %v1264 = vpow.pop %v1263
        %v1265 = vmul.f32 %v1252, 1.442695
        %v1266 = vpow.pop %v1265
        %v1267 = vmul.f32 %v1253, 1.442695
        %v1268 = vpow.pop %v1267
        %v1269 = vmul.f32 %v1254, 1.442695
        %v1270 = vpow.pop %v1269
        %v1271 = vsub.f32 %v1256, 1.0
        %v1272 = vsub.f32 %v1258, 1.0
        %v1273 = vsub.f32 %v1260, 1.0
        %v1274 = vsub.f32 %v1262, 1.0
        %v1275 = vsub.f32 %v1264, 1.0
        %v1276 = vsub.f32 %v1266, 1.0
        %v1277 = vsub.f32 %v1268, 1.0
        %v1278 = vsub.f32 %v1270, 1.0
        %v1279 = vsel %vm1239, %v1231, %v1271
        %v1280 = vsel %vm1240, %v1232, %v1272
        %v1281 = vsel %vm1241, %v1233, %v1273
        %v1282 = vsel %vm1242, %v1234, %v1274
        %v1283 = vsel %vm1243, %v1235, %v1275
        %v1284 = vsel %vm1244, %v1236, %v1276
        %v1285 = vsel %vm1245, %v1237, %v1277
        %v1286 = vsel %vm1246, %v1238, %v1278
        %s1287 = scalar_lea.vmem %s3, 24
        %v1288 = vld [vmem:[%s1287] sm:$0xff]
        %v1290 = vperm.slane %v1288, 0
        %v1291 = vperm.slane %v1288, 1
        %v1292 = vperm.slane %v1288, 2
        %v1293 = vperm.slane %v1288, 3
        %v1294 = vperm.slane %v1288, 4
        %v1295 = vperm.slane %v1288, 5
        %v1296 = vperm.slane %v1288, 6
        %v1297 = vperm.slane %v1288, 7
        %v1306 = vmul.f32 %v1093, %v1290
        %v1307 = vmul.f32 %v1094, %v1291
        %v1308 = vmul.f32 %v1095, %v1292
        %v1309 = vmul.f32 %v1096, %v1293
        %v1310 = vmul.f32 %v1097, %v1294
        %v1311 = vmul.f32 %v1098, %v1295
        %v1312 = vmul.f32 %v1099, %v1296
        %v1313 = vmul.f32 %v1100, %v1297
        %s1314 = scalar_lea.vmem %s3, 32
        %v1315 = vld [vmem:[%s1314] sm:$0xff]
        %v1317 = vperm.slane %v1315, 0
        %v1318 = vperm.slane %v1315, 1
        %v1319 = vperm.slane %v1315, 2
        %v1320 = vperm.slane %v1315, 3
        %v1321 = vperm.slane %v1315, 4
        %v1322 = vperm.slane %v1315, 5
        %v1323 = vperm.slane %v1315, 6
        %v1324 = vperm.slane %v1315, 7
        %v1333 = vmul.f32 %v1101, %v1317
        %v1334 = vmul.f32 %v1102, %v1318
        %v1335 = vmul.f32 %v1103, %v1319
        %v1336 = vmul.f32 %v1104, %v1320
        %v1337 = vmul.f32 %v1105, %v1321
        %v1338 = vmul.f32 %v1106, %v1322
        %v1339 = vmul.f32 %v1107, %v1323
        %v1340 = vmul.f32 %v1108, %v1324
        %v1341 = vadd.f32 %v1306, %v1333
        %v1342 = vadd.f32 %v1307, %v1334
        %v1343 = vadd.f32 %v1308, %v1335
        %v1344 = vadd.f32 %v1309, %v1336
        %v1345 = vadd.f32 %v1310, %v1337
        %v1346 = vadd.f32 %v1311, %v1338
        %v1347 = vadd.f32 %v1312, %v1339
        %v1348 = vadd.f32 %v1313, %v1340
        %s1349 = scalar_lea.vmem %s3, 40
        %v1350 = vld [vmem:[%s1349] sm:$0xff]
        %v1352 = vperm.slane %v1350, 0
        %v1353 = vperm.slane %v1350, 1
        %v1354 = vperm.slane %v1350, 2
        %v1355 = vperm.slane %v1350, 3
        %v1356 = vperm.slane %v1350, 4
        %v1357 = vperm.slane %v1350, 5
        %v1358 = vperm.slane %v1350, 6
        %v1359 = vperm.slane %v1350, 7
        %v1368 = vmul.f32 %v1109, %v1352
        %v1369 = vmul.f32 %v1110, %v1353
        %v1370 = vmul.f32 %v1111, %v1354
        %v1371 = vmul.f32 %v1112, %v1355
        %v1372 = vmul.f32 %v1113, %v1356
        %v1373 = vmul.f32 %v1114, %v1357
        %v1374 = vmul.f32 %v1115, %v1358
        %v1375 = vmul.f32 %v1116, %v1359
        %v1376 = vadd.f32 %v1341, %v1368
        %v1377 = vadd.f32 %v1342, %v1369
        %v1378 = vadd.f32 %v1343, %v1370
        %v1379 = vadd.f32 %v1344, %v1371
        %v1380 = vadd.f32 %v1345, %v1372
        %v1381 = vadd.f32 %v1346, %v1373
        %v1382 = vadd.f32 %v1347, %v1374
        %v1383 = vadd.f32 %v1348, %v1375
        %s1384 = scalar_lea.vmem %s4, 8
        %v1385 = vld [vmem:[%s1384] sm:$0xff]
        %v1387 = vperm.slane %v1385, 0
        %v1388 = vperm.slane %v1385, 1
        %v1389 = vperm.slane %v1385, 2
        %v1390 = vperm.slane %v1385, 3
        %v1391 = vperm.slane %v1385, 4
        %v1392 = vperm.slane %v1385, 5
        %v1393 = vperm.slane %v1385, 6
        %v1394 = vperm.slane %v1385, 7
        %v1403 = vadd.f32 %v1376, %v1387
        %v1404 = vadd.f32 %v1377, %v1388
        %v1405 = vadd.f32 %v1378, %v1389
        %v1406 = vadd.f32 %v1379, %v1390
        %v1407 = vadd.f32 %v1380, %v1391
        %v1408 = vadd.f32 %v1381, %v1392
        %v1409 = vadd.f32 %v1382, %v1393
        %v1410 = vadd.f32 %v1383, %v1394
        %vm1411 = vcmp.gt.f32.partialorder %v1403, 0.0
        %vm1412 = vcmp.gt.f32.partialorder %v1404, 0.0
        %vm1413 = vcmp.gt.f32.partialorder %v1405, 0.0
        %vm1414 = vcmp.gt.f32.partialorder %v1406, 0.0
        %vm1415 = vcmp.gt.f32.partialorder %v1407, 0.0
        %vm1416 = vcmp.gt.f32.partialorder %v1408, 0.0
        %vm1417 = vcmp.gt.f32.partialorder %v1409, 0.0
        %vm1418 = vcmp.gt.f32.partialorder %v1410, 0.0
        %v1419 = vmin.f32 %v1403, 0.0
        %v1420 = vmin.f32 %v1404, 0.0
        %v1421 = vmin.f32 %v1405, 0.0
        %v1422 = vmin.f32 %v1406, 0.0
        %v1423 = vmin.f32 %v1407, 0.0
        %v1424 = vmin.f32 %v1408, 0.0
        %v1425 = vmin.f32 %v1409, 0.0
        %v1426 = vmin.f32 %v1410, 0.0
        %v1427 = vmul.f32 %v1419, 1.442695
        %v1428 = vpow.pop %v1427
        %v1429 = vmul.f32 %v1420, 1.442695
        %v1430 = vpow.pop %v1429
        %v1431 = vmul.f32 %v1421, 1.442695
        %v1432 = vpow.pop %v1431
        %v1433 = vmul.f32 %v1422, 1.442695
        %v1434 = vpow.pop %v1433
        %v1435 = vmul.f32 %v1423, 1.442695
        %v1436 = vpow.pop %v1435
        %v1437 = vmul.f32 %v1424, 1.442695
        %v1438 = vpow.pop %v1437
        %v1439 = vmul.f32 %v1425, 1.442695
        %v1440 = vpow.pop %v1439
        %v1441 = vmul.f32 %v1426, 1.442695
        %v1442 = vpow.pop %v1441
        %v1443 = vsub.f32 %v1428, 1.0
        %v1444 = vsub.f32 %v1430, 1.0
        %v1445 = vsub.f32 %v1432, 1.0
        %v1446 = vsub.f32 %v1434, 1.0
        %v1447 = vsub.f32 %v1436, 1.0
        %v1448 = vsub.f32 %v1438, 1.0
        %v1449 = vsub.f32 %v1440, 1.0
        %v1450 = vsub.f32 %v1442, 1.0
        %v1451 = vsel %vm1411, %v1403, %v1443
        %v1452 = vsel %vm1412, %v1404, %v1444
        %v1453 = vsel %vm1413, %v1405, %v1445
        %v1454 = vsel %vm1414, %v1406, %v1446
        %v1455 = vsel %vm1415, %v1407, %v1447
        %v1456 = vsel %vm1416, %v1408, %v1448
        %v1457 = vsel %vm1417, %v1409, %v1449
        %v1458 = vsel %vm1418, %v1410, %v1450
        %v1459 = vld [vmem:[%s5] sm:$0xff]
        %v1460 = vld [vmem:[%s5 + $0x8] sm:$0xff]
        %v1461 = vld [vmem:[%s5 + $0x10] sm:$0xff]
        %v1462 = vld [vmem:[%s5 + $0x18] sm:$0xff]
        %v1463 = vld [vmem:[%s5 + $0x20] sm:$0xff]
        %v1464 = vld [vmem:[%s5 + $0x28] sm:$0xff]
        %v1465 = vld [vmem:[%s5 + $0x30] sm:$0xff]
        %v1466 = vld [vmem:[%s5 + $0x38] sm:$0xff]
        %v1467 = vld [vmem:[%s5 + $0x40] sm:$0xff]
        %v1468 = vld [vmem:[%s5 + $0x48] sm:$0xff]
        %v1469 = vld [vmem:[%s5 + $0x50] sm:$0xff]
        %v1470 = vld [vmem:[%s5 + $0x58] sm:$0xff]
        %v1471 = vld [vmem:[%s5 + $0x60] sm:$0xff]
        %v1472 = vld [vmem:[%s5 + $0x68] sm:$0xff]
        %v1473 = vld [vmem:[%s5 + $0x70] sm:$0xff]
        %v1474 = vld [vmem:[%s5 + $0x78] sm:$0xff]
        %v1475 = vld [vmem:[%s5 + $0x80] sm:$0xff]
        %v1476 = vld [vmem:[%s5 + $0x88] sm:$0xff]
        %v1477 = vld [vmem:[%s5 + $0x90] sm:$0xff]
        %v1478 = vld [vmem:[%s5 + $0x98] sm:$0xff]
        %v1479 = vld [vmem:[%s5 + $0xa0] sm:$0xff]
        %v1480 = vld [vmem:[%s5 + $0xa8] sm:$0xff]
        %v1481 = vld [vmem:[%s5 + $0xb0] sm:$0xff]
        %v1482 = vld [vmem:[%s5 + $0xb8] sm:$0xff]
        %v1483 = vld [vmem:[%s5 + $0xc0] sm:$0xff]
        %v1484 = vld [vmem:[%s5 + $0xc8] sm:$0xff]
        %v1485 = vld [vmem:[%s5 + $0xd0] sm:$0xff]
        %v1486 = vld [vmem:[%s5 + $0xd8] sm:$0xff]
        %v1487 = vld [vmem:[%s5 + $0xe0] sm:$0xff]
        %v1488 = vld [vmem:[%s5 + $0xe8] sm:$0xff]
        %v1489 = vld [vmem:[%s5 + $0xf0] sm:$0xff]
        %v1490 = vld [vmem:[%s5 + $0xf8] sm:$0xff]
        %v1491 = vld [vmem:[%s5 + $0x100] sm:$0xff]
        %v1492 = vld [vmem:[%s5 + $0x108] sm:$0xff]
        %v1493 = vld [vmem:[%s5 + $0x110] sm:$0xff]
        %v1494 = vld [vmem:[%s5 + $0x118] sm:$0xff]
        %v1495 = vld [vmem:[%s5 + $0x120] sm:$0xff]
        %v1496 = vld [vmem:[%s5 + $0x128] sm:$0xff]
        %v1497 = vld [vmem:[%s5 + $0x130] sm:$0xff]
        %v1498 = vld [vmem:[%s5 + $0x138] sm:$0xff]
        %v1499 = vld [vmem:[%s5 + $0x140] sm:$0xff]
        %v1500 = vld [vmem:[%s5 + $0x148] sm:$0xff]
        %v1501 = vld [vmem:[%s5 + $0x150] sm:$0xff]
        %v1502 = vld [vmem:[%s5 + $0x158] sm:$0xff]
        %v1503 = vld [vmem:[%s5 + $0x160] sm:$0xff]
        %v1504 = vld [vmem:[%s5 + $0x168] sm:$0xff]
        %v1505 = vld [vmem:[%s5 + $0x170] sm:$0xff]
        %v1506 = vld [vmem:[%s5 + $0x178] sm:$0xff]
        %v1507 = vld [vmem:[%s5 + $0x180] sm:$0xff]
        %v1508 = vld [vmem:[%s5 + $0x188] sm:$0xff]
        %v1509 = vld [vmem:[%s5 + $0x190] sm:$0xff]
        %v1510 = vld [vmem:[%s5 + $0x198] sm:$0xff]
        %v1511 = vld [vmem:[%s5 + $0x1a0] sm:$0xff]
        %v1512 = vld [vmem:[%s5 + $0x1a8] sm:$0xff]
        %v1513 = vld [vmem:[%s5 + $0x1b0] sm:$0xff]
        %v1514 = vld [vmem:[%s5 + $0x1b8] sm:$0xff]
        %v1515 = vld [vmem:[%s5 + $0x1c0] sm:$0xff]
        %v1516 = vld [vmem:[%s5 + $0x1c8] sm:$0xff]
        %v1517 = vld [vmem:[%s5 + $0x1d0] sm:$0xff]
        %v1518 = vld [vmem:[%s5 + $0x1d8] sm:$0xff]
        %v1519 = vld [vmem:[%s5 + $0x1e0] sm:$0xff]
        %v1520 = vld [vmem:[%s5 + $0x1e8] sm:$0xff]
        %v1521 = vld [vmem:[%s5 + $0x1f0] sm:$0xff]
        %v1522 = vld [vmem:[%s5 + $0x1f8] sm:$0xff]
        %v1523 = vld [vmem:[%s5 + $0x200] sm:$0xff]
        %v1524 = vld [vmem:[%s5 + $0x208] sm:$0xff]
        %v1525 = vld [vmem:[%s5 + $0x210] sm:$0xff]
        %v1526 = vld [vmem:[%s5 + $0x218] sm:$0xff]
        %v1527 = vld [vmem:[%s5 + $0x220] sm:$0xff]
        %v1528 = vld [vmem:[%s5 + $0x228] sm:$0xff]
        %v1529 = vld [vmem:[%s5 + $0x230] sm:$0xff]
        %v1530 = vld [vmem:[%s5 + $0x238] sm:$0xff]
        %v1531 = vld [vmem:[%s5 + $0x240] sm:$0xff]
        %v1532 = vld [vmem:[%s5 + $0x248] sm:$0xff]
        %v1533 = vld [vmem:[%s5 + $0x250] sm:$0xff]
        %v1534 = vld [vmem:[%s5 + $0x258] sm:$0xff]
        %v1535 = vld [vmem:[%s5 + $0x260] sm:$0xff]
        %v1536 = vld [vmem:[%s5 + $0x268] sm:$0xff]
        %v1537 = vld [vmem:[%s5 + $0x270] sm:$0xff]
        %v1538 = vld [vmem:[%s5 + $0x278] sm:$0xff]
        %v1539 = vld [vmem:[%s5 + $0x280] sm:$0xff]
        %v1540 = vld [vmem:[%s5 + $0x288] sm:$0xff]
        %v1541 = vld [vmem:[%s5 + $0x290] sm:$0xff]
        %v1542 = vld [vmem:[%s5 + $0x298] sm:$0xff]
        %v1543 = vld [vmem:[%s5 + $0x2a0] sm:$0xff]
        %v1544 = vld [vmem:[%s5 + $0x2a8] sm:$0xff]
        %v1545 = vld [vmem:[%s5 + $0x2b0] sm:$0xff]
        %v1546 = vld [vmem:[%s5 + $0x2b8] sm:$0xff]
        %v1547 = vld [vmem:[%s5 + $0x2c0] sm:$0xff]
        %v1548 = vld [vmem:[%s5 + $0x2c8] sm:$0xff]
        %v1549 = vld [vmem:[%s5 + $0x2d0] sm:$0xff]
        %v1550 = vld [vmem:[%s5 + $0x2d8] sm:$0xff]
        %v1551 = vld [vmem:[%s5 + $0x2e0] sm:$0xff]
        %v1552 = vld [vmem:[%s5 + $0x2e8] sm:$0xff]
        %v1553 = vld [vmem:[%s5 + $0x2f0] sm:$0xff]
        %v1554 = vld [vmem:[%s5 + $0x2f8] sm:$0xff]
        %v1555 = vld [vmem:[%s5 + $0x300] sm:$0xff]
        %v1556 = vld [vmem:[%s5 + $0x308] sm:$0xff]
        %v1557 = vld [vmem:[%s5 + $0x310] sm:$0xff]
        %v1558 = vld [vmem:[%s5 + $0x318] sm:$0xff]
        %v1559 = vld [vmem:[%s5 + $0x320] sm:$0xff]
        %v1560 = vld [vmem:[%s5 + $0x328] sm:$0xff]
        %v1561 = vld [vmem:[%s5 + $0x330] sm:$0xff]
        %v1562 = vld [vmem:[%s5 + $0x338] sm:$0xff]
        %v1563 = vld [vmem:[%s5 + $0x340] sm:$0xff]
        %v1564 = vld [vmem:[%s5 + $0x348] sm:$0xff]
        %v1565 = vld [vmem:[%s5 + $0x350] sm:$0xff]
        %v1566 = vld [vmem:[%s5 + $0x358] sm:$0xff]
        %v1567 = vld [vmem:[%s5 + $0x360] sm:$0xff]
        %v1568 = vld [vmem:[%s5 + $0x368] sm:$0xff]
        %v1569 = vld [vmem:[%s5 + $0x370] sm:$0xff]
        %v1570 = vld [vmem:[%s5 + $0x378] sm:$0xff]
        %v1571 = vld [vmem:[%s5 + $0x380] sm:$0xff]
        %v1572 = vld [vmem:[%s5 + $0x388] sm:$0xff]
        %v1573 = vld [vmem:[%s5 + $0x390] sm:$0xff]
        %v1574 = vld [vmem:[%s5 + $0x398] sm:$0xff]
        %v1575 = vld [vmem:[%s5 + $0x3a0] sm:$0xff]
        %v1576 = vld [vmem:[%s5 + $0x3a8] sm:$0xff]
        %v1577 = vld [vmem:[%s5 + $0x3b0] sm:$0xff]
        %v1578 = vld [vmem:[%s5 + $0x3b8] sm:$0xff]
        %v1579 = vld [vmem:[%s5 + $0x3c0] sm:$0xff]
        %v1580 = vld [vmem:[%s5 + $0x3c8] sm:$0xff]
        %v1581 = vld [vmem:[%s5 + $0x3d0] sm:$0xff]
        %v1582 = vld [vmem:[%s5 + $0x3d8] sm:$0xff]
        %v1583 = vld [vmem:[%s5 + $0x3e0] sm:$0xff]
        %v1584 = vld [vmem:[%s5 + $0x3e8] sm:$0xff]
        %v1585 = vld [vmem:[%s5 + $0x3f0] sm:$0xff]
        %v1586 = vld [vmem:[%s5 + $0x3f8] sm:$0xff]
        %v1587 = vld [vmem:[%s5 + $0x400] sm:$0xff]
        %v1588 = vld [vmem:[%s5 + $0x408] sm:$0xff]
        %v1589 = vld [vmem:[%s5 + $0x410] sm:$0xff]
        %v1590 = vld [vmem:[%s5 + $0x418] sm:$0xff]
        %v1591 = vld [vmem:[%s5 + $0x420] sm:$0xff]
        %v1592 = vld [vmem:[%s5 + $0x428] sm:$0xff]
        %v1593 = vld [vmem:[%s5 + $0x430] sm:$0xff]
        %v1594 = vld [vmem:[%s5 + $0x438] sm:$0xff]
        %v1595 = vld [vmem:[%s5 + $0x440] sm:$0xff]
        %v1596 = vld [vmem:[%s5 + $0x448] sm:$0xff]
        %v1597 = vld [vmem:[%s5 + $0x450] sm:$0xff]
        %v1598 = vld [vmem:[%s5 + $0x458] sm:$0xff]
        %v1599 = vld [vmem:[%s5 + $0x460] sm:$0xff]
        %v1600 = vld [vmem:[%s5 + $0x468] sm:$0xff]
        %v1601 = vld [vmem:[%s5 + $0x470] sm:$0xff]
        %v1602 = vld [vmem:[%s5 + $0x478] sm:$0xff]
        %v1603 = vld [vmem:[%s5 + $0x480] sm:$0xff]
        %v1604 = vld [vmem:[%s5 + $0x488] sm:$0xff]
        %v1605 = vld [vmem:[%s5 + $0x490] sm:$0xff]
        %v1606 = vld [vmem:[%s5 + $0x498] sm:$0xff]
        %v1607 = vld [vmem:[%s5 + $0x4a0] sm:$0xff]
        %v1608 = vld [vmem:[%s5 + $0x4a8] sm:$0xff]
        %v1609 = vld [vmem:[%s5 + $0x4b0] sm:$0xff]
        %v1610 = vld [vmem:[%s5 + $0x4b8] sm:$0xff]
        %v1611 = vld [vmem:[%s5 + $0x4c0] sm:$0xff]
        %v1612 = vld [vmem:[%s5 + $0x4c8] sm:$0xff]
        %v1613 = vld [vmem:[%s5 + $0x4d0] sm:$0xff]
        %v1614 = vld [vmem:[%s5 + $0x4d8] sm:$0xff]
        %v1615 = vld [vmem:[%s5 + $0x4e0] sm:$0xff]
        %v1616 = vld [vmem:[%s5 + $0x4e8] sm:$0xff]
        %v1617 = vld [vmem:[%s5 + $0x4f0] sm:$0xff]
        %v1618 = vld [vmem:[%s5 + $0x4f8] sm:$0xff]
        %v1619 = vld [vmem:[%s5 + $0x500] sm:$0xff]
        %v1620 = vld [vmem:[%s5 + $0x508] sm:$0xff]
        %v1621 = vld [vmem:[%s5 + $0x510] sm:$0xff]
        %v1622 = vld [vmem:[%s5 + $0x518] sm:$0xff]
        %v1623 = vld [vmem:[%s5 + $0x520] sm:$0xff]
        %v1624 = vld [vmem:[%s5 + $0x528] sm:$0xff]
        %v1625 = vld [vmem:[%s5 + $0x530] sm:$0xff]
        %v1626 = vld [vmem:[%s5 + $0x538] sm:$0xff]
        %v1627 = vld [vmem:[%s5 + $0x540] sm:$0xff]
        %v1628 = vld [vmem:[%s5 + $0x548] sm:$0xff]
        %v1629 = vld [vmem:[%s5 + $0x550] sm:$0xff]
        %v1630 = vld [vmem:[%s5 + $0x558] sm:$0xff]
        %v1631 = vld [vmem:[%s5 + $0x560] sm:$0xff]
        %v1632 = vld [vmem:[%s5 + $0x568] sm:$0xff]
        %v1633 = vld [vmem:[%s5 + $0x570] sm:$0xff]
        %v1634 = vld [vmem:[%s5 + $0x578] sm:$0xff]
        %v1635 = vld [vmem:[%s5 + $0x580] sm:$0xff]
        %v1636 = vld [vmem:[%s5 + $0x588] sm:$0xff]
        %v1637 = vld [vmem:[%s5 + $0x590] sm:$0xff]
        %v1638 = vld [vmem:[%s5 + $0x598] sm:$0xff]
        %v1639 = vld [vmem:[%s5 + $0x5a0] sm:$0xff]
        %v1640 = vld [vmem:[%s5 + $0x5a8] sm:$0xff]
        %v1641 = vld [vmem:[%s5 + $0x5b0] sm:$0xff]
        %v1642 = vld [vmem:[%s5 + $0x5b8] sm:$0xff]
        %v1643 = vld [vmem:[%s5 + $0x5c0] sm:$0xff]
        %v1644 = vld [vmem:[%s5 + $0x5c8] sm:$0xff]
        %v1645 = vld [vmem:[%s5 + $0x5d0] sm:$0xff]
        %v1646 = vld [vmem:[%s5 + $0x5d8] sm:$0xff]
        %v1647 = vld [vmem:[%s5 + $0x5e0] sm:$0xff]
        %v1648 = vld [vmem:[%s5 + $0x5e8] sm:$0xff]
        %v1649 = vld [vmem:[%s5 + $0x5f0] sm:$0xff]
        %v1650 = vld [vmem:[%s5 + $0x5f8] sm:$0xff]
        %v1651 = vld [vmem:[%s5 + $0x600] sm:$0xff]
        %v1652 = vld [vmem:[%s5 + $0x608] sm:$0xff]
        %v1653 = vld [vmem:[%s5 + $0x610] sm:$0xff]
        %v1654 = vld [vmem:[%s5 + $0x618] sm:$0xff]
        %v1655 = vld [vmem:[%s5 + $0x620] sm:$0xff]
        %v1656 = vld [vmem:[%s5 + $0x628] sm:$0xff]
        %v1657 = vld [vmem:[%s5 + $0x630] sm:$0xff]
        %v1658 = vld [vmem:[%s5 + $0x638] sm:$0xff]
        %v1659 = vld [vmem:[%s5 + $0x640] sm:$0xff]
        %v1660 = vld [vmem:[%s5 + $0x648] sm:$0xff]
        %v1661 = vld [vmem:[%s5 + $0x650] sm:$0xff]
        %v1662 = vld [vmem:[%s5 + $0x658] sm:$0xff]
        %v1663 = vld [vmem:[%s5 + $0x660] sm:$0xff]
        %v1664 = vld [vmem:[%s5 + $0x668] sm:$0xff]
        %v1665 = vld [vmem:[%s5 + $0x670] sm:$0xff]
        %v1666 = vld [vmem:[%s5 + $0x678] sm:$0xff]
        %v1667 = vld [vmem:[%s5 + $0x680] sm:$0xff]
        %v1668 = vld [vmem:[%s5 + $0x688] sm:$0xff]
        %v1669 = vld [vmem:[%s5 + $0x690] sm:$0xff]
        %v1670 = vld [vmem:[%s5 + $0x698] sm:$0xff]
        %v1671 = vld [vmem:[%s5 + $0x6a0] sm:$0xff]
        %v1672 = vld [vmem:[%s5 + $0x6a8] sm:$0xff]
        %v1673 = vld [vmem:[%s5 + $0x6b0] sm:$0xff]
        %v1674 = vld [vmem:[%s5 + $0x6b8] sm:$0xff]
        %v1675 = vld [vmem:[%s5 + $0x6c0] sm:$0xff]
        %v1676 = vld [vmem:[%s5 + $0x6c8] sm:$0xff]
        %v1677 = vld [vmem:[%s5 + $0x6d0] sm:$0xff]
        %v1678 = vld [vmem:[%s5 + $0x6d8] sm:$0xff]
        %v1679 = vld [vmem:[%s5 + $0x6e0] sm:$0xff]
        %v1680 = vld [vmem:[%s5 + $0x6e8] sm:$0xff]
        %v1681 = vld [vmem:[%s5 + $0x6f0] sm:$0xff]
        %v1682 = vld [vmem:[%s5 + $0x6f8] sm:$0xff]
        %v1683 = vld [vmem:[%s5 + $0x700] sm:$0xff]
        %v1684 = vld [vmem:[%s5 + $0x708] sm:$0xff]
        %v1685 = vld [vmem:[%s5 + $0x710] sm:$0xff]
        %v1686 = vld [vmem:[%s5 + $0x718] sm:$0xff]
        %v1687 = vld [vmem:[%s5 + $0x720] sm:$0xff]
        %v1688 = vld [vmem:[%s5 + $0x728] sm:$0xff]
        %v1689 = vld [vmem:[%s5 + $0x730] sm:$0xff]
        %v1690 = vld [vmem:[%s5 + $0x738] sm:$0xff]
        %v1691 = vld [vmem:[%s5 + $0x740] sm:$0xff]
        %v1692 = vld [vmem:[%s5 + $0x748] sm:$0xff]
        %v1693 = vld [vmem:[%s5 + $0x750] sm:$0xff]
        %v1694 = vld [vmem:[%s5 + $0x758] sm:$0xff]
        %v1695 = vld [vmem:[%s5 + $0x760] sm:$0xff]
        %v1696 = vld [vmem:[%s5 + $0x768] sm:$0xff]
        %v1697 = vld [vmem:[%s5 + $0x770] sm:$0xff]
        %v1698 = vld [vmem:[%s5 + $0x778] sm:$0xff]
        %v1699 = vld [vmem:[%s5 + $0x780] sm:$0xff]
        %v1700 = vld [vmem:[%s5 + $0x788] sm:$0xff]
        %v1701 = vld [vmem:[%s5 + $0x790] sm:$0xff]
        %v1702 = vld [vmem:[%s5 + $0x798] sm:$0xff]
        %v1703 = vld [vmem:[%s5 + $0x7a0] sm:$0xff]
        %v1704 = vld [vmem:[%s5 + $0x7a8] sm:$0xff]
        %v1705 = vld [vmem:[%s5 + $0x7b0] sm:$0xff]
        %v1706 = vld [vmem:[%s5 + $0x7b8] sm:$0xff]
        %v1707 = vld [vmem:[%s5 + $0x7c0] sm:$0xff]
        %v1708 = vld [vmem:[%s5 + $0x7c8] sm:$0xff]
        %v1709 = vld [vmem:[%s5 + $0x7d0] sm:$0xff]
        %v1710 = vld [vmem:[%s5 + $0x7d8] sm:$0xff]
        %v1711 = vld [vmem:[%s5 + $0x7e0] sm:$0xff]
        %v1712 = vld [vmem:[%s5 + $0x7e8] sm:$0xff]
        %v1713 = vld [vmem:[%s5 + $0x7f0] sm:$0xff]
        %v1714 = vld [vmem:[%s5 + $0x7f8] sm:$0xff]
        %v1715 = vld [vmem:[%s5 + $0x800] sm:$0xff]
        %v1716 = vld [vmem:[%s5 + $0x808] sm:$0xff]
        %v1717 = vld [vmem:[%s5 + $0x810] sm:$0xff]
        %v1718 = vld [vmem:[%s5 + $0x818] sm:$0xff]
        %v1719 = vld [vmem:[%s5 + $0x820] sm:$0xff]
        %v1720 = vld [vmem:[%s5 + $0x828] sm:$0xff]
        %v1721 = vld [vmem:[%s5 + $0x830] sm:$0xff]
        %v1722 = vld [vmem:[%s5 + $0x838] sm:$0xff]
        %v1723 = vld [vmem:[%s5 + $0x840] sm:$0xff]
        %v1724 = vld [vmem:[%s5 + $0x848] sm:$0xff]
        %v1725 = vld [vmem:[%s5 + $0x850] sm:$0xff]
        %v1726 = vld [vmem:[%s5 + $0x858] sm:$0xff]
        %v1727 = vld [vmem:[%s5 + $0x860] sm:$0xff]
        %v1728 = vld [vmem:[%s5 + $0x868] sm:$0xff]
        %v1729 = vld [vmem:[%s5 + $0x870] sm:$0xff]
        %v1730 = vld [vmem:[%s5 + $0x878] sm:$0xff]
        %v1731 = vld [vmem:[%s5 + $0x880] sm:$0xff]
        %v1732 = vld [vmem:[%s5 + $0x888] sm:$0xff]
        %v1733 = vld [vmem:[%s5 + $0x890] sm:$0xff]
        %v1734 = vld [vmem:[%s5 + $0x898] sm:$0xff]
        %v1735 = vld [vmem:[%s5 + $0x8a0] sm:$0xff]
        %v1736 = vld [vmem:[%s5 + $0x8a8] sm:$0xff]
        %v1737 = vld [vmem:[%s5 + $0x8b0] sm:$0xff]
        %v1738 = vld [vmem:[%s5 + $0x8b8] sm:$0xff]
        %v1739 = vld [vmem:[%s5 + $0x8c0] sm:$0xff]
        %v1740 = vld [vmem:[%s5 + $0x8c8] sm:$0xff]
        %v1741 = vld [vmem:[%s5 + $0x8d0] sm:$0xff]
        %v1742 = vld [vmem:[%s5 + $0x8d8] sm:$0xff]
        %v1743 = vld [vmem:[%s5 + $0x8e0] sm:$0xff]
        %v1744 = vld [vmem:[%s5 + $0x8e8] sm:$0xff]
        %v1745 = vld [vmem:[%s5 + $0x8f0] sm:$0xff]
        %v1746 = vld [vmem:[%s5 + $0x8f8] sm:$0xff]
        %v1747 = vld [vmem:[%s5 + $0x900] sm:$0xff]
        %v1748 = vld [vmem:[%s5 + $0x908] sm:$0xff]
        %v1749 = vld [vmem:[%s5 + $0x910] sm:$0xff]
        %v1750 = vld [vmem:[%s5 + $0x918] sm:$0xff]
        %v1751 = vld [vmem:[%s5 + $0x920] sm:$0xff]
        %v1752 = vld [vmem:[%s5 + $0x928] sm:$0xff]
        %v1753 = vld [vmem:[%s5 + $0x930] sm:$0xff]
        %v1754 = vld [vmem:[%s5 + $0x938] sm:$0xff]
        %v1755 = vld [vmem:[%s5 + $0x940] sm:$0xff]
        %v1756 = vld [vmem:[%s5 + $0x948] sm:$0xff]
        %v1757 = vld [vmem:[%s5 + $0x950] sm:$0xff]
        %v1758 = vld [vmem:[%s5 + $0x958] sm:$0xff]
        %v1759 = vld [vmem:[%s5 + $0x960] sm:$0xff]
        %v1760 = vld [vmem:[%s5 + $0x968] sm:$0xff]
        %v1761 = vld [vmem:[%s5 + $0x970] sm:$0xff]
        %v1762 = vld [vmem:[%s5 + $0x978] sm:$0xff]
        %v1763 = vld [vmem:[%s5 + $0x980] sm:$0xff]
        %v1764 = vld [vmem:[%s5 + $0x988] sm:$0xff]
        %v1765 = vld [vmem:[%s5 + $0x990] sm:$0xff]
        %v1766 = vld [vmem:[%s5 + $0x998] sm:$0xff]
        %v1767 = vld [vmem:[%s5 + $0x9a0] sm:$0xff]
        %v1768 = vld [vmem:[%s5 + $0x9a8] sm:$0xff]
        %v1769 = vld [vmem:[%s5 + $0x9b0] sm:$0xff]
        %v1770 = vld [vmem:[%s5 + $0x9b8] sm:$0xff]
        %v1771 = vld [vmem:[%s5 + $0x9c0] sm:$0xff]
        %v1772 = vld [vmem:[%s5 + $0x9c8] sm:$0xff]
        %v1773 = vld [vmem:[%s5 + $0x9d0] sm:$0xff]
        %v1774 = vld [vmem:[%s5 + $0x9d8] sm:$0xff]
        %v1775 = vld [vmem:[%s5 + $0x9e0] sm:$0xff]
        %v1776 = vld [vmem:[%s5 + $0x9e8] sm:$0xff]
        %v1777 = vld [vmem:[%s5 + $0x9f0] sm:$0xff]
        %v1778 = vld [vmem:[%s5 + $0x9f8] sm:$0xff]
        %v1779 = vld [vmem:[%s5 + $0xa00] sm:$0xff]
        %v1780 = vld [vmem:[%s5 + $0xa08] sm:$0xff]
        %v1781 = vld [vmem:[%s5 + $0xa10] sm:$0xff]
        %v1782 = vld [vmem:[%s5 + $0xa18] sm:$0xff]
        %v1783 = vld [vmem:[%s5 + $0xa20] sm:$0xff]
        %v1784 = vld [vmem:[%s5 + $0xa28] sm:$0xff]
        %v1785 = vld [vmem:[%s5 + $0xa30] sm:$0xff]
        %v1786 = vld [vmem:[%s5 + $0xa38] sm:$0xff]
        %v1787 = vld [vmem:[%s5 + $0xa40] sm:$0xff]
        %v1788 = vld [vmem:[%s5 + $0xa48] sm:$0xff]
        %v1789 = vld [vmem:[%s5 + $0xa50] sm:$0xff]
        %v1790 = vld [vmem:[%s5 + $0xa58] sm:$0xff]
        %v1791 = vld [vmem:[%s5 + $0xa60] sm:$0xff]
        %v1792 = vld [vmem:[%s5 + $0xa68] sm:$0xff]
        %v1793 = vld [vmem:[%s5 + $0xa70] sm:$0xff]
        %v1794 = vld [vmem:[%s5 + $0xa78] sm:$0xff]
        %v1795 = vld [vmem:[%s5 + $0xa80] sm:$0xff]
        %v1796 = vld [vmem:[%s5 + $0xa88] sm:$0xff]
        %v1797 = vld [vmem:[%s5 + $0xa90] sm:$0xff]
        %v1798 = vld [vmem:[%s5 + $0xa98] sm:$0xff]
        %v1799 = vld [vmem:[%s5 + $0xaa0] sm:$0xff]
        %v1800 = vld [vmem:[%s5 + $0xaa8] sm:$0xff]
        %v1801 = vld [vmem:[%s5 + $0xab0] sm:$0xff]
        %v1802 = vld [vmem:[%s5 + $0xab8] sm:$0xff]
        %v1803 = vld [vmem:[%s5 + $0xac0] sm:$0xff]
        %v1804 = vld [vmem:[%s5 + $0xac8] sm:$0xff]
        %v1805 = vld [vmem:[%s5 + $0xad0] sm:$0xff]
        %v1806 = vld [vmem:[%s5 + $0xad8] sm:$0xff]
        %v1807 = vld [vmem:[%s5 + $0xae0] sm:$0xff]
        %v1808 = vld [vmem:[%s5 + $0xae8] sm:$0xff]
        %v1809 = vld [vmem:[%s5 + $0xaf0] sm:$0xff]
        %v1810 = vld [vmem:[%s5 + $0xaf8] sm:$0xff]
        %v1811 = vld [vmem:[%s5 + $0xb00] sm:$0xff]
        %v1812 = vld [vmem:[%s5 + $0xb08] sm:$0xff]
        %v1813 = vld [vmem:[%s5 + $0xb10] sm:$0xff]
        %v1814 = vld [vmem:[%s5 + $0xb18] sm:$0xff]
        %v1815 = vld [vmem:[%s5 + $0xb20] sm:$0xff]
        %v1816 = vld [vmem:[%s5 + $0xb28] sm:$0xff]
        %v1817 = vld [vmem:[%s5 + $0xb30] sm:$0xff]
        %v1818 = vld [vmem:[%s5 + $0xb38] sm:$0xff]
        %v1819 = vld [vmem:[%s5 + $0xb40] sm:$0xff]
        %v1820 = vld [vmem:[%s5 + $0xb48] sm:$0xff]
        %v1821 = vld [vmem:[%s5 + $0xb50] sm:$0xff]
        %v1822 = vld [vmem:[%s5 + $0xb58] sm:$0xff]
        %v1823 = vld [vmem:[%s5 + $0xb60] sm:$0xff]
        %v1824 = vld [vmem:[%s5 + $0xb68] sm:$0xff]
        %v1825 = vld [vmem:[%s5 + $0xb70] sm:$0xff]
        %v1826 = vld [vmem:[%s5 + $0xb78] sm:$0xff]
        %v1827 = vld [vmem:[%s5 + $0xb80] sm:$0xff]
        %v1828 = vld [vmem:[%s5 + $0xb88] sm:$0xff]
        %v1829 = vld [vmem:[%s5 + $0xb90] sm:$0xff]
        %v1830 = vld [vmem:[%s5 + $0xb98] sm:$0xff]
        %v1831 = vld [vmem:[%s5 + $0xba0] sm:$0xff]
        %v1832 = vld [vmem:[%s5 + $0xba8] sm:$0xff]
        %v1833 = vld [vmem:[%s5 + $0xbb0] sm:$0xff]
        %v1834 = vld [vmem:[%s5 + $0xbb8] sm:$0xff]
        %v1835 = vld [vmem:[%s5 + $0xbc0] sm:$0xff]
        %v1836 = vld [vmem:[%s5 + $0xbc8] sm:$0xff]
        %v1837 = vld [vmem:[%s5 + $0xbd0] sm:$0xff]
        %v1838 = vld [vmem:[%s5 + $0xbd8] sm:$0xff]
        %v1839 = vld [vmem:[%s5 + $0xbe0] sm:$0xff]
        %v1840 = vld [vmem:[%s5 + $0xbe8] sm:$0xff]
        %v1841 = vld [vmem:[%s5 + $0xbf0] sm:$0xff]
        %v1842 = vld [vmem:[%s5 + $0xbf8] sm:$0xff]
        %v1843 = vld [vmem:[%s5 + $0xc00] sm:$0xff]
        %v1844 = vld [vmem:[%s5 + $0xc08] sm:$0xff]
        %v1845 = vld [vmem:[%s5 + $0xc10] sm:$0xff]
        %v1846 = vld [vmem:[%s5 + $0xc18] sm:$0xff]
        %v1847 = vld [vmem:[%s5 + $0xc20] sm:$0xff]
        %v1848 = vld [vmem:[%s5 + $0xc28] sm:$0xff]
        %v1849 = vld [vmem:[%s5 + $0xc30] sm:$0xff]
        %v1850 = vld [vmem:[%s5 + $0xc38] sm:$0xff]
        %v1851 = vld [vmem:[%s5 + $0xc40] sm:$0xff]
        %v1852 = vld [vmem:[%s5 + $0xc48] sm:$0xff]
        %v1853 = vld [vmem:[%s5 + $0xc50] sm:$0xff]
        %v1854 = vld [vmem:[%s5 + $0xc58] sm:$0xff]
        %v1855 = vld [vmem:[%s5 + $0xc60] sm:$0xff]
        %v1856 = vld [vmem:[%s5 + $0xc68] sm:$0xff]
        %v1857 = vld [vmem:[%s5 + $0xc70] sm:$0xff]
        %v1858 = vld [vmem:[%s5 + $0xc78] sm:$0xff]
        %v1859 = vld [vmem:[%s5 + $0xc80] sm:$0xff]
        %v1860 = vld [vmem:[%s5 + $0xc88] sm:$0xff]
        %v1861 = vld [vmem:[%s5 + $0xc90] sm:$0xff]
        %v1862 = vld [vmem:[%s5 + $0xc98] sm:$0xff]
        %v1863 = vld [vmem:[%s5 + $0xca0] sm:$0xff]
        %v1864 = vld [vmem:[%s5 + $0xca8] sm:$0xff]
        %v1865 = vld [vmem:[%s5 + $0xcb0] sm:$0xff]
        %v1866 = vld [vmem:[%s5 + $0xcb8] sm:$0xff]
        %v1867 = vld [vmem:[%s5 + $0xcc0] sm:$0xff]
        %v1868 = vld [vmem:[%s5 + $0xcc8] sm:$0xff]
        %v1869 = vld [vmem:[%s5 + $0xcd0] sm:$0xff]
        %v1870 = vld [vmem:[%s5 + $0xcd8] sm:$0xff]
        %v1871 = vld [vmem:[%s5 + $0xce0] sm:$0xff]
        %v1872 = vld [vmem:[%s5 + $0xce8] sm:$0xff]
        %v1873 = vld [vmem:[%s5 + $0xcf0] sm:$0xff]
        %v1874 = vld [vmem:[%s5 + $0xcf8] sm:$0xff]
        %v1875 = vld [vmem:[%s5 + $0xd00] sm:$0xff]
        %v1876 = vld [vmem:[%s5 + $0xd08] sm:$0xff]
        %v1877 = vld [vmem:[%s5 + $0xd10] sm:$0xff]
        %v1878 = vld [vmem:[%s5 + $0xd18] sm:$0xff]
        %v1879 = vld [vmem:[%s5 + $0xd20] sm:$0xff]
        %v1880 = vld [vmem:[%s5 + $0xd28] sm:$0xff]
        %v1881 = vld [vmem:[%s5 + $0xd30] sm:$0xff]
        %v1882 = vld [vmem:[%s5 + $0xd38] sm:$0xff]
        %v1883 = vld [vmem:[%s5 + $0xd40] sm:$0xff]
        %v1884 = vld [vmem:[%s5 + $0xd48] sm:$0xff]
        %v1885 = vld [vmem:[%s5 + $0xd50] sm:$0xff]
        %v1886 = vld [vmem:[%s5 + $0xd58] sm:$0xff]
        %v1887 = vld [vmem:[%s5 + $0xd60] sm:$0xff]
        %v1888 = vld [vmem:[%s5 + $0xd68] sm:$0xff]
        %v1889 = vld [vmem:[%s5 + $0xd70] sm:$0xff]
        %v1890 = vld [vmem:[%s5 + $0xd78] sm:$0xff]
        %v1891 = vld [vmem:[%s5 + $0xd80] sm:$0xff]
        %v1892 = vld [vmem:[%s5 + $0xd88] sm:$0xff]
        %v1893 = vld [vmem:[%s5 + $0xd90] sm:$0xff]
        %v1894 = vld [vmem:[%s5 + $0xd98] sm:$0xff]
        %v1895 = vld [vmem:[%s5 + $0xda0] sm:$0xff]
        %v1896 = vld [vmem:[%s5 + $0xda8] sm:$0xff]
        %v1897 = vld [vmem:[%s5 + $0xdb0] sm:$0xff]
        %v1898 = vld [vmem:[%s5 + $0xdb8] sm:$0xff]
        %v1899 = vld [vmem:[%s5 + $0xdc0] sm:$0xff]
        %v1900 = vld [vmem:[%s5 + $0xdc8] sm:$0xff]
        %v1901 = vld [vmem:[%s5 + $0xdd0] sm:$0xff]
        %v1902 = vld [vmem:[%s5 + $0xdd8] sm:$0xff]
        %v1903 = vld [vmem:[%s5 + $0xde0] sm:$0xff]
        %v1904 = vld [vmem:[%s5 + $0xde8] sm:$0xff]
        %v1905 = vld [vmem:[%s5 + $0xdf0] sm:$0xff]
        %v1906 = vld [vmem:[%s5 + $0xdf8] sm:$0xff]
        %v1907 = vld [vmem:[%s5 + $0xe00] sm:$0xff]
        %v1908 = vld [vmem:[%s5 + $0xe08] sm:$0xff]
        %v1909 = vld [vmem:[%s5 + $0xe10] sm:$0xff]
        %v1910 = vld [vmem:[%s5 + $0xe18] sm:$0xff]
        %v1911 = vld [vmem:[%s5 + $0xe20] sm:$0xff]
        %v1912 = vld [vmem:[%s5 + $0xe28] sm:$0xff]
        %v1913 = vld [vmem:[%s5 + $0xe30] sm:$0xff]
        %v1914 = vld [vmem:[%s5 + $0xe38] sm:$0xff]
        %v1915 = vld [vmem:[%s5 + $0xe40] sm:$0xff]
        %v1916 = vld [vmem:[%s5 + $0xe48] sm:$0xff]
        %v1917 = vld [vmem:[%s5 + $0xe50] sm:$0xff]
        %v1918 = vld [vmem:[%s5 + $0xe58] sm:$0xff]
        %v1919 = vld [vmem:[%s5 + $0xe60] sm:$0xff]
        %v1920 = vld [vmem:[%s5 + $0xe68] sm:$0xff]
        %v1921 = vld [vmem:[%s5 + $0xe70] sm:$0xff]
        %v1922 = vld [vmem:[%s5 + $0xe78] sm:$0xff]
        %v1923 = vld [vmem:[%s5 + $0xe80] sm:$0xff]
        %v1924 = vld [vmem:[%s5 + $0xe88] sm:$0xff]
        %v1925 = vld [vmem:[%s5 + $0xe90] sm:$0xff]
        %v1926 = vld [vmem:[%s5 + $0xe98] sm:$0xff]
        %v1927 = vld [vmem:[%s5 + $0xea0] sm:$0xff]
        %v1928 = vld [vmem:[%s5 + $0xea8] sm:$0xff]
        %v1929 = vld [vmem:[%s5 + $0xeb0] sm:$0xff]
        %v1930 = vld [vmem:[%s5 + $0xeb8] sm:$0xff]
        %v1931 = vld [vmem:[%s5 + $0xec0] sm:$0xff]
        %v1932 = vld [vmem:[%s5 + $0xec8] sm:$0xff]
        %v1933 = vld [vmem:[%s5 + $0xed0] sm:$0xff]
        %v1934 = vld [vmem:[%s5 + $0xed8] sm:$0xff]
        %v1935 = vld [vmem:[%s5 + $0xee0] sm:$0xff]
        %v1936 = vld [vmem:[%s5 + $0xee8] sm:$0xff]
        %v1937 = vld [vmem:[%s5 + $0xef0] sm:$0xff]
        %v1938 = vld [vmem:[%s5 + $0xef8] sm:$0xff]
        %v1939 = vld [vmem:[%s5 + $0xf00] sm:$0xff]
        %v1940 = vld [vmem:[%s5 + $0xf08] sm:$0xff]
        %v1941 = vld [vmem:[%s5 + $0xf10] sm:$0xff]
        %v1942 = vld [vmem:[%s5 + $0xf18] sm:$0xff]
        %v1943 = vld [vmem:[%s5 + $0xf20] sm:$0xff]
        %v1944 = vld [vmem:[%s5 + $0xf28] sm:$0xff]
        %v1945 = vld [vmem:[%s5 + $0xf30] sm:$0xff]
        %v1946 = vld [vmem:[%s5 + $0xf38] sm:$0xff]
        %v1947 = vld [vmem:[%s5 + $0xf40] sm:$0xff]
        %v1948 = vld [vmem:[%s5 + $0xf48] sm:$0xff]
        %v1949 = vld [vmem:[%s5 + $0xf50] sm:$0xff]
        %v1950 = vld [vmem:[%s5 + $0xf58] sm:$0xff]
        %v1951 = vld [vmem:[%s5 + $0xf60] sm:$0xff]
        %v1952 = vld [vmem:[%s5 + $0xf68] sm:$0xff]
        %v1953 = vld [vmem:[%s5 + $0xf70] sm:$0xff]
        %v1954 = vld [vmem:[%s5 + $0xf78] sm:$0xff]
        %v1955 = vld [vmem:[%s5 + $0xf80] sm:$0xff]
        %v1956 = vld [vmem:[%s5 + $0xf88] sm:$0xff]
        %v1957 = vld [vmem:[%s5 + $0xf90] sm:$0xff]
        %v1958 = vld [vmem:[%s5 + $0xf98] sm:$0xff]
        %v1959 = vld [vmem:[%s5 + $0xfa0] sm:$0xff]
        %v1960 = vld [vmem:[%s5 + $0xfa8] sm:$0xff]
        %v1961 = vld [vmem:[%s5 + $0xfb0] sm:$0xff]
        %v1962 = vld [vmem:[%s5 + $0xfb8] sm:$0xff]
        %v1963 = vld [vmem:[%s5 + $0xfc0] sm:$0xff]
        %v1964 = vld [vmem:[%s5 + $0xfc8] sm:$0xff]
        %v1965 = vld [vmem:[%s5 + $0xfd0] sm:$0xff]
        %v1966 = vld [vmem:[%s5 + $0xfd8] sm:$0xff]
        %v1967 = vld [vmem:[%s5 + $0xfe0] sm:$0xff]
        %v1968 = vld [vmem:[%s5 + $0xfe8] sm:$0xff]
        %v1969 = vld [vmem:[%s5 + $0xff0] sm:$0xff]
        %v1970 = vld [vmem:[%s5 + $0xff8] sm:$0xff]
        %v1971 = vld [vmem:[%s5 + $0x1000] sm:$0xff]
        %v1972 = vld [vmem:[%s5 + $0x1008] sm:$0xff]
        %v1973 = vld [vmem:[%s5 + $0x1010] sm:$0xff]
        %v1974 = vld [vmem:[%s5 + $0x1018] sm:$0xff]
        %v1975 = vld [vmem:[%s5 + $0x1020] sm:$0xff]
        %v1976 = vld [vmem:[%s5 + $0x1028] sm:$0xff]
        %v1977 = vld [vmem:[%s5 + $0x1030] sm:$0xff]
        %v1978 = vld [vmem:[%s5 + $0x1038] sm:$0xff]
        %v1979 = vld [vmem:[%s5 + $0x1040] sm:$0xff]
        %v1980 = vld [vmem:[%s5 + $0x1048] sm:$0xff]
        %v1981 = vld [vmem:[%s5 + $0x1050] sm:$0xff]
        %v1982 = vld [vmem:[%s5 + $0x1058] sm:$0xff]
        %v1983 = vld [vmem:[%s5 + $0x1060] sm:$0xff]
        %v1984 = vld [vmem:[%s5 + $0x1068] sm:$0xff]
        %v1985 = vld [vmem:[%s5 + $0x1070] sm:$0xff]
        %v1986 = vld [vmem:[%s5 + $0x1078] sm:$0xff]
        %v1987 = vld [vmem:[%s5 + $0x1080] sm:$0xff]
        %v1988 = vld [vmem:[%s5 + $0x1088] sm:$0xff]
        %v1989 = vld [vmem:[%s5 + $0x1090] sm:$0xff]
        %v1990 = vld [vmem:[%s5 + $0x1098] sm:$0xff]
        %v1991 = vld [vmem:[%s5 + $0x10a0] sm:$0xff]
        %v1992 = vld [vmem:[%s5 + $0x10a8] sm:$0xff]
        %v1993 = vld [vmem:[%s5 + $0x10b0] sm:$0xff]
        %v1994 = vld [vmem:[%s5 + $0x10b8] sm:$0xff]
        %v1995 = vld [vmem:[%s5 + $0x10c0] sm:$0xff]
        %v1996 = vld [vmem:[%s5 + $0x10c8] sm:$0xff]
        %v1997 = vld [vmem:[%s5 + $0x10d0] sm:$0xff]
        %v1998 = vld [vmem:[%s5 + $0x10d8] sm:$0xff]
        %v1999 = vld [vmem:[%s5 + $0x10e0] sm:$0xff]
        %v2000 = vld [vmem:[%s5 + $0x10e8] sm:$0xff]
        %v2001 = vld [vmem:[%s5 + $0x10f0] sm:$0xff]
        %v2002 = vld [vmem:[%s5 + $0x10f8] sm:$0xff]
        %v2003 = vld [vmem:[%s5 + $0x1100] sm:$0xff]
        %v2004 = vld [vmem:[%s5 + $0x1108] sm:$0xff]
        %v2005 = vld [vmem:[%s5 + $0x1110] sm:$0xff]
        %v2006 = vld [vmem:[%s5 + $0x1118] sm:$0xff]
        %v2007 = vld [vmem:[%s5 + $0x1120] sm:$0xff]
        %v2008 = vld [vmem:[%s5 + $0x1128] sm:$0xff]
        %v2009 = vld [vmem:[%s5 + $0x1130] sm:$0xff]
        %v2010 = vld [vmem:[%s5 + $0x1138] sm:$0xff]
        %v2011 = vld [vmem:[%s5 + $0x1140] sm:$0xff]
        %v2012 = vld [vmem:[%s5 + $0x1148] sm:$0xff]
        %v2013 = vld [vmem:[%s5 + $0x1150] sm:$0xff]
        %v2014 = vld [vmem:[%s5 + $0x1158] sm:$0xff]
        %v2015 = vld [vmem:[%s5 + $0x1160] sm:$0xff]
        %v2016 = vld [vmem:[%s5 + $0x1168] sm:$0xff]
        %v2017 = vld [vmem:[%s5 + $0x1170] sm:$0xff]
        %v2018 = vld [vmem:[%s5 + $0x1178] sm:$0xff]
        %v2019 = vld [vmem:[%s5 + $0x1180] sm:$0xff]
        %v2020 = vld [vmem:[%s5 + $0x1188] sm:$0xff]
        %v2021 = vld [vmem:[%s5 + $0x1190] sm:$0xff]
        %v2022 = vld [vmem:[%s5 + $0x1198] sm:$0xff]
        %v2023 = vld [vmem:[%s5 + $0x11a0] sm:$0xff]
        %v2024 = vld [vmem:[%s5 + $0x11a8] sm:$0xff]
        %v2025 = vld [vmem:[%s5 + $0x11b0] sm:$0xff]
        %v2026 = vld [vmem:[%s5 + $0x11b8] sm:$0xff]
        %v2027 = vld [vmem:[%s5 + $0x11c0] sm:$0xff]
        %v2028 = vld [vmem:[%s5 + $0x11c8] sm:$0xff]
        %v2029 = vld [vmem:[%s5 + $0x11d0] sm:$0xff]
        %v2030 = vld [vmem:[%s5 + $0x11d8] sm:$0xff]
        %v2031 = vld [vmem:[%s5 + $0x11e0] sm:$0xff]
        %v2032 = vld [vmem:[%s5 + $0x11e8] sm:$0xff]
        %v2033 = vld [vmem:[%s5 + $0x11f0] sm:$0xff]
        %v2034 = vld [vmem:[%s5 + $0x11f8] sm:$0xff]
        %v2035 = vld [vmem:[%s5 + $0x1200] sm:$0xff]
        %v2036 = vld [vmem:[%s5 + $0x1208] sm:$0xff]
        %v2037 = vld [vmem:[%s5 + $0x1210] sm:$0xff]
        %v2038 = vld [vmem:[%s5 + $0x1218] sm:$0xff]
        %v2039 = vld [vmem:[%s5 + $0x1220] sm:$0xff]
        %v2040 = vld [vmem:[%s5 + $0x1228] sm:$0xff]
        %v2041 = vld [vmem:[%s5 + $0x1230] sm:$0xff]
        %v2042 = vld [vmem:[%s5 + $0x1238] sm:$0xff]
        %v2043 = vld [vmem:[%s5 + $0x1240] sm:$0xff]
        %v2044 = vld [vmem:[%s5 + $0x1248] sm:$0xff]
        %v2045 = vld [vmem:[%s5 + $0x1250] sm:$0xff]
        %v2046 = vld [vmem:[%s5 + $0x1258] sm:$0xff]
        %v2047 = vld [vmem:[%s5 + $0x1260] sm:$0xff]
        %v2048 = vld [vmem:[%s5 + $0x1268] sm:$0xff]
        %v2049 = vld [vmem:[%s5 + $0x1270] sm:$0xff]
        %v2050 = vld [vmem:[%s5 + $0x1278] sm:$0xff]
        %v2051 = vld [vmem:[%s5 + $0x1280] sm:$0xff]
        %v2052 = vld [vmem:[%s5 + $0x1288] sm:$0xff]
        %v2053 = vld [vmem:[%s5 + $0x1290] sm:$0xff]
        %v2054 = vld [vmem:[%s5 + $0x1298] sm:$0xff]
        %v2055 = vld [vmem:[%s5 + $0x12a0] sm:$0xff]
        %v2056 = vld [vmem:[%s5 + $0x12a8] sm:$0xff]
        %v2057 = vld [vmem:[%s5 + $0x12b0] sm:$0xff]
        %v2058 = vld [vmem:[%s5 + $0x12b8] sm:$0xff]
        %v2059 = vld [vmem:[%s5 + $0x12c0] sm:$0xff]
        %v2060 = vld [vmem:[%s5 + $0x12c8] sm:$0xff]
        %v2061 = vld [vmem:[%s5 + $0x12d0] sm:$0xff]
        %v2062 = vld [vmem:[%s5 + $0x12d8] sm:$0xff]
        %v2063 = vld [vmem:[%s5 + $0x12e0] sm:$0xff]
        %v2064 = vld [vmem:[%s5 + $0x12e8] sm:$0xff]
        %v2065 = vld [vmem:[%s5 + $0x12f0] sm:$0xff]
        %v2066 = vld [vmem:[%s5 + $0x12f8] sm:$0xff]
        %v2067 = vld [vmem:[%s5 + $0x1300] sm:$0xff]
        %v2068 = vld [vmem:[%s5 + $0x1308] sm:$0xff]
        %v2069 = vld [vmem:[%s5 + $0x1310] sm:$0xff]
        %v2070 = vld [vmem:[%s5 + $0x1318] sm:$0xff]
        %v2071 = vld [vmem:[%s5 + $0x1320] sm:$0xff]
        %v2072 = vld [vmem:[%s5 + $0x1328] sm:$0xff]
        %v2073 = vld [vmem:[%s5 + $0x1330] sm:$0xff]
        %v2074 = vld [vmem:[%s5 + $0x1338] sm:$0xff]
        %v2075 = vld [vmem:[%s5 + $0x1340] sm:$0xff]
        %v2076 = vld [vmem:[%s5 + $0x1348] sm:$0xff]
        %v2077 = vld [vmem:[%s5 + $0x1350] sm:$0xff]
        %v2078 = vld [vmem:[%s5 + $0x1358] sm:$0xff]
        %v2079 = vld [vmem:[%s5 + $0x1360] sm:$0xff]
        %v2080 = vld [vmem:[%s5 + $0x1368] sm:$0xff]
        %v2081 = vld [vmem:[%s5 + $0x1370] sm:$0xff]
        %v2082 = vld [vmem:[%s5 + $0x1378] sm:$0xff]
        %v2083 = vld [vmem:[%s5 + $0x1380] sm:$0xff]
        %v2084 = vld [vmem:[%s5 + $0x1388] sm:$0xff]
        %v2085 = vld [vmem:[%s5 + $0x1390] sm:$0xff]
        %v2086 = vld [vmem:[%s5 + $0x1398] sm:$0xff]
        %v2087 = vld [vmem:[%s5 + $0x13a0] sm:$0xff]
        %v2088 = vld [vmem:[%s5 + $0x13a8] sm:$0xff]
        %v2089 = vld [vmem:[%s5 + $0x13b0] sm:$0xff]
        %v2090 = vld [vmem:[%s5 + $0x13b8] sm:$0xff]
        %v2091 = vld [vmem:[%s5 + $0x13c0] sm:$0xff]
        %v2092 = vld [vmem:[%s5 + $0x13c8] sm:$0xff]
        %v2093 = vld [vmem:[%s5 + $0x13d0] sm:$0xff]
        %v2094 = vld [vmem:[%s5 + $0x13d8] sm:$0xff]
        %v2095 = vld [vmem:[%s5 + $0x13e0] sm:$0xff]
        %v2096 = vld [vmem:[%s5 + $0x13e8] sm:$0xff]
        %v2097 = vld [vmem:[%s5 + $0x13f0] sm:$0xff]
        %v2098 = vld [vmem:[%s5 + $0x13f8] sm:$0xff]
        %v2099 = vld [vmem:[%s5 + $0x1400] sm:$0xff]
        %v2100 = vld [vmem:[%s5 + $0x1408] sm:$0xff]
        %v2101 = vld [vmem:[%s5 + $0x1410] sm:$0xff]
        %v2102 = vld [vmem:[%s5 + $0x1418] sm:$0xff]
        %v2103 = vld [vmem:[%s5 + $0x1420] sm:$0xff]
        %v2104 = vld [vmem:[%s5 + $0x1428] sm:$0xff]
        %v2105 = vld [vmem:[%s5 + $0x1430] sm:$0xff]
        %v2106 = vld [vmem:[%s5 + $0x1438] sm:$0xff]
        %v2107 = vld [vmem:[%s5 + $0x1440] sm:$0xff]
        %v2108 = vld [vmem:[%s5 + $0x1448] sm:$0xff]
        %v2109 = vld [vmem:[%s5 + $0x1450] sm:$0xff]
        %v2110 = vld [vmem:[%s5 + $0x1458] sm:$0xff]
        %v2111 = vld [vmem:[%s5 + $0x1460] sm:$0xff]
        %v2112 = vld [vmem:[%s5 + $0x1468] sm:$0xff]
        %v2113 = vld [vmem:[%s5 + $0x1470] sm:$0xff]
        %v2114 = vld [vmem:[%s5 + $0x1478] sm:$0xff]
        %v2115 = vld [vmem:[%s5 + $0x1480] sm:$0xff]
        %v2116 = vld [vmem:[%s5 + $0x1488] sm:$0xff]
        %v2117 = vld [vmem:[%s5 + $0x1490] sm:$0xff]
        %v2118 = vld [vmem:[%s5 + $0x1498] sm:$0xff]
        %v2119 = vld [vmem:[%s5 + $0x14a0] sm:$0xff]
        %v2120 = vld [vmem:[%s5 + $0x14a8] sm:$0xff]
        %v2121 = vld [vmem:[%s5 + $0x14b0] sm:$0xff]
        %v2122 = vld [vmem:[%s5 + $0x14b8] sm:$0xff]
        %v2123 = vld [vmem:[%s5 + $0x14c0] sm:$0xff]
        %v2124 = vld [vmem:[%s5 + $0x14c8] sm:$0xff]
        %v2125 = vld [vmem:[%s5 + $0x14d0] sm:$0xff]
        %v2126 = vld [vmem:[%s5 + $0x14d8] sm:$0xff]
        %v2127 = vld [vmem:[%s5 + $0x14e0] sm:$0xff]
        %v2128 = vld [vmem:[%s5 + $0x14e8] sm:$0xff]
        %v2129 = vld [vmem:[%s5 + $0x14f0] sm:$0xff]
        %v2130 = vld [vmem:[%s5 + $0x14f8] sm:$0xff]
        %v2131 = vld [vmem:[%s5 + $0x1500] sm:$0xff]
        %v2132 = vld [vmem:[%s5 + $0x1508] sm:$0xff]
        %v2133 = vld [vmem:[%s5 + $0x1510] sm:$0xff]
        %v2134 = vld [vmem:[%s5 + $0x1518] sm:$0xff]
        %v2135 = vld [vmem:[%s5 + $0x1520] sm:$0xff]
        %v2136 = vld [vmem:[%s5 + $0x1528] sm:$0xff]
        %v2137 = vld [vmem:[%s5 + $0x1530] sm:$0xff]
        %v2138 = vld [vmem:[%s5 + $0x1538] sm:$0xff]
        %v2139 = vld [vmem:[%s5 + $0x1540] sm:$0xff]
        %v2140 = vld [vmem:[%s5 + $0x1548] sm:$0xff]
        %v2141 = vld [vmem:[%s5 + $0x1550] sm:$0xff]
        %v2142 = vld [vmem:[%s5 + $0x1558] sm:$0xff]
        %v2143 = vld [vmem:[%s5 + $0x1560] sm:$0xff]
        %v2144 = vld [vmem:[%s5 + $0x1568] sm:$0xff]
        %v2145 = vld [vmem:[%s5 + $0x1570] sm:$0xff]
        %v2146 = vld [vmem:[%s5 + $0x1578] sm:$0xff]
        %v2147 = vld [vmem:[%s5 + $0x1580] sm:$0xff]
        %v2148 = vld [vmem:[%s5 + $0x1588] sm:$0xff]
        %v2149 = vld [vmem:[%s5 + $0x1590] sm:$0xff]
        %v2150 = vld [vmem:[%s5 + $0x1598] sm:$0xff]
        %v2151 = vld [vmem:[%s5 + $0x15a0] sm:$0xff]
        %v2152 = vld [vmem:[%s5 + $0x15a8] sm:$0xff]
        %v2153 = vld [vmem:[%s5 + $0x15b0] sm:$0xff]
        %v2154 = vld [vmem:[%s5 + $0x15b8] sm:$0xff]
        %v2155 = vld [vmem:[%s5 + $0x15c0] sm:$0xff]
        %v2156 = vld [vmem:[%s5 + $0x15c8] sm:$0xff]
        %v2157 = vld [vmem:[%s5 + $0x15d0] sm:$0xff]
        %v2158 = vld [vmem:[%s5 + $0x15d8] sm:$0xff]
        %v2159 = vld [vmem:[%s5 + $0x15e0] sm:$0xff]
        %v2160 = vld [vmem:[%s5 + $0x15e8] sm:$0xff]
        %v2161 = vld [vmem:[%s5 + $0x15f0] sm:$0xff]
        %v2162 = vld [vmem:[%s5 + $0x15f8] sm:$0xff]
        %v2163 = vld [vmem:[%s5 + $0x1600] sm:$0xff]
        %v2164 = vld [vmem:[%s5 + $0x1608] sm:$0xff]
        %v2165 = vld [vmem:[%s5 + $0x1610] sm:$0xff]
        %v2166 = vld [vmem:[%s5 + $0x1618] sm:$0xff]
        %v2167 = vld [vmem:[%s5 + $0x1620] sm:$0xff]
        %v2168 = vld [vmem:[%s5 + $0x1628] sm:$0xff]
        %v2169 = vld [vmem:[%s5 + $0x1630] sm:$0xff]
        %v2170 = vld [vmem:[%s5 + $0x1638] sm:$0xff]
        %v2171 = vld [vmem:[%s5 + $0x1640] sm:$0xff]
        %v2172 = vld [vmem:[%s5 + $0x1648] sm:$0xff]
        %v2173 = vld [vmem:[%s5 + $0x1650] sm:$0xff]
        %v2174 = vld [vmem:[%s5 + $0x1658] sm:$0xff]
        %v2175 = vld [vmem:[%s5 + $0x1660] sm:$0xff]
        %v2176 = vld [vmem:[%s5 + $0x1668] sm:$0xff]
        %v2177 = vld [vmem:[%s5 + $0x1670] sm:$0xff]
        %v2178 = vld [vmem:[%s5 + $0x1678] sm:$0xff]
        %v2179 = vld [vmem:[%s5 + $0x1680] sm:$0xff]
        %v2180 = vld [vmem:[%s5 + $0x1688] sm:$0xff]
        %v2181 = vld [vmem:[%s5 + $0x1690] sm:$0xff]
        %v2182 = vld [vmem:[%s5 + $0x1698] sm:$0xff]
        %v2183 = vld [vmem:[%s5 + $0x16a0] sm:$0xff]
        %v2184 = vld [vmem:[%s5 + $0x16a8] sm:$0xff]
        %v2185 = vld [vmem:[%s5 + $0x16b0] sm:$0xff]
        %v2186 = vld [vmem:[%s5 + $0x16b8] sm:$0xff]
        %v2187 = vld [vmem:[%s5 + $0x16c0] sm:$0xff]
        %v2188 = vld [vmem:[%s5 + $0x16c8] sm:$0xff]
        %v2189 = vld [vmem:[%s5 + $0x16d0] sm:$0xff]
        %v2190 = vld [vmem:[%s5 + $0x16d8] sm:$0xff]
        %v2191 = vld [vmem:[%s5 + $0x16e0] sm:$0xff]
        %v2192 = vld [vmem:[%s5 + $0x16e8] sm:$0xff]
        %v2193 = vld [vmem:[%s5 + $0x16f0] sm:$0xff]
        %v2194 = vld [vmem:[%s5 + $0x16f8] sm:$0xff]
        %v2195 = vld [vmem:[%s5 + $0x1700] sm:$0xff]
        %v2196 = vld [vmem:[%s5 + $0x1708] sm:$0xff]
        %v2197 = vld [vmem:[%s5 + $0x1710] sm:$0xff]
        %v2198 = vld [vmem:[%s5 + $0x1718] sm:$0xff]
        %v2199 = vld [vmem:[%s5 + $0x1720] sm:$0xff]
        %v2200 = vld [vmem:[%s5 + $0x1728] sm:$0xff]
        %v2201 = vld [vmem:[%s5 + $0x1730] sm:$0xff]
        %v2202 = vld [vmem:[%s5 + $0x1738] sm:$0xff]
        %v2203 = vld [vmem:[%s5 + $0x1740] sm:$0xff]
        %v2204 = vld [vmem:[%s5 + $0x1748] sm:$0xff]
        %v2205 = vld [vmem:[%s5 + $0x1750] sm:$0xff]
        %v2206 = vld [vmem:[%s5 + $0x1758] sm:$0xff]
        %v2207 = vld [vmem:[%s5 + $0x1760] sm:$0xff]
        %v2208 = vld [vmem:[%s5 + $0x1768] sm:$0xff]
        %v2209 = vld [vmem:[%s5 + $0x1770] sm:$0xff]
        %v2210 = vld [vmem:[%s5 + $0x1778] sm:$0xff]
        %v2211 = vld [vmem:[%s5 + $0x1780] sm:$0xff]
        %v2212 = vld [vmem:[%s5 + $0x1788] sm:$0xff]
        %v2213 = vld [vmem:[%s5 + $0x1790] sm:$0xff]
        %v2214 = vld [vmem:[%s5 + $0x1798] sm:$0xff]
        %v2215 = vld [vmem:[%s5 + $0x17a0] sm:$0xff]
        %v2216 = vld [vmem:[%s5 + $0x17a8] sm:$0xff]
        %v2217 = vld [vmem:[%s5 + $0x17b0] sm:$0xff]
        %v2218 = vld [vmem:[%s5 + $0x17b8] sm:$0xff]
        %v2219 = vld [vmem:[%s5 + $0x17c0] sm:$0xff]
        %v2220 = vld [vmem:[%s5 + $0x17c8] sm:$0xff]
        %v2221 = vld [vmem:[%s5 + $0x17d0] sm:$0xff]
        %v2222 = vld [vmem:[%s5 + $0x17d8] sm:$0xff]
        %v2223 = vld [vmem:[%s5 + $0x17e0] sm:$0xff]
        %v2224 = vld [vmem:[%s5 + $0x17e8] sm:$0xff]
        %v2225 = vld [vmem:[%s5 + $0x17f0] sm:$0xff]
        %v2226 = vld [vmem:[%s5 + $0x17f8] sm:$0xff]
        %v2227 = vld [vmem:[%s5 + $0x1800] sm:$0xff]
        %v2228 = vld [vmem:[%s5 + $0x1808] sm:$0xff]
        %v2229 = vld [vmem:[%s5 + $0x1810] sm:$0xff]
        %v2230 = vld [vmem:[%s5 + $0x1818] sm:$0xff]
        %v2231 = vld [vmem:[%s5 + $0x1820] sm:$0xff]
        %v2232 = vld [vmem:[%s5 + $0x1828] sm:$0xff]
        %v2233 = vld [vmem:[%s5 + $0x1830] sm:$0xff]
        %v2234 = vld [vmem:[%s5 + $0x1838] sm:$0xff]
        %v2235 = vld [vmem:[%s5 + $0x1840] sm:$0xff]
        %v2236 = vld [vmem:[%s5 + $0x1848] sm:$0xff]
        %v2237 = vld [vmem:[%s5 + $0x1850] sm:$0xff]
        %v2238 = vld [vmem:[%s5 + $0x1858] sm:$0xff]
        %v2239 = vld [vmem:[%s5 + $0x1860] sm:$0xff]
        %v2240 = vld [vmem:[%s5 + $0x1868] sm:$0xff]
        %v2241 = vld [vmem:[%s5 + $0x1870] sm:$0xff]
        %v2242 = vld [vmem:[%s5 + $0x1878] sm:$0xff]
        %v2243 = vld [vmem:[%s5 + $0x1880] sm:$0xff]
        %v2244 = vld [vmem:[%s5 + $0x1888] sm:$0xff]
        %v2245 = vld [vmem:[%s5 + $0x1890] sm:$0xff]
        %v2246 = vld [vmem:[%s5 + $0x1898] sm:$0xff]
        %v2247 = vld [vmem:[%s5 + $0x18a0] sm:$0xff]
        %v2248 = vld [vmem:[%s5 + $0x18a8] sm:$0xff]
        %v2249 = vld [vmem:[%s5 + $0x18b0] sm:$0xff]
        %v2250 = vld [vmem:[%s5 + $0x18b8] sm:$0xff]
        %v2251 = vld [vmem:[%s5 + $0x18c0] sm:$0xff]
        %v2252 = vld [vmem:[%s5 + $0x18c8] sm:$0xff]
        %v2253 = vld [vmem:[%s5 + $0x18d0] sm:$0xff]
        %v2254 = vld [vmem:[%s5 + $0x18d8] sm:$0xff]
        %v2255 = vld [vmem:[%s5 + $0x18e0] sm:$0xff]
        %v2256 = vld [vmem:[%s5 + $0x18e8] sm:$0xff]
        %v2257 = vld [vmem:[%s5 + $0x18f0] sm:$0xff]
        %v2258 = vld [vmem:[%s5 + $0x18f8] sm:$0xff]
        %v2259 = vld [vmem:[%s5 + $0x1900] sm:$0xff]
        %v2260 = vld [vmem:[%s5 + $0x1908] sm:$0xff]
        %v2261 = vld [vmem:[%s5 + $0x1910] sm:$0xff]
        %v2262 = vld [vmem:[%s5 + $0x1918] sm:$0xff]
        %v2263 = vld [vmem:[%s5 + $0x1920] sm:$0xff]
        %v2264 = vld [vmem:[%s5 + $0x1928] sm:$0xff]
        %v2265 = vld [vmem:[%s5 + $0x1930] sm:$0xff]
        %v2266 = vld [vmem:[%s5 + $0x1938] sm:$0xff]
        %v2267 = vld [vmem:[%s5 + $0x1940] sm:$0xff]
        %v2268 = vld [vmem:[%s5 + $0x1948] sm:$0xff]
        %v2269 = vld [vmem:[%s5 + $0x1950] sm:$0xff]
        %v2270 = vld [vmem:[%s5 + $0x1958] sm:$0xff]
        %v2271 = vld [vmem:[%s5 + $0x1960] sm:$0xff]
        %v2272 = vld [vmem:[%s5 + $0x1968] sm:$0xff]
        %v2273 = vld [vmem:[%s5 + $0x1970] sm:$0xff]
        %v2274 = vld [vmem:[%s5 + $0x1978] sm:$0xff]
        %v2275 = vld [vmem:[%s5 + $0x1980] sm:$0xff]
        %v2276 = vld [vmem:[%s5 + $0x1988] sm:$0xff]
        %v2277 = vld [vmem:[%s5 + $0x1990] sm:$0xff]
        %v2278 = vld [vmem:[%s5 + $0x1998] sm:$0xff]
        %v2279 = vld [vmem:[%s5 + $0x19a0] sm:$0xff]
        %v2280 = vld [vmem:[%s5 + $0x19a8] sm:$0xff]
        %v2281 = vld [vmem:[%s5 + $0x19b0] sm:$0xff]
        %v2282 = vld [vmem:[%s5 + $0x19b8] sm:$0xff]
        %v2283 = vld [vmem:[%s5 + $0x19c0] sm:$0xff]
        %v2284 = vld [vmem:[%s5 + $0x19c8] sm:$0xff]
        %v2285 = vld [vmem:[%s5 + $0x19d0] sm:$0xff]
        %v2286 = vld [vmem:[%s5 + $0x19d8] sm:$0xff]
        %v2287 = vld [vmem:[%s5 + $0x19e0] sm:$0xff]
        %v2288 = vld [vmem:[%s5 + $0x19e8] sm:$0xff]
        %v2289 = vld [vmem:[%s5 + $0x19f0] sm:$0xff]
        %v2290 = vld [vmem:[%s5 + $0x19f8] sm:$0xff]
        %v2291 = vld [vmem:[%s5 + $0x1a00] sm:$0xff]
        %v2292 = vld [vmem:[%s5 + $0x1a08] sm:$0xff]
        %v2293 = vld [vmem:[%s5 + $0x1a10] sm:$0xff]
        %v2294 = vld [vmem:[%s5 + $0x1a18] sm:$0xff]
        %v2295 = vld [vmem:[%s5 + $0x1a20] sm:$0xff]
        %v2296 = vld [vmem:[%s5 + $0x1a28] sm:$0xff]
        %v2297 = vld [vmem:[%s5 + $0x1a30] sm:$0xff]
        %v2298 = vld [vmem:[%s5 + $0x1a38] sm:$0xff]
        %v2299 = vld [vmem:[%s5 + $0x1a40] sm:$0xff]
        %v2300 = vld [vmem:[%s5 + $0x1a48] sm:$0xff]
        %v2301 = vld [vmem:[%s5 + $0x1a50] sm:$0xff]
        %v2302 = vld [vmem:[%s5 + $0x1a58] sm:$0xff]
        %v2303 = vld [vmem:[%s5 + $0x1a60] sm:$0xff]
        %v2304 = vld [vmem:[%s5 + $0x1a68] sm:$0xff]
        %v2305 = vld [vmem:[%s5 + $0x1a70] sm:$0xff]
        %v2306 = vld [vmem:[%s5 + $0x1a78] sm:$0xff]
        %v2307 = vld [vmem:[%s5 + $0x1a80] sm:$0xff]
        %v2308 = vld [vmem:[%s5 + $0x1a88] sm:$0xff]
        %v2309 = vld [vmem:[%s5 + $0x1a90] sm:$0xff]
        %v2310 = vld [vmem:[%s5 + $0x1a98] sm:$0xff]
        %v2311 = vld [vmem:[%s5 + $0x1aa0] sm:$0xff]
        %v2312 = vld [vmem:[%s5 + $0x1aa8] sm:$0xff]
        %v2313 = vld [vmem:[%s5 + $0x1ab0] sm:$0xff]
        %v2314 = vld [vmem:[%s5 + $0x1ab8] sm:$0xff]
        %v2315 = vld [vmem:[%s5 + $0x1ac0] sm:$0xff]
        %v2316 = vld [vmem:[%s5 + $0x1ac8] sm:$0xff]
        %v2317 = vld [vmem:[%s5 + $0x1ad0] sm:$0xff]
        %v2318 = vld [vmem:[%s5 + $0x1ad8] sm:$0xff]
        %v2319 = vld [vmem:[%s5 + $0x1ae0] sm:$0xff]
        %v2320 = vld [vmem:[%s5 + $0x1ae8] sm:$0xff]
        %v2321 = vld [vmem:[%s5 + $0x1af0] sm:$0xff]
        %v2322 = vld [vmem:[%s5 + $0x1af8] sm:$0xff]
        %v2323 = vld [vmem:[%s5 + $0x1b00] sm:$0xff]
        %v2324 = vld [vmem:[%s5 + $0x1b08] sm:$0xff]
        %v2325 = vld [vmem:[%s5 + $0x1b10] sm:$0xff]
        %v2326 = vld [vmem:[%s5 + $0x1b18] sm:$0xff]
        %v2327 = vld [vmem:[%s5 + $0x1b20] sm:$0xff]
        %v2328 = vld [vmem:[%s5 + $0x1b28] sm:$0xff]
        %v2329 = vld [vmem:[%s5 + $0x1b30] sm:$0xff]
        %v2330 = vld [vmem:[%s5 + $0x1b38] sm:$0xff]
        %v2331 = vld [vmem:[%s5 + $0x1b40] sm:$0xff]
        %v2332 = vld [vmem:[%s5 + $0x1b48] sm:$0xff]
        %v2333 = vld [vmem:[%s5 + $0x1b50] sm:$0xff]
        %v2334 = vld [vmem:[%s5 + $0x1b58] sm:$0xff]
        %v2335 = vld [vmem:[%s5 + $0x1b60] sm:$0xff]
        %v2336 = vld [vmem:[%s5 + $0x1b68] sm:$0xff]
        %v2337 = vld [vmem:[%s5 + $0x1b70] sm:$0xff]
        %v2338 = vld [vmem:[%s5 + $0x1b78] sm:$0xff]
        %v2339 = vld [vmem:[%s5 + $0x1b80] sm:$0xff]
        %v2340 = vld [vmem:[%s5 + $0x1b88] sm:$0xff]
        %v2341 = vld [vmem:[%s5 + $0x1b90] sm:$0xff]
        %v2342 = vld [vmem:[%s5 + $0x1b98] sm:$0xff]
        %v2343 = vld [vmem:[%s5 + $0x1ba0] sm:$0xff]
        %v2344 = vld [vmem:[%s5 + $0x1ba8] sm:$0xff]
        %v2345 = vld [vmem:[%s5 + $0x1bb0] sm:$0xff]
        %v2346 = vld [vmem:[%s5 + $0x1bb8] sm:$0xff]
        %v2347 = vld [vmem:[%s5 + $0x1bc0] sm:$0xff]
        %v2348 = vld [vmem:[%s5 + $0x1bc8] sm:$0xff]
        %v2349 = vld [vmem:[%s5 + $0x1bd0] sm:$0xff]
        %v2350 = vld [vmem:[%s5 + $0x1bd8] sm:$0xff]
        %v2351 = vld [vmem:[%s5 + $0x1be0] sm:$0xff]
        %v2352 = vld [vmem:[%s5 + $0x1be8] sm:$0xff]
        %v2353 = vld [vmem:[%s5 + $0x1bf0] sm:$0xff]
        %v2354 = vld [vmem:[%s5 + $0x1bf8] sm:$0xff]
        %v2355 = vld [vmem:[%s5 + $0x1c00] sm:$0xff]
        %v2356 = vld [vmem:[%s5 + $0x1c08] sm:$0xff]
        %v2357 = vld [vmem:[%s5 + $0x1c10] sm:$0xff]
        %v2358 = vld [vmem:[%s5 + $0x1c18] sm:$0xff]
        %v2359 = vld [vmem:[%s5 + $0x1c20] sm:$0xff]
        %v2360 = vld [vmem:[%s5 + $0x1c28] sm:$0xff]
        %v2361 = vld [vmem:[%s5 + $0x1c30] sm:$0xff]
        %v2362 = vld [vmem:[%s5 + $0x1c38] sm:$0xff]
        %v2363 = vld [vmem:[%s5 + $0x1c40] sm:$0xff]
        %v2364 = vld [vmem:[%s5 + $0x1c48] sm:$0xff]
        %v2365 = vld [vmem:[%s5 + $0x1c50] sm:$0xff]
        %v2366 = vld [vmem:[%s5 + $0x1c58] sm:$0xff]
        %v2367 = vld [vmem:[%s5 + $0x1c60] sm:$0xff]
        %v2368 = vld [vmem:[%s5 + $0x1c68] sm:$0xff]
        %v2369 = vld [vmem:[%s5 + $0x1c70] sm:$0xff]
        %v2370 = vld [vmem:[%s5 + $0x1c78] sm:$0xff]
        %v2371 = vld [vmem:[%s5 + $0x1c80] sm:$0xff]
        %v2372 = vld [vmem:[%s5 + $0x1c88] sm:$0xff]
        %v2373 = vld [vmem:[%s5 + $0x1c90] sm:$0xff]
        %v2374 = vld [vmem:[%s5 + $0x1c98] sm:$0xff]
        %v2375 = vld [vmem:[%s5 + $0x1ca0] sm:$0xff]
        %v2376 = vld [vmem:[%s5 + $0x1ca8] sm:$0xff]
        %v2377 = vld [vmem:[%s5 + $0x1cb0] sm:$0xff]
        %v2378 = vld [vmem:[%s5 + $0x1cb8] sm:$0xff]
        %v2379 = vld [vmem:[%s5 + $0x1cc0] sm:$0xff]
        %v2380 = vld [vmem:[%s5 + $0x1cc8] sm:$0xff]
        %v2381 = vld [vmem:[%s5 + $0x1cd0] sm:$0xff]
        %v2382 = vld [vmem:[%s5 + $0x1cd8] sm:$0xff]
        %v2383 = vld [vmem:[%s5 + $0x1ce0] sm:$0xff]
        %v2384 = vld [vmem:[%s5 + $0x1ce8] sm:$0xff]
        %v2385 = vld [vmem:[%s5 + $0x1cf0] sm:$0xff]
        %v2386 = vld [vmem:[%s5 + $0x1cf8] sm:$0xff]
        %v2387 = vld [vmem:[%s5 + $0x1d00] sm:$0xff]
        %v2388 = vld [vmem:[%s5 + $0x1d08] sm:$0xff]
        %v2389 = vld [vmem:[%s5 + $0x1d10] sm:$0xff]
        %v2390 = vld [vmem:[%s5 + $0x1d18] sm:$0xff]
        %v2391 = vld [vmem:[%s5 + $0x1d20] sm:$0xff]
        %v2392 = vld [vmem:[%s5 + $0x1d28] sm:$0xff]
        %v2393 = vld [vmem:[%s5 + $0x1d30] sm:$0xff]
        %v2394 = vld [vmem:[%s5 + $0x1d38] sm:$0xff]
        %v2395 = vld [vmem:[%s5 + $0x1d40] sm:$0xff]
        %v2396 = vld [vmem:[%s5 + $0x1d48] sm:$0xff]
        %v2397 = vld [vmem:[%s5 + $0x1d50] sm:$0xff]
        %v2398 = vld [vmem:[%s5 + $0x1d58] sm:$0xff]
        %v2399 = vld [vmem:[%s5 + $0x1d60] sm:$0xff]
        %v2400 = vld [vmem:[%s5 + $0x1d68] sm:$0xff]
        %v2401 = vld [vmem:[%s5 + $0x1d70] sm:$0xff]
        %v2402 = vld [vmem:[%s5 + $0x1d78] sm:$0xff]
        %v2403 = vld [vmem:[%s5 + $0x1d80] sm:$0xff]
        %v2404 = vld [vmem:[%s5 + $0x1d88] sm:$0xff]
        %v2405 = vld [vmem:[%s5 + $0x1d90] sm:$0xff]
        %v2406 = vld [vmem:[%s5 + $0x1d98] sm:$0xff]
        %v2407 = vld [vmem:[%s5 + $0x1da0] sm:$0xff]
        %v2408 = vld [vmem:[%s5 + $0x1da8] sm:$0xff]
        %v2409 = vld [vmem:[%s5 + $0x1db0] sm:$0xff]
        %v2410 = vld [vmem:[%s5 + $0x1db8] sm:$0xff]
        %v2411 = vld [vmem:[%s5 + $0x1dc0] sm:$0xff]
        %v2412 = vld [vmem:[%s5 + $0x1dc8] sm:$0xff]
        %v2413 = vld [vmem:[%s5 + $0x1dd0] sm:$0xff]
        %v2414 = vld [vmem:[%s5 + $0x1dd8] sm:$0xff]
        %v2415 = vld [vmem:[%s5 + $0x1de0] sm:$0xff]
        %v2416 = vld [vmem:[%s5 + $0x1de8] sm:$0xff]
        %v2417 = vld [vmem:[%s5 + $0x1df0] sm:$0xff]
        %v2418 = vld [vmem:[%s5 + $0x1df8] sm:$0xff]
        %v2419 = vld [vmem:[%s5 + $0x1e00] sm:$0xff]
        %v2420 = vld [vmem:[%s5 + $0x1e08] sm:$0xff]
        %v2421 = vld [vmem:[%s5 + $0x1e10] sm:$0xff]
        %v2422 = vld [vmem:[%s5 + $0x1e18] sm:$0xff]
        %v2423 = vld [vmem:[%s5 + $0x1e20] sm:$0xff]
        %v2424 = vld [vmem:[%s5 + $0x1e28] sm:$0xff]
        %v2425 = vld [vmem:[%s5 + $0x1e30] sm:$0xff]
        %v2426 = vld [vmem:[%s5 + $0x1e38] sm:$0xff]
        %v2427 = vld [vmem:[%s5 + $0x1e40] sm:$0xff]
        %v2428 = vld [vmem:[%s5 + $0x1e48] sm:$0xff]
        %v2429 = vld [vmem:[%s5 + $0x1e50] sm:$0xff]
        %v2430 = vld [vmem:[%s5 + $0x1e58] sm:$0xff]
        %v2431 = vld [vmem:[%s5 + $0x1e60] sm:$0xff]
        %v2432 = vld [vmem:[%s5 + $0x1e68] sm:$0xff]
        %v2433 = vld [vmem:[%s5 + $0x1e70] sm:$0xff]
        %v2434 = vld [vmem:[%s5 + $0x1e78] sm:$0xff]
        %v2435 = vld [vmem:[%s5 + $0x1e80] sm:$0xff]
        %v2436 = vld [vmem:[%s5 + $0x1e88] sm:$0xff]
        %v2437 = vld [vmem:[%s5 + $0x1e90] sm:$0xff]
        %v2438 = vld [vmem:[%s5 + $0x1e98] sm:$0xff]
        %v2439 = vld [vmem:[%s5 + $0x1ea0] sm:$0xff]
        %v2440 = vld [vmem:[%s5 + $0x1ea8] sm:$0xff]
        %v2441 = vld [vmem:[%s5 + $0x1eb0] sm:$0xff]
        %v2442 = vld [vmem:[%s5 + $0x1eb8] sm:$0xff]
        %v2443 = vld [vmem:[%s5 + $0x1ec0] sm:$0xff]
        %v2444 = vld [vmem:[%s5 + $0x1ec8] sm:$0xff]
        %v2445 = vld [vmem:[%s5 + $0x1ed0] sm:$0xff]
        %v2446 = vld [vmem:[%s5 + $0x1ed8] sm:$0xff]
        %v2447 = vld [vmem:[%s5 + $0x1ee0] sm:$0xff]
        %v2448 = vld [vmem:[%s5 + $0x1ee8] sm:$0xff]
        %v2449 = vld [vmem:[%s5 + $0x1ef0] sm:$0xff]
        %v2450 = vld [vmem:[%s5 + $0x1ef8] sm:$0xff]
        %v2451 = vld [vmem:[%s5 + $0x1f00] sm:$0xff]
        %v2452 = vld [vmem:[%s5 + $0x1f08] sm:$0xff]
        %v2453 = vld [vmem:[%s5 + $0x1f10] sm:$0xff]
        %v2454 = vld [vmem:[%s5 + $0x1f18] sm:$0xff]
        %v2455 = vld [vmem:[%s5 + $0x1f20] sm:$0xff]
        %v2456 = vld [vmem:[%s5 + $0x1f28] sm:$0xff]
        %v2457 = vld [vmem:[%s5 + $0x1f30] sm:$0xff]
        %v2458 = vld [vmem:[%s5 + $0x1f38] sm:$0xff]
        %v2459 = vld [vmem:[%s5 + $0x1f40] sm:$0xff]
        %v2460 = vld [vmem:[%s5 + $0x1f48] sm:$0xff]
        %v2461 = vld [vmem:[%s5 + $0x1f50] sm:$0xff]
        %v2462 = vld [vmem:[%s5 + $0x1f58] sm:$0xff]
        %v2463 = vld [vmem:[%s5 + $0x1f60] sm:$0xff]
        %v2464 = vld [vmem:[%s5 + $0x1f68] sm:$0xff]
        %v2465 = vld [vmem:[%s5 + $0x1f70] sm:$0xff]
        %v2466 = vld [vmem:[%s5 + $0x1f78] sm:$0xff]
        %v2467 = vld [vmem:[%s5 + $0x1f80] sm:$0xff]
        %v2468 = vld [vmem:[%s5 + $0x1f88] sm:$0xff]
        %v2469 = vld [vmem:[%s5 + $0x1f90] sm:$0xff]
        %v2470 = vld [vmem:[%s5 + $0x1f98] sm:$0xff]
        %v2471 = vld [vmem:[%s5 + $0x1fa0] sm:$0xff]
        %v2472 = vld [vmem:[%s5 + $0x1fa8] sm:$0xff]
        %v2473 = vld [vmem:[%s5 + $0x1fb0] sm:$0xff]
        %v2474 = vld [vmem:[%s5 + $0x1fb8] sm:$0xff]
        %v2475 = vld [vmem:[%s5 + $0x1fc0] sm:$0xff]
        %v2476 = vld [vmem:[%s5 + $0x1fc8] sm:$0xff]
        %v2477 = vld [vmem:[%s5 + $0x1fd0] sm:$0xff]
        %v2478 = vld [vmem:[%s5 + $0x1fd8] sm:$0xff]
        %v2479 = vld [vmem:[%s5 + $0x1fe0] sm:$0xff]
        %v2480 = vld [vmem:[%s5 + $0x1fe8] sm:$0xff]
        %v2481 = vld [vmem:[%s5 + $0x1ff0] sm:$0xff]
        %v2482 = vld [vmem:[%s5 + $0x1ff8] sm:$0xff]
        %v2483 = vld [vmem:[%s5 + $0x2000] sm:$0xff]
        %v2484 = vld [vmem:[%s5 + $0x2008] sm:$0xff]
        %v2485 = vld [vmem:[%s5 + $0x2010] sm:$0xff]
        %v2486 = vld [vmem:[%s5 + $0x2018] sm:$0xff]
        %v2487 = vld [vmem:[%s5 + $0x2020] sm:$0xff]
        %v2488 = vld [vmem:[%s5 + $0x2028] sm:$0xff]
        %v2489 = vld [vmem:[%s5 + $0x2030] sm:$0xff]
        %v2490 = vld [vmem:[%s5 + $0x2038] sm:$0xff]
        %v2491 = vld [vmem:[%s5 + $0x2040] sm:$0xff]
        %v2492 = vld [vmem:[%s5 + $0x2048] sm:$0xff]
        %v2493 = vld [vmem:[%s5 + $0x2050] sm:$0xff]
        %v2494 = vld [vmem:[%s5 + $0x2058] sm:$0xff]
        %v2495 = vld [vmem:[%s5 + $0x2060] sm:$0xff]
        %v2496 = vld [vmem:[%s5 + $0x2068] sm:$0xff]
        %v2497 = vld [vmem:[%s5 + $0x2070] sm:$0xff]
        %v2498 = vld [vmem:[%s5 + $0x2078] sm:$0xff]
        %v2499 = vld [vmem:[%s5 + $0x2080] sm:$0xff]
        %v2500 = vld [vmem:[%s5 + $0x2088] sm:$0xff]
        %v2501 = vld [vmem:[%s5 + $0x2090] sm:$0xff]
        %v2502 = vld [vmem:[%s5 + $0x2098] sm:$0xff]
        %v2503 = vld [vmem:[%s5 + $0x20a0] sm:$0xff]
        %v2504 = vld [vmem:[%s5 + $0x20a8] sm:$0xff]
        %v2505 = vld [vmem:[%s5 + $0x20b0] sm:$0xff]
        %v2506 = vld [vmem:[%s5 + $0x20b8] sm:$0xff]
        %v2507 = vld [vmem:[%s5 + $0x20c0] sm:$0xff]
        %v2508 = vld [vmem:[%s5 + $0x20c8] sm:$0xff]
        %v2509 = vld [vmem:[%s5 + $0x20d0] sm:$0xff]
        %v2510 = vld [vmem:[%s5 + $0x20d8] sm:$0xff]
        %v2511 = vld [vmem:[%s5 + $0x20e0] sm:$0xff]
        %v2512 = vld [vmem:[%s5 + $0x20e8] sm:$0xff]
        %v2513 = vld [vmem:[%s5 + $0x20f0] sm:$0xff]
        %v2514 = vld [vmem:[%s5 + $0x20f8] sm:$0xff]
        %v2515 = vld [vmem:[%s5 + $0x2100] sm:$0xff]
        %v2516 = vld [vmem:[%s5 + $0x2108] sm:$0xff]
        %v2517 = vld [vmem:[%s5 + $0x2110] sm:$0xff]
        %v2518 = vld [vmem:[%s5 + $0x2118] sm:$0xff]
        %v2519 = vld [vmem:[%s5 + $0x2120] sm:$0xff]
        %v2520 = vld [vmem:[%s5 + $0x2128] sm:$0xff]
        %v2521 = vld [vmem:[%s5 + $0x2130] sm:$0xff]
        %v2522 = vld [vmem:[%s5 + $0x2138] sm:$0xff]
        %v2523 = vld [vmem:[%s5 + $0x2140] sm:$0xff]
        %v2524 = vld [vmem:[%s5 + $0x2148] sm:$0xff]
        %v2525 = vld [vmem:[%s5 + $0x2150] sm:$0xff]
        %v2526 = vld [vmem:[%s5 + $0x2158] sm:$0xff]
        %v2527 = vld [vmem:[%s5 + $0x2160] sm:$0xff]
        %v2528 = vld [vmem:[%s5 + $0x2168] sm:$0xff]
        %v2529 = vld [vmem:[%s5 + $0x2170] sm:$0xff]
        %v2530 = vld [vmem:[%s5 + $0x2178] sm:$0xff]
        %v2531 = vld [vmem:[%s5 + $0x2180] sm:$0xff]
        %v2532 = vld [vmem:[%s5 + $0x2188] sm:$0xff]
        %v2533 = vld [vmem:[%s5 + $0x2190] sm:$0xff]
        %v2534 = vld [vmem:[%s5 + $0x2198] sm:$0xff]
        %v2535 = vld [vmem:[%s5 + $0x21a0] sm:$0xff]
        %v2536 = vld [vmem:[%s5 + $0x21a8] sm:$0xff]
        %v2537 = vld [vmem:[%s5 + $0x21b0] sm:$0xff]
        %v2538 = vld [vmem:[%s5 + $0x21b8] sm:$0xff]
        %v2539 = vld [vmem:[%s5 + $0x21c0] sm:$0xff]
        %v2540 = vld [vmem:[%s5 + $0x21c8] sm:$0xff]
        %v2541 = vld [vmem:[%s5 + $0x21d0] sm:$0xff]
        %v2542 = vld [vmem:[%s5 + $0x21d8] sm:$0xff]
        %v2543 = vld [vmem:[%s5 + $0x21e0] sm:$0xff]
        %v2544 = vld [vmem:[%s5 + $0x21e8] sm:$0xff]
        %v2545 = vld [vmem:[%s5 + $0x21f0] sm:$0xff]
        %v2546 = vld [vmem:[%s5 + $0x21f8] sm:$0xff]
        %v2547 = vld [vmem:[%s5 + $0x2200] sm:$0xff]
        %v2548 = vld [vmem:[%s5 + $0x2208] sm:$0xff]
        %v2549 = vld [vmem:[%s5 + $0x2210] sm:$0xff]
        %v2550 = vld [vmem:[%s5 + $0x2218] sm:$0xff]
        %v2551 = vld [vmem:[%s5 + $0x2220] sm:$0xff]
        %v2552 = vld [vmem:[%s5 + $0x2228] sm:$0xff]
        %v2553 = vld [vmem:[%s5 + $0x2230] sm:$0xff]
        %v2554 = vld [vmem:[%s5 + $0x2238] sm:$0xff]
        %v2555 = vld [vmem:[%s5 + $0x2240] sm:$0xff]
        %v2556 = vld [vmem:[%s5 + $0x2248] sm:$0xff]
        %v2557 = vld [vmem:[%s5 + $0x2250] sm:$0xff]
        %v2558 = vld [vmem:[%s5 + $0x2258] sm:$0xff]
        %v2559 = vld [vmem:[%s5 + $0x2260] sm:$0xff]
        %v2560 = vld [vmem:[%s5 + $0x2268] sm:$0xff]
        %v2561 = vld [vmem:[%s5 + $0x2270] sm:$0xff]
        %v2562 = vld [vmem:[%s5 + $0x2278] sm:$0xff]
        %v2563 = vld [vmem:[%s5 + $0x2280] sm:$0xff]
        %v2564 = vld [vmem:[%s5 + $0x2288] sm:$0xff]
        %v2565 = vld [vmem:[%s5 + $0x2290] sm:$0xff]
        %v2566 = vld [vmem:[%s5 + $0x2298] sm:$0xff]
        %v2567 = vld [vmem:[%s5 + $0x22a0] sm:$0xff]
        %v2568 = vld [vmem:[%s5 + $0x22a8] sm:$0xff]
        %v2569 = vld [vmem:[%s5 + $0x22b0] sm:$0xff]
        %v2570 = vld [vmem:[%s5 + $0x22b8] sm:$0xff]
        %v2571 = vld [vmem:[%s5 + $0x22c0] sm:$0xff]
        %v2572 = vld [vmem:[%s5 + $0x22c8] sm:$0xff]
        %v2573 = vld [vmem:[%s5 + $0x22d0] sm:$0xff]
        %v2574 = vld [vmem:[%s5 + $0x22d8] sm:$0xff]
        %v2575 = vld [vmem:[%s5 + $0x22e0] sm:$0xff]
        %v2576 = vld [vmem:[%s5 + $0x22e8] sm:$0xff]
        %v2577 = vld [vmem:[%s5 + $0x22f0] sm:$0xff]
        %v2578 = vld [vmem:[%s5 + $0x22f8] sm:$0xff]
        %v2579 = vld [vmem:[%s5 + $0x2300] sm:$0xff]
        %v2580 = vld [vmem:[%s5 + $0x2308] sm:$0xff]
        %v2581 = vld [vmem:[%s5 + $0x2310] sm:$0xff]
        %v2582 = vld [vmem:[%s5 + $0x2318] sm:$0xff]
        %v2583 = vld [vmem:[%s5 + $0x2320] sm:$0xff]
        %v2584 = vld [vmem:[%s5 + $0x2328] sm:$0xff]
        %v2585 = vld [vmem:[%s5 + $0x2330] sm:$0xff]
        %v2586 = vld [vmem:[%s5 + $0x2338] sm:$0xff]
        %v2587 = vld [vmem:[%s5 + $0x2340] sm:$0xff]
        %v2588 = vld [vmem:[%s5 + $0x2348] sm:$0xff]
        %v2589 = vld [vmem:[%s5 + $0x2350] sm:$0xff]
        %v2590 = vld [vmem:[%s5 + $0x2358] sm:$0xff]
        %v2591 = vld [vmem:[%s5 + $0x2360] sm:$0xff]
        %v2592 = vld [vmem:[%s5 + $0x2368] sm:$0xff]
        %v2593 = vld [vmem:[%s5 + $0x2370] sm:$0xff]
        %v2594 = vld [vmem:[%s5 + $0x2378] sm:$0xff]
        %v2595 = vld [vmem:[%s5 + $0x2380] sm:$0xff]
        %v2596 = vld [vmem:[%s5 + $0x2388] sm:$0xff]
        %v2597 = vld [vmem:[%s5 + $0x2390] sm:$0xff]
        %v2598 = vld [vmem:[%s5 + $0x2398] sm:$0xff]
        %v2599 = vld [vmem:[%s5 + $0x23a0] sm:$0xff]
        %v2600 = vld [vmem:[%s5 + $0x23a8] sm:$0xff]
        %v2601 = vld [vmem:[%s5 + $0x23b0] sm:$0xff]
        %v2602 = vld [vmem:[%s5 + $0x23b8] sm:$0xff]
        %v2603 = vld [vmem:[%s5 + $0x23c0] sm:$0xff]
        %v2604 = vld [vmem:[%s5 + $0x23c8] sm:$0xff]
        %v2605 = vld [vmem:[%s5 + $0x23d0] sm:$0xff]
        %v2606 = vld [vmem:[%s5 + $0x23d8] sm:$0xff]
        %v2607 = vld [vmem:[%s5 + $0x23e0] sm:$0xff]
        %v2608 = vld [vmem:[%s5 + $0x23e8] sm:$0xff]
        %v2609 = vld [vmem:[%s5 + $0x23f0] sm:$0xff]
        %v2610 = vld [vmem:[%s5 + $0x23f8] sm:$0xff]
        %v2611 = vld [vmem:[%s5 + $0x2400] sm:$0xff]
        %v2612 = vld [vmem:[%s5 + $0x2408] sm:$0xff]
        %v2613 = vld [vmem:[%s5 + $0x2410] sm:$0xff]
        %v2614 = vld [vmem:[%s5 + $0x2418] sm:$0xff]
        %v2615 = vld [vmem:[%s5 + $0x2420] sm:$0xff]
        %v2616 = vld [vmem:[%s5 + $0x2428] sm:$0xff]
        %v2617 = vld [vmem:[%s5 + $0x2430] sm:$0xff]
        %v2618 = vld [vmem:[%s5 + $0x2438] sm:$0xff]
        %v2619 = vld [vmem:[%s5 + $0x2440] sm:$0xff]
        %v2620 = vld [vmem:[%s5 + $0x2448] sm:$0xff]
        %v2621 = vld [vmem:[%s5 + $0x2450] sm:$0xff]
        %v2622 = vld [vmem:[%s5 + $0x2458] sm:$0xff]
        %v2623 = vld [vmem:[%s5 + $0x2460] sm:$0xff]
        %v2624 = vld [vmem:[%s5 + $0x2468] sm:$0xff]
        %v2625 = vld [vmem:[%s5 + $0x2470] sm:$0xff]
        %v2626 = vld [vmem:[%s5 + $0x2478] sm:$0xff]
        %v2627 = vld [vmem:[%s5 + $0x2480] sm:$0xff]
        %v2628 = vld [vmem:[%s5 + $0x2488] sm:$0xff]
        %v2629 = vld [vmem:[%s5 + $0x2490] sm:$0xff]
        %v2630 = vld [vmem:[%s5 + $0x2498] sm:$0xff]
        %v2631 = vld [vmem:[%s5 + $0x24a0] sm:$0xff]
        %v2632 = vld [vmem:[%s5 + $0x24a8] sm:$0xff]
        %v2633 = vld [vmem:[%s5 + $0x24b0] sm:$0xff]
        %v2634 = vld [vmem:[%s5 + $0x24b8] sm:$0xff]
        %v2635 = vld [vmem:[%s5 + $0x24c0] sm:$0xff]
        %v2636 = vld [vmem:[%s5 + $0x24c8] sm:$0xff]
        %v2637 = vld [vmem:[%s5 + $0x24d0] sm:$0xff]
        %v2638 = vld [vmem:[%s5 + $0x24d8] sm:$0xff]
        %v2639 = vld [vmem:[%s5 + $0x24e0] sm:$0xff]
        %v2640 = vld [vmem:[%s5 + $0x24e8] sm:$0xff]
        %v2641 = vld [vmem:[%s5 + $0x24f0] sm:$0xff]
        %v2642 = vld [vmem:[%s5 + $0x24f8] sm:$0xff]
        %v2643 = vld [vmem:[%s5 + $0x2500] sm:$0xff]
        %v2644 = vld [vmem:[%s5 + $0x2508] sm:$0xff]
        %v2645 = vld [vmem:[%s5 + $0x2510] sm:$0xff]
        %v2646 = vld [vmem:[%s5 + $0x2518] sm:$0xff]
        %v2647 = vld [vmem:[%s5 + $0x2520] sm:$0xff]
        %v2648 = vld [vmem:[%s5 + $0x2528] sm:$0xff]
        %v2649 = vld [vmem:[%s5 + $0x2530] sm:$0xff]
        %v2650 = vld [vmem:[%s5 + $0x2538] sm:$0xff]
        %v2651 = vld [vmem:[%s5 + $0x2540] sm:$0xff]
        %v2652 = vld [vmem:[%s5 + $0x2548] sm:$0xff]
        %v2653 = vld [vmem:[%s5 + $0x2550] sm:$0xff]
        %v2654 = vld [vmem:[%s5 + $0x2558] sm:$0xff]
        %v2655 = vld [vmem:[%s5 + $0x2560] sm:$0xff]
        %v2656 = vld [vmem:[%s5 + $0x2568] sm:$0xff]
        %v2657 = vld [vmem:[%s5 + $0x2570] sm:$0xff]
        %v2658 = vld [vmem:[%s5 + $0x2578] sm:$0xff]
        %v2659 = vld [vmem:[%s5 + $0x2580] sm:$0xff]
        %v2660 = vld [vmem:[%s5 + $0x2588] sm:$0xff]
        %v2661 = vld [vmem:[%s5 + $0x2590] sm:$0xff]
        %v2662 = vld [vmem:[%s5 + $0x2598] sm:$0xff]
        %v2663 = vld [vmem:[%s5 + $0x25a0] sm:$0xff]
        %v2664 = vld [vmem:[%s5 + $0x25a8] sm:$0xff]
        %v2665 = vld [vmem:[%s5 + $0x25b0] sm:$0xff]
        %v2666 = vld [vmem:[%s5 + $0x25b8] sm:$0xff]
        %v2667 = vld [vmem:[%s5 + $0x25c0] sm:$0xff]
        %v2668 = vld [vmem:[%s5 + $0x25c8] sm:$0xff]
        %v2669 = vld [vmem:[%s5 + $0x25d0] sm:$0xff]
        %v2670 = vld [vmem:[%s5 + $0x25d8] sm:$0xff]
        %v2671 = vld [vmem:[%s5 + $0x25e0] sm:$0xff]
        %v2672 = vld [vmem:[%s5 + $0x25e8] sm:$0xff]
        %v2673 = vld [vmem:[%s5 + $0x25f0] sm:$0xff]
        %v2674 = vld [vmem:[%s5 + $0x25f8] sm:$0xff]
        %v2675 = vld [vmem:[%s5 + $0x2600] sm:$0xff]
        %v2676 = vld [vmem:[%s5 + $0x2608] sm:$0xff]
        %v2677 = vld [vmem:[%s5 + $0x2610] sm:$0xff]
        %v2678 = vld [vmem:[%s5 + $0x2618] sm:$0xff]
        %v2679 = vld [vmem:[%s5 + $0x2620] sm:$0xff]
        %v2680 = vld [vmem:[%s5 + $0x2628] sm:$0xff]
        %v2681 = vld [vmem:[%s5 + $0x2630] sm:$0xff]
        %v2682 = vld [vmem:[%s5 + $0x2638] sm:$0xff]
        %v2683 = vld [vmem:[%s5 + $0x2640] sm:$0xff]
        %v2684 = vld [vmem:[%s5 + $0x2648] sm:$0xff]
        %v2685 = vld [vmem:[%s5 + $0x2650] sm:$0xff]
        %v2686 = vld [vmem:[%s5 + $0x2658] sm:$0xff]
        %v2687 = vld [vmem:[%s5 + $0x2660] sm:$0xff]
        %v2688 = vld [vmem:[%s5 + $0x2668] sm:$0xff]
        %v2689 = vld [vmem:[%s5 + $0x2670] sm:$0xff]
        %v2690 = vld [vmem:[%s5 + $0x2678] sm:$0xff]
        %v2691 = vld [vmem:[%s5 + $0x2680] sm:$0xff]
        %v2692 = vld [vmem:[%s5 + $0x2688] sm:$0xff]
        %v2693 = vld [vmem:[%s5 + $0x2690] sm:$0xff]
        %v2694 = vld [vmem:[%s5 + $0x2698] sm:$0xff]
        %v2695 = vld [vmem:[%s5 + $0x26a0] sm:$0xff]
        %v2696 = vld [vmem:[%s5 + $0x26a8] sm:$0xff]
        %v2697 = vld [vmem:[%s5 + $0x26b0] sm:$0xff]
        %v2698 = vld [vmem:[%s5 + $0x26b8] sm:$0xff]
        %v2699 = vld [vmem:[%s5 + $0x26c0] sm:$0xff]
        %v2700 = vld [vmem:[%s5 + $0x26c8] sm:$0xff]
        %v2701 = vld [vmem:[%s5 + $0x26d0] sm:$0xff]
        %v2702 = vld [vmem:[%s5 + $0x26d8] sm:$0xff]
        %v2703 = vld [vmem:[%s5 + $0x26e0] sm:$0xff]
        %v2704 = vld [vmem:[%s5 + $0x26e8] sm:$0xff]
        %v2705 = vld [vmem:[%s5 + $0x26f0] sm:$0xff]
        %v2706 = vld [vmem:[%s5 + $0x26f8] sm:$0xff]
        %v2707 = vld [vmem:[%s5 + $0x2700] sm:$0xff]
        %v2708 = vld [vmem:[%s5 + $0x2708] sm:$0xff]
        %v2709 = vld [vmem:[%s5 + $0x2710] sm:$0xff]
        %v2710 = vld [vmem:[%s5 + $0x2718] sm:$0xff]
        %v2711 = vld [vmem:[%s5 + $0x2720] sm:$0xff]
        %v2712 = vld [vmem:[%s5 + $0x2728] sm:$0xff]
        %v2713 = vld [vmem:[%s5 + $0x2730] sm:$0xff]
        %v2714 = vld [vmem:[%s5 + $0x2738] sm:$0xff]
        %v2715 = vld [vmem:[%s5 + $0x2740] sm:$0xff]
        %v2716 = vld [vmem:[%s5 + $0x2748] sm:$0xff]
        %v2717 = vld [vmem:[%s5 + $0x2750] sm:$0xff]
        %v2718 = vld [vmem:[%s5 + $0x2758] sm:$0xff]
        %v2719 = vld [vmem:[%s5 + $0x2760] sm:$0xff]
        %v2720 = vld [vmem:[%s5 + $0x2768] sm:$0xff]
        %v2721 = vld [vmem:[%s5 + $0x2770] sm:$0xff]
        %v2722 = vld [vmem:[%s5 + $0x2778] sm:$0xff]
        %v2723 = vld [vmem:[%s5 + $0x2780] sm:$0xff]
        %v2724 = vld [vmem:[%s5 + $0x2788] sm:$0xff]
        %v2725 = vld [vmem:[%s5 + $0x2790] sm:$0xff]
        %v2726 = vld [vmem:[%s5 + $0x2798] sm:$0xff]
        %v2727 = vld [vmem:[%s5 + $0x27a0] sm:$0xff]
        %v2728 = vld [vmem:[%s5 + $0x27a8] sm:$0xff]
        %v2729 = vld [vmem:[%s5 + $0x27b0] sm:$0xff]
        %v2730 = vld [vmem:[%s5 + $0x27b8] sm:$0xff]
        %v2731 = vld [vmem:[%s5 + $0x27c0] sm:$0xff]
        %v2732 = vld [vmem:[%s5 + $0x27c8] sm:$0xff]
        %v2733 = vld [vmem:[%s5 + $0x27d0] sm:$0xff]
        %v2734 = vld [vmem:[%s5 + $0x27d8] sm:$0xff]
        %v2735 = vld [vmem:[%s5 + $0x27e0] sm:$0xff]
        %v2736 = vld [vmem:[%s5 + $0x27e8] sm:$0xff]
        %v2737 = vld [vmem:[%s5 + $0x27f0] sm:$0xff]
        %v2738 = vld [vmem:[%s5 + $0x27f8] sm:$0xff]
        %v2739 = vld [vmem:[%s5 + $0x2800] sm:$0xff]
        %v2740 = vld [vmem:[%s5 + $0x2808] sm:$0xff]
        %v2741 = vld [vmem:[%s5 + $0x2810] sm:$0xff]
        %v2742 = vld [vmem:[%s5 + $0x2818] sm:$0xff]
        %v2743 = vld [vmem:[%s5 + $0x2820] sm:$0xff]
        %v2744 = vld [vmem:[%s5 + $0x2828] sm:$0xff]
        %v2745 = vld [vmem:[%s5 + $0x2830] sm:$0xff]
        %v2746 = vld [vmem:[%s5 + $0x2838] sm:$0xff]
        %v2747 = vld [vmem:[%s5 + $0x2840] sm:$0xff]
        %v2748 = vld [vmem:[%s5 + $0x2848] sm:$0xff]
        %v2749 = vld [vmem:[%s5 + $0x2850] sm:$0xff]
        %v2750 = vld [vmem:[%s5 + $0x2858] sm:$0xff]
        %v2751 = vld [vmem:[%s5 + $0x2860] sm:$0xff]
        %v2752 = vld [vmem:[%s5 + $0x2868] sm:$0xff]
        %v2753 = vld [vmem:[%s5 + $0x2870] sm:$0xff]
        %v2754 = vld [vmem:[%s5 + $0x2878] sm:$0xff]
        %v2755 = vld [vmem:[%s5 + $0x2880] sm:$0xff]
        %v2756 = vld [vmem:[%s5 + $0x2888] sm:$0xff]
        %v2757 = vld [vmem:[%s5 + $0x2890] sm:$0xff]
        %v2758 = vld [vmem:[%s5 + $0x2898] sm:$0xff]
        %v2759 = vld [vmem:[%s5 + $0x28a0] sm:$0xff]
        %v2760 = vld [vmem:[%s5 + $0x28a8] sm:$0xff]
        %v2761 = vld [vmem:[%s5 + $0x28b0] sm:$0xff]
        %v2762 = vld [vmem:[%s5 + $0x28b8] sm:$0xff]
        %v2763 = vld [vmem:[%s5 + $0x28c0] sm:$0xff]
        %v2764 = vld [vmem:[%s5 + $0x28c8] sm:$0xff]
        %v2765 = vld [vmem:[%s5 + $0x28d0] sm:$0xff]
        %v2766 = vld [vmem:[%s5 + $0x28d8] sm:$0xff]
        %v2767 = vld [vmem:[%s5 + $0x28e0] sm:$0xff]
        %v2768 = vld [vmem:[%s5 + $0x28e8] sm:$0xff]
        %v2769 = vld [vmem:[%s5 + $0x28f0] sm:$0xff]
        %v2770 = vld [vmem:[%s5 + $0x28f8] sm:$0xff]
        %v2771 = vld [vmem:[%s5 + $0x2900] sm:$0xff]
        %v2772 = vld [vmem:[%s5 + $0x2908] sm:$0xff]
        %v2773 = vld [vmem:[%s5 + $0x2910] sm:$0xff]
        %v2774 = vld [vmem:[%s5 + $0x2918] sm:$0xff]
        %v2775 = vld [vmem:[%s5 + $0x2920] sm:$0xff]
        %v2776 = vld [vmem:[%s5 + $0x2928] sm:$0xff]
        %v2777 = vld [vmem:[%s5 + $0x2930] sm:$0xff]
        %v2778 = vld [vmem:[%s5 + $0x2938] sm:$0xff]
        %v2779 = vld [vmem:[%s5 + $0x2940] sm:$0xff]
        %v2780 = vld [vmem:[%s5 + $0x2948] sm:$0xff]
        %v2781 = vld [vmem:[%s5 + $0x2950] sm:$0xff]
        %v2782 = vld [vmem:[%s5 + $0x2958] sm:$0xff]
        %v2783 = vld [vmem:[%s5 + $0x2960] sm:$0xff]
        %v2784 = vld [vmem:[%s5 + $0x2968] sm:$0xff]
        %v2785 = vld [vmem:[%s5 + $0x2970] sm:$0xff]
        %v2786 = vld [vmem:[%s5 + $0x2978] sm:$0xff]
        %v2787 = vld [vmem:[%s5 + $0x2980] sm:$0xff]
        %v2788 = vld [vmem:[%s5 + $0x2988] sm:$0xff]
        %v2789 = vld [vmem:[%s5 + $0x2990] sm:$0xff]
        %v2790 = vld [vmem:[%s5 + $0x2998] sm:$0xff]
        %v2791 = vld [vmem:[%s5 + $0x29a0] sm:$0xff]
        %v2792 = vld [vmem:[%s5 + $0x29a8] sm:$0xff]
        %v2793 = vld [vmem:[%s5 + $0x29b0] sm:$0xff]
        %v2794 = vld [vmem:[%s5 + $0x29b8] sm:$0xff]
        %v2795 = vld [vmem:[%s5 + $0x29c0] sm:$0xff]
        %v2796 = vld [vmem:[%s5 + $0x29c8] sm:$0xff]
        %v2797 = vld [vmem:[%s5 + $0x29d0] sm:$0xff]
        %v2798 = vld [vmem:[%s5 + $0x29d8] sm:$0xff]
        %v2799 = vld [vmem:[%s5 + $0x29e0] sm:$0xff]
        %v2800 = vld [vmem:[%s5 + $0x29e8] sm:$0xff]
        %v2801 = vld [vmem:[%s5 + $0x29f0] sm:$0xff]
        %v2802 = vld [vmem:[%s5 + $0x29f8] sm:$0xff]
        %v2803 = vld [vmem:[%s5 + $0x2a00] sm:$0xff]
        %v2804 = vld [vmem:[%s5 + $0x2a08] sm:$0xff]
        %v2805 = vld [vmem:[%s5 + $0x2a10] sm:$0xff]
        %v2806 = vld [vmem:[%s5 + $0x2a18] sm:$0xff]
        %v2807 = vld [vmem:[%s5 + $0x2a20] sm:$0xff]
        %v2808 = vld [vmem:[%s5 + $0x2a28] sm:$0xff]
        %v2809 = vld [vmem:[%s5 + $0x2a30] sm:$0xff]
        %v2810 = vld [vmem:[%s5 + $0x2a38] sm:$0xff]
        %v2811 = vld [vmem:[%s5 + $0x2a40] sm:$0xff]
        %v2812 = vld [vmem:[%s5 + $0x2a48] sm:$0xff]
        %v2813 = vld [vmem:[%s5 + $0x2a50] sm:$0xff]
        %v2814 = vld [vmem:[%s5 + $0x2a58] sm:$0xff]
        %v2815 = vld [vmem:[%s5 + $0x2a60] sm:$0xff]
        %v2816 = vld [vmem:[%s5 + $0x2a68] sm:$0xff]
        %v2817 = vld [vmem:[%s5 + $0x2a70] sm:$0xff]
        %v2818 = vld [vmem:[%s5 + $0x2a78] sm:$0xff]
        %v2819 = vld [vmem:[%s5 + $0x2a80] sm:$0xff]
        %v2820 = vld [vmem:[%s5 + $0x2a88] sm:$0xff]
        %v2821 = vld [vmem:[%s5 + $0x2a90] sm:$0xff]
        %v2822 = vld [vmem:[%s5 + $0x2a98] sm:$0xff]
        %v2823 = vld [vmem:[%s5 + $0x2aa0] sm:$0xff]
        %v2824 = vld [vmem:[%s5 + $0x2aa8] sm:$0xff]
        %v2825 = vld [vmem:[%s5 + $0x2ab0] sm:$0xff]
        %v2826 = vld [vmem:[%s5 + $0x2ab8] sm:$0xff]
        %v2827 = vld [vmem:[%s5 + $0x2ac0] sm:$0xff]
        %v2828 = vld [vmem:[%s5 + $0x2ac8] sm:$0xff]
        %v2829 = vld [vmem:[%s5 + $0x2ad0] sm:$0xff]
        %v2830 = vld [vmem:[%s5 + $0x2ad8] sm:$0xff]
        %v2831 = vld [vmem:[%s5 + $0x2ae0] sm:$0xff]
        %v2832 = vld [vmem:[%s5 + $0x2ae8] sm:$0xff]
        %v2833 = vld [vmem:[%s5 + $0x2af0] sm:$0xff]
        %v2834 = vld [vmem:[%s5 + $0x2af8] sm:$0xff]
        %v2835 = vld [vmem:[%s5 + $0x2b00] sm:$0xff]
        %v2836 = vld [vmem:[%s5 + $0x2b08] sm:$0xff]
        %v2837 = vld [vmem:[%s5 + $0x2b10] sm:$0xff]
        %v2838 = vld [vmem:[%s5 + $0x2b18] sm:$0xff]
        %v2839 = vld [vmem:[%s5 + $0x2b20] sm:$0xff]
        %v2840 = vld [vmem:[%s5 + $0x2b28] sm:$0xff]
        %v2841 = vld [vmem:[%s5 + $0x2b30] sm:$0xff]
        %v2842 = vld [vmem:[%s5 + $0x2b38] sm:$0xff]
        %v2843 = vld [vmem:[%s5 + $0x2b40] sm:$0xff]
        %v2844 = vld [vmem:[%s5 + $0x2b48] sm:$0xff]
        %v2845 = vld [vmem:[%s5 + $0x2b50] sm:$0xff]
        %v2846 = vld [vmem:[%s5 + $0x2b58] sm:$0xff]
        %v2847 = vld [vmem:[%s5 + $0x2b60] sm:$0xff]
        %v2848 = vld [vmem:[%s5 + $0x2b68] sm:$0xff]
        %v2849 = vld [vmem:[%s5 + $0x2b70] sm:$0xff]
        %v2850 = vld [vmem:[%s5 + $0x2b78] sm:$0xff]
        %v2851 = vld [vmem:[%s5 + $0x2b80] sm:$0xff]
        %v2852 = vld [vmem:[%s5 + $0x2b88] sm:$0xff]
        %v2853 = vld [vmem:[%s5 + $0x2b90] sm:$0xff]
        %v2854 = vld [vmem:[%s5 + $0x2b98] sm:$0xff]
        %v2855 = vld [vmem:[%s5 + $0x2ba0] sm:$0xff]
        %v2856 = vld [vmem:[%s5 + $0x2ba8] sm:$0xff]
        %v2857 = vld [vmem:[%s5 + $0x2bb0] sm:$0xff]
        %v2858 = vld [vmem:[%s5 + $0x2bb8] sm:$0xff]
        %v2859 = vld [vmem:[%s5 + $0x2bc0] sm:$0xff]
        %v2860 = vld [vmem:[%s5 + $0x2bc8] sm:$0xff]
        %v2861 = vld [vmem:[%s5 + $0x2bd0] sm:$0xff]
        %v2862 = vld [vmem:[%s5 + $0x2bd8] sm:$0xff]
        %v2863 = vld [vmem:[%s5 + $0x2be0] sm:$0xff]
        %v2864 = vld [vmem:[%s5 + $0x2be8] sm:$0xff]
        %v2865 = vld [vmem:[%s5 + $0x2bf0] sm:$0xff]
        %v2866 = vld [vmem:[%s5 + $0x2bf8] sm:$0xff]
        %v2867 = vld [vmem:[%s5 + $0x2c00] sm:$0xff]
        %v2868 = vld [vmem:[%s5 + $0x2c08] sm:$0xff]
        %v2869 = vld [vmem:[%s5 + $0x2c10] sm:$0xff]
        %v2870 = vld [vmem:[%s5 + $0x2c18] sm:$0xff]
        %v2871 = vld [vmem:[%s5 + $0x2c20] sm:$0xff]
        %v2872 = vld [vmem:[%s5 + $0x2c28] sm:$0xff]
        %v2873 = vld [vmem:[%s5 + $0x2c30] sm:$0xff]
        %v2874 = vld [vmem:[%s5 + $0x2c38] sm:$0xff]
        %v2875 = vld [vmem:[%s5 + $0x2c40] sm:$0xff]
        %v2876 = vld [vmem:[%s5 + $0x2c48] sm:$0xff]
        %v2877 = vld [vmem:[%s5 + $0x2c50] sm:$0xff]
        %v2878 = vld [vmem:[%s5 + $0x2c58] sm:$0xff]
        %v2879 = vld [vmem:[%s5 + $0x2c60] sm:$0xff]
        %v2880 = vld [vmem:[%s5 + $0x2c68] sm:$0xff]
        %v2881 = vld [vmem:[%s5 + $0x2c70] sm:$0xff]
        %v2882 = vld [vmem:[%s5 + $0x2c78] sm:$0xff]
        %v2883 = vld [vmem:[%s5 + $0x2c80] sm:$0xff]
        %v2884 = vld [vmem:[%s5 + $0x2c88] sm:$0xff]
        %v2885 = vld [vmem:[%s5 + $0x2c90] sm:$0xff]
        %v2886 = vld [vmem:[%s5 + $0x2c98] sm:$0xff]
        %v2887 = vld [vmem:[%s5 + $0x2ca0] sm:$0xff]
        %v2888 = vld [vmem:[%s5 + $0x2ca8] sm:$0xff]
        %v2889 = vld [vmem:[%s5 + $0x2cb0] sm:$0xff]
        %v2890 = vld [vmem:[%s5 + $0x2cb8] sm:$0xff]
        %v2891 = vld [vmem:[%s5 + $0x2cc0] sm:$0xff]
        %v2892 = vld [vmem:[%s5 + $0x2cc8] sm:$0xff]
        %v2893 = vld [vmem:[%s5 + $0x2cd0] sm:$0xff]
        %v2894 = vld [vmem:[%s5 + $0x2cd8] sm:$0xff]
        %v2895 = vld [vmem:[%s5 + $0x2ce0] sm:$0xff]
        %v2896 = vld [vmem:[%s5 + $0x2ce8] sm:$0xff]
        %v2897 = vld [vmem:[%s5 + $0x2cf0] sm:$0xff]
        %v2898 = vld [vmem:[%s5 + $0x2cf8] sm:$0xff]
        %v2899 = vld [vmem:[%s5 + $0x2d00] sm:$0xff]
        %v2900 = vld [vmem:[%s5 + $0x2d08] sm:$0xff]
        %v2901 = vld [vmem:[%s5 + $0x2d10] sm:$0xff]
        %v2902 = vld [vmem:[%s5 + $0x2d18] sm:$0xff]
        %v2903 = vld [vmem:[%s5 + $0x2d20] sm:$0xff]
        %v2904 = vld [vmem:[%s5 + $0x2d28] sm:$0xff]
        %v2905 = vld [vmem:[%s5 + $0x2d30] sm:$0xff]
        %v2906 = vld [vmem:[%s5 + $0x2d38] sm:$0xff]
        %v2907 = vld [vmem:[%s5 + $0x2d40] sm:$0xff]
        %v2908 = vld [vmem:[%s5 + $0x2d48] sm:$0xff]
        %v2909 = vld [vmem:[%s5 + $0x2d50] sm:$0xff]
        %v2910 = vld [vmem:[%s5 + $0x2d58] sm:$0xff]
        %v2911 = vld [vmem:[%s5 + $0x2d60] sm:$0xff]
        %v2912 = vld [vmem:[%s5 + $0x2d68] sm:$0xff]
        %v2913 = vld [vmem:[%s5 + $0x2d70] sm:$0xff]
        %v2914 = vld [vmem:[%s5 + $0x2d78] sm:$0xff]
        %v2915 = vld [vmem:[%s5 + $0x2d80] sm:$0xff]
        %v2916 = vld [vmem:[%s5 + $0x2d88] sm:$0xff]
        %v2917 = vld [vmem:[%s5 + $0x2d90] sm:$0xff]
        %v2918 = vld [vmem:[%s5 + $0x2d98] sm:$0xff]
        %v2919 = vld [vmem:[%s5 + $0x2da0] sm:$0xff]
        %v2920 = vld [vmem:[%s5 + $0x2da8] sm:$0xff]
        %v2921 = vld [vmem:[%s5 + $0x2db0] sm:$0xff]
        %v2922 = vld [vmem:[%s5 + $0x2db8] sm:$0xff]
        %v2923 = vld [vmem:[%s5 + $0x2dc0] sm:$0xff]
        %v2924 = vld [vmem:[%s5 + $0x2dc8] sm:$0xff]
        %v2925 = vld [vmem:[%s5 + $0x2dd0] sm:$0xff]
        %v2926 = vld [vmem:[%s5 + $0x2dd8] sm:$0xff]
        %v2927 = vld [vmem:[%s5 + $0x2de0] sm:$0xff]
        %v2928 = vld [vmem:[%s5 + $0x2de8] sm:$0xff]
        %v2929 = vld [vmem:[%s5 + $0x2df0] sm:$0xff]
        %v2930 = vld [vmem:[%s5 + $0x2df8] sm:$0xff]
        %v2931 = vld [vmem:[%s5 + $0x2e00] sm:$0xff]
        %v2932 = vld [vmem:[%s5 + $0x2e08] sm:$0xff]
        %v2933 = vld [vmem:[%s5 + $0x2e10] sm:$0xff]
        %v2934 = vld [vmem:[%s5 + $0x2e18] sm:$0xff]
        %v2935 = vld [vmem:[%s5 + $0x2e20] sm:$0xff]
        %v2936 = vld [vmem:[%s5 + $0x2e28] sm:$0xff]
        %v2937 = vld [vmem:[%s5 + $0x2e30] sm:$0xff]
        %v2938 = vld [vmem:[%s5 + $0x2e38] sm:$0xff]
        %v2939 = vld [vmem:[%s5 + $0x2e40] sm:$0xff]
        %v2940 = vld [vmem:[%s5 + $0x2e48] sm:$0xff]
        %v2941 = vld [vmem:[%s5 + $0x2e50] sm:$0xff]
        %v2942 = vld [vmem:[%s5 + $0x2e58] sm:$0xff]
        %v2943 = vld [vmem:[%s5 + $0x2e60] sm:$0xff]
        %v2944 = vld [vmem:[%s5 + $0x2e68] sm:$0xff]
        %v2945 = vld [vmem:[%s5 + $0x2e70] sm:$0xff]
        %v2946 = vld [vmem:[%s5 + $0x2e78] sm:$0xff]
        %v2947 = vld [vmem:[%s5 + $0x2e80] sm:$0xff]
        %v2948 = vld [vmem:[%s5 + $0x2e88] sm:$0xff]
        %v2949 = vld [vmem:[%s5 + $0x2e90] sm:$0xff]
        %v2950 = vld [vmem:[%s5 + $0x2e98] sm:$0xff]
        %v2951 = vld [vmem:[%s5 + $0x2ea0] sm:$0xff]
        %v2952 = vld [vmem:[%s5 + $0x2ea8] sm:$0xff]
        %v2953 = vld [vmem:[%s5 + $0x2eb0] sm:$0xff]
        %v2954 = vld [vmem:[%s5 + $0x2eb8] sm:$0xff]
        %v2955 = vld [vmem:[%s5 + $0x2ec0] sm:$0xff]
        %v2956 = vld [vmem:[%s5 + $0x2ec8] sm:$0xff]
        %v2957 = vld [vmem:[%s5 + $0x2ed0] sm:$0xff]
        %v2958 = vld [vmem:[%s5 + $0x2ed8] sm:$0xff]
        %v2959 = vld [vmem:[%s5 + $0x2ee0] sm:$0xff]
        %v2960 = vld [vmem:[%s5 + $0x2ee8] sm:$0xff]
        %v2961 = vld [vmem:[%s5 + $0x2ef0] sm:$0xff]
        %v2962 = vld [vmem:[%s5 + $0x2ef8] sm:$0xff]
        %v2963 = vld [vmem:[%s5 + $0x2f00] sm:$0xff]
        %v2964 = vld [vmem:[%s5 + $0x2f08] sm:$0xff]
        %v2965 = vld [vmem:[%s5 + $0x2f10] sm:$0xff]
        %v2966 = vld [vmem:[%s5 + $0x2f18] sm:$0xff]
        %v2967 = vld [vmem:[%s5 + $0x2f20] sm:$0xff]
        %v2968 = vld [vmem:[%s5 + $0x2f28] sm:$0xff]
        %v2969 = vld [vmem:[%s5 + $0x2f30] sm:$0xff]
        %v2970 = vld [vmem:[%s5 + $0x2f38] sm:$0xff]
        %v2971 = vld [vmem:[%s5 + $0x2f40] sm:$0xff]
        %v2972 = vld [vmem:[%s5 + $0x2f48] sm:$0xff]
        %v2973 = vld [vmem:[%s5 + $0x2f50] sm:$0xff]
        %v2974 = vld [vmem:[%s5 + $0x2f58] sm:$0xff]
        %v2975 = vld [vmem:[%s5 + $0x2f60] sm:$0xff]
        %v2976 = vld [vmem:[%s5 + $0x2f68] sm:$0xff]
        %v2977 = vld [vmem:[%s5 + $0x2f70] sm:$0xff]
        %v2978 = vld [vmem:[%s5 + $0x2f78] sm:$0xff]
        %v2979 = vld [vmem:[%s5 + $0x2f80] sm:$0xff]
        %v2980 = vld [vmem:[%s5 + $0x2f88] sm:$0xff]
        %v2981 = vld [vmem:[%s5 + $0x2f90] sm:$0xff]
        %v2982 = vld [vmem:[%s5 + $0x2f98] sm:$0xff]
        %v2983 = vld [vmem:[%s5 + $0x2fa0] sm:$0xff]
        %v2984 = vld [vmem:[%s5 + $0x2fa8] sm:$0xff]
        %v2985 = vld [vmem:[%s5 + $0x2fb0] sm:$0xff]
        %v2986 = vld [vmem:[%s5 + $0x2fb8] sm:$0xff]
        %v2987 = vld [vmem:[%s5 + $0x2fc0] sm:$0xff]
        %v2988 = vld [vmem:[%s5 + $0x2fc8] sm:$0xff]
        %v2989 = vld [vmem:[%s5 + $0x2fd0] sm:$0xff]
        %v2990 = vld [vmem:[%s5 + $0x2fd8] sm:$0xff]
        %v2991 = vld [vmem:[%s5 + $0x2fe0] sm:$0xff]
        %v2992 = vld [vmem:[%s5 + $0x2fe8] sm:$0xff]
        %v2993 = vld [vmem:[%s5 + $0x2ff0] sm:$0xff]
        %v2994 = vld [vmem:[%s5 + $0x2ff8] sm:$0xff]
        %v2995 = vld [vmem:[%s6] sm:$0x3f]
        %v2997 = vperm.slane %v2995, 0
        %v2998 = vperm.slane %v2995, 1
        %v2999 = vperm.slane %v2995, 2
        %v3000 = vperm.slane %v2995, 3
        %v3001 = vperm.slane %v2995, 4
        %v3002 = vperm.slane %v2995, 5
        %3009 = vmatpush.msra.mxu0 %v1549
        %3010 = vmatpush.msra.mxu0 %v1543
        %3011 = vmatpush.msra.mxu0 %v1537
        %3012 = vmatpush.msra.mxu0 %v1531
        %3013 = vmatpush.msra.mxu0 %v1525
        %3014 = vmatpush.msra.mxu0 %v1519
        %3015 = vmatpush.msra.mxu0 %v1513
        %3016 = vmatpush.msra.mxu0 %v1507
        %3017 = vmatpush.msra.mxu0 %v1501
        %3018 = vmatpush.msra.mxu0 %v1495
        %3019 = vmatpush.msra.mxu0 %v1489
        %3020 = vmatpush.msra.mxu0 %v1483
        %3021 = vmatpush.msra.mxu0 %v1477
        %3022 = vmatpush.msra.mxu0 %v1471
        %3023 = vmatpush.msra.mxu0 %v1465
        %3024 = vmatpush.msra.mxu0 %v1459
        %3025 = vmatmul.f32.gmra.mxu0 %v1279
        %v3026 = vpop.f32.mrf.mxu0
        %v3027 = vadd.f32 %v2997, %v3026
        %3028 = vdwg.mxu0
        %3029 = vmatpush.msra.mxu0 %v1645
        %3030 = vmatpush.msra.mxu0 %v1639
        %3031 = vmatpush.msra.mxu0 %v1633
        %3032 = vmatpush.msra.mxu0 %v1627
        %3033 = vmatpush.msra.mxu0 %v1621
        %3034 = vmatpush.msra.mxu0 %v1615
        %3035 = vmatpush.msra.mxu0 %v1609
        %3036 = vmatpush.msra.mxu0 %v1603
        %3037 = vmatpush.msra.mxu0 %v1597
        %3038 = vmatpush.msra.mxu0 %v1591
        %3039 = vmatpush.msra.mxu0 %v1585
        %3040 = vmatpush.msra.mxu0 %v1579
        %3041 = vmatpush.msra.mxu0 %v1573
        %3042 = vmatpush.msra.mxu0 %v1567
        %3043 = vmatpush.msra.mxu0 %v1561
        %3044 = vmatpush.msra.mxu0 %v1555
        %3045 = vmatmul.f32.gmra.mxu0 %v1280
        %v3046 = vpop.f32.mrf.mxu0
        %v3047 = vadd.f32 %v3027, %v3046
        %3048 = vdwg.mxu0
        %3049 = vmatpush.msra.mxu0 %v1741
        %3050 = vmatpush.msra.mxu0 %v1735
        %3051 = vmatpush.msra.mxu0 %v1729
        %3052 = vmatpush.msra.mxu0 %v1723
        %3053 = vmatpush.msra.mxu0 %v1717
        %3054 = vmatpush.msra.mxu0 %v1711
        %3055 = vmatpush.msra.mxu0 %v1705
        %3056 = vmatpush.msra.mxu0 %v1699
        %3057 = vmatpush.msra.mxu0 %v1693
        %3058 = vmatpush.msra.mxu0 %v1687
        %3059 = vmatpush.msra.mxu0 %v1681
        %3060 = vmatpush.msra.mxu0 %v1675
        %3061 = vmatpush.msra.mxu0 %v1669
        %3062 = vmatpush.msra.mxu0 %v1663
        %3063 = vmatpush.msra.mxu0 %v1657
        %3064 = vmatpush.msra.mxu0 %v1651
        %3065 = vmatmul.f32.gmra.mxu0 %v1281
        %v3066 = vpop.f32.mrf.mxu0
        %v3067 = vadd.f32 %v3047, %v3066
        %3068 = vdwg.mxu0
        %3069 = vmatpush.msra.mxu0 %v1837
        %3070 = vmatpush.msra.mxu0 %v1831
        %3071 = vmatpush.msra.mxu0 %v1825
        %3072 = vmatpush.msra.mxu0 %v1819
        %3073 = vmatpush.msra.mxu0 %v1813
        %3074 = vmatpush.msra.mxu0 %v1807
        %3075 = vmatpush.msra.mxu0 %v1801
        %3076 = vmatpush.msra.mxu0 %v1795
        %3077 = vmatpush.msra.mxu0 %v1789
        %3078 = vmatpush.msra.mxu0 %v1783
        %3079 = vmatpush.msra.mxu0 %v1777
        %3080 = vmatpush.msra.mxu0 %v1771
        %3081 = vmatpush.msra.mxu0 %v1765
        %3082 = vmatpush.msra.mxu0 %v1759
        %3083 = vmatpush.msra.mxu0 %v1753
        %3084 = vmatpush.msra.mxu0 %v1747
        %3085 = vmatmul.f32.gmra.mxu0 %v1282
        %v3086 = vpop.f32.mrf.mxu0
        %v3087 = vadd.f32 %v3067, %v3086
        %3088 = vdwg.mxu0
        %3089 = vmatpush.msra.mxu0 %v1933
        %3090 = vmatpush.msra.mxu0 %v1927
        %3091 = vmatpush.msra.mxu0 %v1921
        %3092 = vmatpush.msra.mxu0 %v1915
        %3093 = vmatpush.msra.mxu0 %v1909
        %3094 = vmatpush.msra.mxu0 %v1903
        %3095 = vmatpush.msra.mxu0 %v1897
        %3096 = vmatpush.msra.mxu0 %v1891
        %3097 = vmatpush.msra.mxu0 %v1885
        %3098 = vmatpush.msra.mxu0 %v1879
        %3099 = vmatpush.msra.mxu0 %v1873
        %3100 = vmatpush.msra.mxu0 %v1867
        %3101 = vmatpush.msra.mxu0 %v1861
        %3102 = vmatpush.msra.mxu0 %v1855
        %3103 = vmatpush.msra.mxu0 %v1849
        %3104 = vmatpush.msra.mxu0 %v1843
        %3105 = vmatmul.f32.gmra.mxu0 %v1283
        %v3106 = vpop.f32.mrf.mxu0
        %v3107 = vadd.f32 %v3087, %v3106
        %3108 = vdwg.mxu0
        %3109 = vmatpush.msra.mxu0 %v2029
        %3110 = vmatpush.msra.mxu0 %v2023
        %3111 = vmatpush.msra.mxu0 %v2017
        %3112 = vmatpush.msra.mxu0 %v2011
        %3113 = vmatpush.msra.mxu0 %v2005
        %3114 = vmatpush.msra.mxu0 %v1999
        %3115 = vmatpush.msra.mxu0 %v1993
        %3116 = vmatpush.msra.mxu0 %v1987
        %3117 = vmatpush.msra.mxu0 %v1981
        %3118 = vmatpush.msra.mxu0 %v1975
        %3119 = vmatpush.msra.mxu0 %v1969
        %3120 = vmatpush.msra.mxu0 %v1963
        %3121 = vmatpush.msra.mxu0 %v1957
        %3122 = vmatpush.msra.mxu0 %v1951
        %3123 = vmatpush.msra.mxu0 %v1945
        %3124 = vmatpush.msra.mxu0 %v1939
        %3125 = vmatmul.f32.gmra.mxu0 %v1284
        %v3126 = vpop.f32.mrf.mxu0
        %v3127 = vadd.f32 %v3107, %v3126
        %3128 = vdwg.mxu0
        %3129 = vmatpush.msra.mxu0 %v2125
        %3130 = vmatpush.msra.mxu0 %v2119
        %3131 = vmatpush.msra.mxu0 %v2113
        %3132 = vmatpush.msra.mxu0 %v2107
        %3133 = vmatpush.msra.mxu0 %v2101
        %3134 = vmatpush.msra.mxu0 %v2095
        %3135 = vmatpush.msra.mxu0 %v2089
        %3136 = vmatpush.msra.mxu0 %v2083
        %3137 = vmatpush.msra.mxu0 %v2077
        %3138 = vmatpush.msra.mxu0 %v2071
        %3139 = vmatpush.msra.mxu0 %v2065
        %3140 = vmatpush.msra.mxu0 %v2059
        %3141 = vmatpush.msra.mxu0 %v2053
        %3142 = vmatpush.msra.mxu0 %v2047
        %3143 = vmatpush.msra.mxu0 %v2041
        %3144 = vmatpush.msra.mxu0 %v2035
        %3145 = vmatmul.f32.gmra.mxu0 %v1285
        %v3146 = vpop.f32.mrf.mxu0
        %v3147 = vadd.f32 %v3127, %v3146
        %3148 = vdwg.mxu0
        %3149 = vmatpush.msra.mxu0 %v2221
        %3150 = vmatpush.msra.mxu0 %v2215
        %3151 = vmatpush.msra.mxu0 %v2209
        %3152 = vmatpush.msra.mxu0 %v2203
        %3153 = vmatpush.msra.mxu0 %v2197
        %3154 = vmatpush.msra.mxu0 %v2191
        %3155 = vmatpush.msra.mxu0 %v2185
        %3156 = vmatpush.msra.mxu0 %v2179
        %3157 = vmatpush.msra.mxu0 %v2173
        %3158 = vmatpush.msra.mxu0 %v2167
        %3159 = vmatpush.msra.mxu0 %v2161
        %3160 = vmatpush.msra.mxu0 %v2155
        %3161 = vmatpush.msra.mxu0 %v2149
        %3162 = vmatpush.msra.mxu0 %v2143
        %3163 = vmatpush.msra.mxu0 %v2137
        %3164 = vmatpush.msra.mxu0 %v2131
        %3165 = vmatmul.f32.gmra.mxu0 %v1286
        %v3166 = vpop.f32.mrf.mxu0
        %v3167 = vadd.f32 %v3147, %v3166
        %3168 = vdwg.mxu0
        %3169 = vmatpush.msra.mxu0 %v2317
        %3170 = vmatpush.msra.mxu0 %v2311
        %3171 = vmatpush.msra.mxu0 %v2305
        %3172 = vmatpush.msra.mxu0 %v2299
        %3173 = vmatpush.msra.mxu0 %v2293
        %3174 = vmatpush.msra.mxu0 %v2287
        %3175 = vmatpush.msra.mxu0 %v2281
        %3176 = vmatpush.msra.mxu0 %v2275
        %3177 = vmatpush.msra.mxu0 %v2269
        %3178 = vmatpush.msra.mxu0 %v2263
        %3179 = vmatpush.msra.mxu0 %v2257
        %3180 = vmatpush.msra.mxu0 %v2251
        %3181 = vmatpush.msra.mxu0 %v2245
        %3182 = vmatpush.msra.mxu0 %v2239
        %3183 = vmatpush.msra.mxu0 %v2233
        %3184 = vmatpush.msra.mxu0 %v2227
        %3185 = vmatmul.f32.gmra.mxu0 %v1451
        %v3186 = vpop.f32.mrf.mxu0
        %v3187 = vadd.f32 %v3167, %v3186
        %3188 = vdwg.mxu0
        %3189 = vmatpush.msra.mxu0 %v2413
        %3190 = vmatpush.msra.mxu0 %v2407
        %3191 = vmatpush.msra.mxu0 %v2401
        %3192 = vmatpush.msra.mxu0 %v2395
        %3193 = vmatpush.msra.mxu0 %v2389
        %3194 = vmatpush.msra.mxu0 %v2383
        %3195 = vmatpush.msra.mxu0 %v2377
        %3196 = vmatpush.msra.mxu0 %v2371
        %3197 = vmatpush.msra.mxu0 %v2365
        %3198 = vmatpush.msra.mxu0 %v2359
        %3199 = vmatpush.msra.mxu0 %v2353
        %3200 = vmatpush.msra.mxu0 %v2347
        %3201 = vmatpush.msra.mxu0 %v2341
        %3202 = vmatpush.msra.mxu0 %v2335
        %3203 = vmatpush.msra.mxu0 %v2329
        %3204 = vmatpush.msra.mxu0 %v2323
        %3205 = vmatmul.f32.gmra.mxu0 %v1452
        %v3206 = vpop.f32.mrf.mxu0
        %v3207 = vadd.f32 %v3187, %v3206
        %3208 = vdwg.mxu0
        %3209 = vmatpush.msra.mxu0 %v2509
        %3210 = vmatpush.msra.mxu0 %v2503
        %3211 = vmatpush.msra.mxu0 %v2497
        %3212 = vmatpush.msra.mxu0 %v2491
        %3213 = vmatpush.msra.mxu0 %v2485
        %3214 = vmatpush.msra.mxu0 %v2479
        %3215 = vmatpush.msra.mxu0 %v2473
        %3216 = vmatpush.msra.mxu0 %v2467
        %3217 = vmatpush.msra.mxu0 %v2461
        %3218 = vmatpush.msra.mxu0 %v2455
        %3219 = vmatpush.msra.mxu0 %v2449
        %3220 = vmatpush.msra.mxu0 %v2443
        %3221 = vmatpush.msra.mxu0 %v2437
        %3222 = vmatpush.msra.mxu0 %v2431
        %3223 = vmatpush.msra.mxu0 %v2425
        %3224 = vmatpush.msra.mxu0 %v2419
        %3225 = vmatmul.f32.gmra.mxu0 %v1453
        %v3226 = vpop.f32.mrf.mxu0
        %v3227 = vadd.f32 %v3207, %v3226
        %3228 = vdwg.mxu0
        %3229 = vmatpush.msra.mxu0 %v2605
        %3230 = vmatpush.msra.mxu0 %v2599
        %3231 = vmatpush.msra.mxu0 %v2593
        %3232 = vmatpush.msra.mxu0 %v2587
        %3233 = vmatpush.msra.mxu0 %v2581
        %3234 = vmatpush.msra.mxu0 %v2575
        %3235 = vmatpush.msra.mxu0 %v2569
        %3236 = vmatpush.msra.mxu0 %v2563
        %3237 = vmatpush.msra.mxu0 %v2557
        %3238 = vmatpush.msra.mxu0 %v2551
        %3239 = vmatpush.msra.mxu0 %v2545
        %3240 = vmatpush.msra.mxu0 %v2539
        %3241 = vmatpush.msra.mxu0 %v2533
        %3242 = vmatpush.msra.mxu0 %v2527
        %3243 = vmatpush.msra.mxu0 %v2521
        %3244 = vmatpush.msra.mxu0 %v2515
        %3245 = vmatmul.f32.gmra.mxu0 %v1454
        %v3246 = vpop.f32.mrf.mxu0
        %v3247 = vadd.f32 %v3227, %v3246
        %3248 = vdwg.mxu0
        %3249 = vmatpush.msra.mxu0 %v2701
        %3250 = vmatpush.msra.mxu0 %v2695
        %3251 = vmatpush.msra.mxu0 %v2689
        %3252 = vmatpush.msra.mxu0 %v2683
        %3253 = vmatpush.msra.mxu0 %v2677
        %3254 = vmatpush.msra.mxu0 %v2671
        %3255 = vmatpush.msra.mxu0 %v2665
        %3256 = vmatpush.msra.mxu0 %v2659
        %3257 = vmatpush.msra.mxu0 %v2653
        %3258 = vmatpush.msra.mxu0 %v2647
        %3259 = vmatpush.msra.mxu0 %v2641
        %3260 = vmatpush.msra.mxu0 %v2635
        %3261 = vmatpush.msra.mxu0 %v2629
        %3262 = vmatpush.msra.mxu0 %v2623
        %3263 = vmatpush.msra.mxu0 %v2617
        %3264 = vmatpush.msra.mxu0 %v2611
        %3265 = vmatmul.f32.gmra.mxu0 %v1455
        %v3266 = vpop.f32.mrf.mxu0
        %v3267 = vadd.f32 %v3247, %v3266
        %3268 = vdwg.mxu0
        %3269 = vmatpush.msra.mxu0 %v2797
        %3270 = vmatpush.msra.mxu0 %v2791
        %3271 = vmatpush.msra.mxu0 %v2785
        %3272 = vmatpush.msra.mxu0 %v2779
        %3273 = vmatpush.msra.mxu0 %v2773
        %3274 = vmatpush.msra.mxu0 %v2767
        %3275 = vmatpush.msra.mxu0 %v2761
        %3276 = vmatpush.msra.mxu0 %v2755
        %3277 = vmatpush.msra.mxu0 %v2749
        %3278 = vmatpush.msra.mxu0 %v2743
        %3279 = vmatpush.msra.mxu0 %v2737
        %3280 = vmatpush.msra.mxu0 %v2731
        %3281 = vmatpush.msra.mxu0 %v2725
        %3282 = vmatpush.msra.mxu0 %v2719
        %3283 = vmatpush.msra.mxu0 %v2713
        %3284 = vmatpush.msra.mxu0 %v2707
        %3285 = vmatmul.f32.gmra.mxu0 %v1456
        %v3286 = vpop.f32.mrf.mxu0
        %v3287 = vadd.f32 %v3267, %v3286
        %3288 = vdwg.mxu0
        %3289 = vmatpush.msra.mxu0 %v2893
        %3290 = vmatpush.msra.mxu0 %v2887
        %3291 = vmatpush.msra.mxu0 %v2881
        %3292 = vmatpush.msra.mxu0 %v2875
        %3293 = vmatpush.msra.mxu0 %v2869
        %3294 = vmatpush.msra.mxu0 %v2863
        %3295 = vmatpush.msra.mxu0 %v2857
        %3296 = vmatpush.msra.mxu0 %v2851
        %3297 = vmatpush.msra.mxu0 %v2845
        %3298 = vmatpush.msra.mxu0 %v2839
        %3299 = vmatpush.msra.mxu0 %v2833
        %3300 = vmatpush.msra.mxu0 %v2827
        %3301 = vmatpush.msra.mxu0 %v2821
        %3302 = vmatpush.msra.mxu0 %v2815
        %3303 = vmatpush.msra.mxu0 %v2809
        %3304 = vmatpush.msra.mxu0 %v2803
        %3305 = vmatmul.f32.gmra.mxu0 %v1457
        %v3306 = vpop.f32.mrf.mxu0
        %v3307 = vadd.f32 %v3287, %v3306
        %3308 = vdwg.mxu0
        %3309 = vmatpush.msra.mxu0 %v2989
        %3310 = vmatpush.msra.mxu0 %v2983
        %3311 = vmatpush.msra.mxu0 %v2977
        %3312 = vmatpush.msra.mxu0 %v2971
        %3313 = vmatpush.msra.mxu0 %v2965
        %3314 = vmatpush.msra.mxu0 %v2959
        %3315 = vmatpush.msra.mxu0 %v2953
        %3316 = vmatpush.msra.mxu0 %v2947
        %3317 = vmatpush.msra.mxu0 %v2941
        %3318 = vmatpush.msra.mxu0 %v2935
        %3319 = vmatpush.msra.mxu0 %v2929
        %3320 = vmatpush.msra.mxu0 %v2923
        %3321 = vmatpush.msra.mxu0 %v2917
        %3322 = vmatpush.msra.mxu0 %v2911
        %3323 = vmatpush.msra.mxu0 %v2905
        %3324 = vmatpush.msra.mxu0 %v2899
        %3325 = vmatmul.f32.gmra.mxu0 %v1458
        %v3326 = vpop.f32.mrf.mxu0
        %v3327 = vadd.f32 %v3307, %v3326
        %3328 = vdwg.mxu0
        %3329 = vmatpush.msra.mxu0 %v1550
        %3330 = vmatpush.msra.mxu0 %v1544
        %3331 = vmatpush.msra.mxu0 %v1538
        %3332 = vmatpush.msra.mxu0 %v1532
        %3333 = vmatpush.msra.mxu0 %v1526
        %3334 = vmatpush.msra.mxu0 %v1520
        %3335 = vmatpush.msra.mxu0 %v1514
        %3336 = vmatpush.msra.mxu0 %v1508
        %3337 = vmatpush.msra.mxu0 %v1502
        %3338 = vmatpush.msra.mxu0 %v1496
        %3339 = vmatpush.msra.mxu0 %v1490
        %3340 = vmatpush.msra.mxu0 %v1484
        %3341 = vmatpush.msra.mxu0 %v1478
        %3342 = vmatpush.msra.mxu0 %v1472
        %3343 = vmatpush.msra.mxu0 %v1466
        %3344 = vmatpush.msra.mxu0 %v1460
        %3345 = vmatmul.f32.gmra.mxu0 %v1279
        %v3346 = vpop.f32.mrf.mxu0
        %v3347 = vadd.f32 %v2998, %v3346
        %3348 = vdwg.mxu0
        %3349 = vmatpush.msra.mxu0 %v1646
        %3350 = vmatpush.msra.mxu0 %v1640
        %3351 = vmatpush.msra.mxu0 %v1634
        %3352 = vmatpush.msra.mxu0 %v1628
        %3353 = vmatpush.msra.mxu0 %v1622
        %3354 = vmatpush.msra.mxu0 %v1616
        %3355 = vmatpush.msra.mxu0 %v1610
        %3356 = vmatpush.msra.mxu0 %v1604
        %3357 = vmatpush.msra.mxu0 %v1598
        %3358 = vmatpush.msra.mxu0 %v1592
        %3359 = vmatpush.msra.mxu0 %v1586
        %3360 = vmatpush.msra.mxu0 %v1580
        %3361 = vmatpush.msra.mxu0 %v1574
        %3362 = vmatpush.msra.mxu0 %v1568
        %3363 = vmatpush.msra.mxu0 %v1562
        %3364 = vmatpush.msra.mxu0 %v1556
        %3365 = vmatmul.f32.gmra.mxu0 %v1280
        %v3366 = vpop.f32.mrf.mxu0
        %v3367 = vadd.f32 %v3347, %v3366
        %3368 = vdwg.mxu0
        %3369 = vmatpush.msra.mxu0 %v1742
        %3370 = vmatpush.msra.mxu0 %v1736
        %3371 = vmatpush.msra.mxu0 %v1730
        %3372 = vmatpush.msra.mxu0 %v1724
        %3373 = vmatpush.msra.mxu0 %v1718
        %3374 = vmatpush.msra.mxu0 %v1712
        %3375 = vmatpush.msra.mxu0 %v1706
        %3376 = vmatpush.msra.mxu0 %v1700
        %3377 = vmatpush.msra.mxu0 %v1694
        %3378 = vmatpush.msra.mxu0 %v1688
        %3379 = vmatpush.msra.mxu0 %v1682
        %3380 = vmatpush.msra.mxu0 %v1676
        %3381 = vmatpush.msra.mxu0 %v1670
        %3382 = vmatpush.msra.mxu0 %v1664
        %3383 = vmatpush.msra.mxu0 %v1658
        %3384 = vmatpush.msra.mxu0 %v1652
        %3385 = vmatmul.f32.gmra.mxu0 %v1281
        %v3386 = vpop.f32.mrf.mxu0
        %v3387 = vadd.f32 %v3367, %v3386
        %3388 = vdwg.mxu0
        %3389 = vmatpush.msra.mxu0 %v1838
        %3390 = vmatpush.msra.mxu0 %v1832
        %3391 = vmatpush.msra.mxu0 %v1826
        %3392 = vmatpush.msra.mxu0 %v1820
        %3393 = vmatpush.msra.mxu0 %v1814
        %3394 = vmatpush.msra.mxu0 %v1808
        %3395 = vmatpush.msra.mxu0 %v1802
        %3396 = vmatpush.msra.mxu0 %v1796
        %3397 = vmatpush.msra.mxu0 %v1790
        %3398 = vmatpush.msra.mxu0 %v1784
        %3399 = vmatpush.msra.mxu0 %v1778
        %3400 = vmatpush.msra.mxu0 %v1772
        %3401 = vmatpush.msra.mxu0 %v1766
        %3402 = vmatpush.msra.mxu0 %v1760
        %3403 = vmatpush.msra.mxu0 %v1754
        %3404 = vmatpush.msra.mxu0 %v1748
        %3405 = vmatmul.f32.gmra.mxu0 %v1282
        %v3406 = vpop.f32.mrf.mxu0
        %v3407 = vadd.f32 %v3387, %v3406
        %3408 = vdwg.mxu0
        %3409 = vmatpush.msra.mxu0 %v1934
        %3410 = vmatpush.msra.mxu0 %v1928
        %3411 = vmatpush.msra.mxu0 %v1922
        %3412 = vmatpush.msra.mxu0 %v1916
        %3413 = vmatpush.msra.mxu0 %v1910
        %3414 = vmatpush.msra.mxu0 %v1904
        %3415 = vmatpush.msra.mxu0 %v1898
        %3416 = vmatpush.msra.mxu0 %v1892
        %3417 = vmatpush.msra.mxu0 %v1886
        %3418 = vmatpush.msra.mxu0 %v1880
        %3419 = vmatpush.msra.mxu0 %v1874
        %3420 = vmatpush.msra.mxu0 %v1868
        %3421 = vmatpush.msra.mxu0 %v1862
        %3422 = vmatpush.msra.mxu0 %v1856
        %3423 = vmatpush.msra.mxu0 %v1850
        %3424 = vmatpush.msra.mxu0 %v1844
        %3425 = vmatmul.f32.gmra.mxu0 %v1283
        %v3426 = vpop.f32.mrf.mxu0
        %v3427 = vadd.f32 %v3407, %v3426
        %3428 = vdwg.mxu0
        %3429 = vmatpush.msra.mxu0 %v2030
        %3430 = vmatpush.msra.mxu0 %v2024
        %3431 = vmatpush.msra.mxu0 %v2018
        %3432 = vmatpush.msra.mxu0 %v2012
        %3433 = vmatpush.msra.mxu0 %v2006
        %3434 = vmatpush.msra.mxu0 %v2000
        %3435 = vmatpush.msra.mxu0 %v1994
        %3436 = vmatpush.msra.mxu0 %v1988
        %3437 = vmatpush.msra.mxu0 %v1982
        %3438 = vmatpush.msra.mxu0 %v1976
        %3439 = vmatpush.msra.mxu0 %v1970
        %3440 = vmatpush.msra.mxu0 %v1964
        %3441 = vmatpush.msra.mxu0 %v1958
        %3442 = vmatpush.msra.mxu0 %v1952
        %3443 = vmatpush.msra.mxu0 %v1946
        %3444 = vmatpush.msra.mxu0 %v1940
        %3445 = vmatmul.f32.gmra.mxu0 %v1284
        %v3446 = vpop.f32.mrf.mxu0
        %v3447 = vadd.f32 %v3427, %v3446
        %3448 = vdwg.mxu0
        %3449 = vmatpush.msra.mxu0 %v2126
        %3450 = vmatpush.msra.mxu0 %v2120
        %3451 = vmatpush.msra.mxu0 %v2114
        %3452 = vmatpush.msra.mxu0 %v2108
        %3453 = vmatpush.msra.mxu0 %v2102
        %3454 = vmatpush.msra.mxu0 %v2096
        %3455 = vmatpush.msra.mxu0 %v2090
        %3456 = vmatpush.msra.mxu0 %v2084
        %3457 = vmatpush.msra.mxu0 %v2078
        %3458 = vmatpush.msra.mxu0 %v2072
        %3459 = vmatpush.msra.mxu0 %v2066
        %3460 = vmatpush.msra.mxu0 %v2060
        %3461 = vmatpush.msra.mxu0 %v2054
        %3462 = vmatpush.msra.mxu0 %v2048
        %3463 = vmatpush.msra.mxu0 %v2042
        %3464 = vmatpush.msra.mxu0 %v2036
        %3465 = vmatmul.f32.gmra.mxu0 %v1285
        %v3466 = vpop.f32.mrf.mxu0
        %v3467 = vadd.f32 %v3447, %v3466
        %3468 = vdwg.mxu0
        %3469 = vmatpush.msra.mxu0 %v2222
        %3470 = vmatpush.msra.mxu0 %v2216
        %3471 = vmatpush.msra.mxu0 %v2210
        %3472 = vmatpush.msra.mxu0 %v2204
        %3473 = vmatpush.msra.mxu0 %v2198
        %3474 = vmatpush.msra.mxu0 %v2192
        %3475 = vmatpush.msra.mxu0 %v2186
        %3476 = vmatpush.msra.mxu0 %v2180
        %3477 = vmatpush.msra.mxu0 %v2174
        %3478 = vmatpush.msra.mxu0 %v2168
        %3479 = vmatpush.msra.mxu0 %v2162
        %3480 = vmatpush.msra.mxu0 %v2156
        %3481 = vmatpush.msra.mxu0 %v2150
        %3482 = vmatpush.msra.mxu0 %v2144
        %3483 = vmatpush.msra.mxu0 %v2138
        %3484 = vmatpush.msra.mxu0 %v2132
        %3485 = vmatmul.f32.gmra.mxu0 %v1286
        %v3486 = vpop.f32.mrf.mxu0
        %v3487 = vadd.f32 %v3467, %v3486
        %3488 = vdwg.mxu0
        %3489 = vmatpush.msra.mxu0 %v2318
        %3490 = vmatpush.msra.mxu0 %v2312
        %3491 = vmatpush.msra.mxu0 %v2306
        %3492 = vmatpush.msra.mxu0 %v2300
        %3493 = vmatpush.msra.mxu0 %v2294
        %3494 = vmatpush.msra.mxu0 %v2288
        %3495 = vmatpush.msra.mxu0 %v2282
        %3496 = vmatpush.msra.mxu0 %v2276
        %3497 = vmatpush.msra.mxu0 %v2270
        %3498 = vmatpush.msra.mxu0 %v2264
        %3499 = vmatpush.msra.mxu0 %v2258
        %3500 = vmatpush.msra.mxu0 %v2252
        %3501 = vmatpush.msra.mxu0 %v2246
        %3502 = vmatpush.msra.mxu0 %v2240
        %3503 = vmatpush.msra.mxu0 %v2234
        %3504 = vmatpush.msra.mxu0 %v2228
        %3505 = vmatmul.f32.gmra.mxu0 %v1451
        %v3506 = vpop.f32.mrf.mxu0
        %v3507 = vadd.f32 %v3487, %v3506
        %3508 = vdwg.mxu0
        %3509 = vmatpush.msra.mxu0 %v2414
        %3510 = vmatpush.msra.mxu0 %v2408
        %3511 = vmatpush.msra.mxu0 %v2402
        %3512 = vmatpush.msra.mxu0 %v2396
        %3513 = vmatpush.msra.mxu0 %v2390
        %3514 = vmatpush.msra.mxu0 %v2384
        %3515 = vmatpush.msra.mxu0 %v2378
        %3516 = vmatpush.msra.mxu0 %v2372
        %3517 = vmatpush.msra.mxu0 %v2366
        %3518 = vmatpush.msra.mxu0 %v2360
        %3519 = vmatpush.msra.mxu0 %v2354
        %3520 = vmatpush.msra.mxu0 %v2348
        %3521 = vmatpush.msra.mxu0 %v2342
        %3522 = vmatpush.msra.mxu0 %v2336
        %3523 = vmatpush.msra.mxu0 %v2330
        %3524 = vmatpush.msra.mxu0 %v2324
        %3525 = vmatmul.f32.gmra.mxu0 %v1452
        %v3526 = vpop.f32.mrf.mxu0
        %v3527 = vadd.f32 %v3507, %v3526
        %3528 = vdwg.mxu0
        %3529 = vmatpush.msra.mxu0 %v2510
        %3530 = vmatpush.msra.mxu0 %v2504
        %3531 = vmatpush.msra.mxu0 %v2498
        %3532 = vmatpush.msra.mxu0 %v2492
        %3533 = vmatpush.msra.mxu0 %v2486
        %3534 = vmatpush.msra.mxu0 %v2480
        %3535 = vmatpush.msra.mxu0 %v2474
        %3536 = vmatpush.msra.mxu0 %v2468
        %3537 = vmatpush.msra.mxu0 %v2462
        %3538 = vmatpush.msra.mxu0 %v2456
        %3539 = vmatpush.msra.mxu0 %v2450
        %3540 = vmatpush.msra.mxu0 %v2444
        %3541 = vmatpush.msra.mxu0 %v2438
        %3542 = vmatpush.msra.mxu0 %v2432
        %3543 = vmatpush.msra.mxu0 %v2426
        %3544 = vmatpush.msra.mxu0 %v2420
        %3545 = vmatmul.f32.gmra.mxu0 %v1453
        %v3546 = vpop.f32.mrf.mxu0
        %v3547 = vadd.f32 %v3527, %v3546
        %3548 = vdwg.mxu0
        %3549 = vmatpush.msra.mxu0 %v2606
        %3550 = vmatpush.msra.mxu0 %v2600
        %3551 = vmatpush.msra.mxu0 %v2594
        %3552 = vmatpush.msra.mxu0 %v2588
        %3553 = vmatpush.msra.mxu0 %v2582
        %3554 = vmatpush.msra.mxu0 %v2576
        %3555 = vmatpush.msra.mxu0 %v2570
        %3556 = vmatpush.msra.mxu0 %v2564
        %3557 = vmatpush.msra.mxu0 %v2558
        %3558 = vmatpush.msra.mxu0 %v2552
        %3559 = vmatpush.msra.mxu0 %v2546
        %3560 = vmatpush.msra.mxu0 %v2540
        %3561 = vmatpush.msra.mxu0 %v2534
        %3562 = vmatpush.msra.mxu0 %v2528
        %3563 = vmatpush.msra.mxu0 %v2522
        %3564 = vmatpush.msra.mxu0 %v2516
        %3565 = vmatmul.f32.gmra.mxu0 %v1454
        %v3566 = vpop.f32.mrf.mxu0
        %v3567 = vadd.f32 %v3547, %v3566
        %3568 = vdwg.mxu0
        %3569 = vmatpush.msra.mxu0 %v2702
        %3570 = vmatpush.msra.mxu0 %v2696
        %3571 = vmatpush.msra.mxu0 %v2690
        %3572 = vmatpush.msra.mxu0 %v2684
        %3573 = vmatpush.msra.mxu0 %v2678
        %3574 = vmatpush.msra.mxu0 %v2672
        %3575 = vmatpush.msra.mxu0 %v2666
        %3576 = vmatpush.msra.mxu0 %v2660
        %3577 = vmatpush.msra.mxu0 %v2654
        %3578 = vmatpush.msra.mxu0 %v2648
        %3579 = vmatpush.msra.mxu0 %v2642
        %3580 = vmatpush.msra.mxu0 %v2636
        %3581 = vmatpush.msra.mxu0 %v2630
        %3582 = vmatpush.msra.mxu0 %v2624
        %3583 = vmatpush.msra.mxu0 %v2618
        %3584 = vmatpush.msra.mxu0 %v2612
        %3585 = vmatmul.f32.gmra.mxu0 %v1455
        %v3586 = vpop.f32.mrf.mxu0
        %v3587 = vadd.f32 %v3567, %v3586
        %3588 = vdwg.mxu0
        %3589 = vmatpush.msra.mxu0 %v2798
        %3590 = vmatpush.msra.mxu0 %v2792
        %3591 = vmatpush.msra.mxu0 %v2786
        %3592 = vmatpush.msra.mxu0 %v2780
        %3593 = vmatpush.msra.mxu0 %v2774
        %3594 = vmatpush.msra.mxu0 %v2768
        %3595 = vmatpush.msra.mxu0 %v2762
        %3596 = vmatpush.msra.mxu0 %v2756
        %3597 = vmatpush.msra.mxu0 %v2750
        %3598 = vmatpush.msra.mxu0 %v2744
        %3599 = vmatpush.msra.mxu0 %v2738
        %3600 = vmatpush.msra.mxu0 %v2732
        %3601 = vmatpush.msra.mxu0 %v2726
        %3602 = vmatpush.msra.mxu0 %v2720
        %3603 = vmatpush.msra.mxu0 %v2714
        %3604 = vmatpush.msra.mxu0 %v2708
        %3605 = vmatmul.f32.gmra.mxu0 %v1456
        %v3606 = vpop.f32.mrf.mxu0
        %v3607 = vadd.f32 %v3587, %v3606
        %3608 = vdwg.mxu0
        %3609 = vmatpush.msra.mxu0 %v2894
        %3610 = vmatpush.msra.mxu0 %v2888
        %3611 = vmatpush.msra.mxu0 %v2882
        %3612 = vmatpush.msra.mxu0 %v2876
        %3613 = vmatpush.msra.mxu0 %v2870
        %3614 = vmatpush.msra.mxu0 %v2864
        %3615 = vmatpush.msra.mxu0 %v2858
        %3616 = vmatpush.msra.mxu0 %v2852
        %3617 = vmatpush.msra.mxu0 %v2846
        %3618 = vmatpush.msra.mxu0 %v2840
        %3619 = vmatpush.msra.mxu0 %v2834
        %3620 = vmatpush.msra.mxu0 %v2828
        %3621 = vmatpush.msra.mxu0 %v2822
        %3622 = vmatpush.msra.mxu0 %v2816
        %3623 = vmatpush.msra.mxu0 %v2810
        %3624 = vmatpush.msra.mxu0 %v2804
        %3625 = vmatmul.f32.gmra.mxu0 %v1457
        %v3626 = vpop.f32.mrf.mxu0
        %v3627 = vadd.f32 %v3607, %v3626
        %3628 = vdwg.mxu0
        %3629 = vmatpush.msra.mxu0 %v2990
        %3630 = vmatpush.msra.mxu0 %v2984
        %3631 = vmatpush.msra.mxu0 %v2978
        %3632 = vmatpush.msra.mxu0 %v2972
        %3633 = vmatpush.msra.mxu0 %v2966
        %3634 = vmatpush.msra.mxu0 %v2960
        %3635 = vmatpush.msra.mxu0 %v2954
        %3636 = vmatpush.msra.mxu0 %v2948
        %3637 = vmatpush.msra.mxu0 %v2942
        %3638 = vmatpush.msra.mxu0 %v2936
        %3639 = vmatpush.msra.mxu0 %v2930
        %3640 = vmatpush.msra.mxu0 %v2924
        %3641 = vmatpush.msra.mxu0 %v2918
        %3642 = vmatpush.msra.mxu0 %v2912
        %3643 = vmatpush.msra.mxu0 %v2906
        %3644 = vmatpush.msra.mxu0 %v2900
        %3645 = vmatmul.f32.gmra.mxu0 %v1458
        %v3646 = vpop.f32.mrf.mxu0
        %v3647 = vadd.f32 %v3627, %v3646
        %3648 = vdwg.mxu0
        %3649 = vmatpush.msra.mxu0 %v1551
        %3650 = vmatpush.msra.mxu0 %v1545
        %3651 = vmatpush.msra.mxu0 %v1539
        %3652 = vmatpush.msra.mxu0 %v1533
        %3653 = vmatpush.msra.mxu0 %v1527
        %3654 = vmatpush.msra.mxu0 %v1521
        %3655 = vmatpush.msra.mxu0 %v1515
        %3656 = vmatpush.msra.mxu0 %v1509
        %3657 = vmatpush.msra.mxu0 %v1503
        %3658 = vmatpush.msra.mxu0 %v1497
        %3659 = vmatpush.msra.mxu0 %v1491
        %3660 = vmatpush.msra.mxu0 %v1485
        %3661 = vmatpush.msra.mxu0 %v1479
        %3662 = vmatpush.msra.mxu0 %v1473
        %3663 = vmatpush.msra.mxu0 %v1467
        %3664 = vmatpush.msra.mxu0 %v1461
        %3665 = vmatmul.f32.gmra.mxu0 %v1279
        %v3666 = vpop.f32.mrf.mxu0
        %v3667 = vadd.f32 %v2999, %v3666
        %3668 = vdwg.mxu0
        %3669 = vmatpush.msra.mxu0 %v1647
        %3670 = vmatpush.msra.mxu0 %v1641
        %3671 = vmatpush.msra.mxu0 %v1635
        %3672 = vmatpush.msra.mxu0 %v1629
        %3673 = vmatpush.msra.mxu0 %v1623
        %3674 = vmatpush.msra.mxu0 %v1617
        %3675 = vmatpush.msra.mxu0 %v1611
        %3676 = vmatpush.msra.mxu0 %v1605
        %3677 = vmatpush.msra.mxu0 %v1599
        %3678 = vmatpush.msra.mxu0 %v1593
        %3679 = vmatpush.msra.mxu0 %v1587
        %3680 = vmatpush.msra.mxu0 %v1581
        %3681 = vmatpush.msra.mxu0 %v1575
        %3682 = vmatpush.msra.mxu0 %v1569
        %3683 = vmatpush.msra.mxu0 %v1563
        %3684 = vmatpush.msra.mxu0 %v1557
        %3685 = vmatmul.f32.gmra.mxu0 %v1280
        %v3686 = vpop.f32.mrf.mxu0
        %v3687 = vadd.f32 %v3667, %v3686
        %3688 = vdwg.mxu0
        %3689 = vmatpush.msra.mxu0 %v1743
        %3690 = vmatpush.msra.mxu0 %v1737
        %3691 = vmatpush.msra.mxu0 %v1731
        %3692 = vmatpush.msra.mxu0 %v1725
        %3693 = vmatpush.msra.mxu0 %v1719
        %3694 = vmatpush.msra.mxu0 %v1713
        %3695 = vmatpush.msra.mxu0 %v1707
        %3696 = vmatpush.msra.mxu0 %v1701
        %3697 = vmatpush.msra.mxu0 %v1695
        %3698 = vmatpush.msra.mxu0 %v1689
        %3699 = vmatpush.msra.mxu0 %v1683
        %3700 = vmatpush.msra.mxu0 %v1677
        %3701 = vmatpush.msra.mxu0 %v1671
        %3702 = vmatpush.msra.mxu0 %v1665
        %3703 = vmatpush.msra.mxu0 %v1659
        %3704 = vmatpush.msra.mxu0 %v1653
        %3705 = vmatmul.f32.gmra.mxu0 %v1281
        %v3706 = vpop.f32.mrf.mxu0
        %v3707 = vadd.f32 %v3687, %v3706
        %3708 = vdwg.mxu0
        %3709 = vmatpush.msra.mxu0 %v1839
        %3710 = vmatpush.msra.mxu0 %v1833
        %3711 = vmatpush.msra.mxu0 %v1827
        %3712 = vmatpush.msra.mxu0 %v1821
        %3713 = vmatpush.msra.mxu0 %v1815
        %3714 = vmatpush.msra.mxu0 %v1809
        %3715 = vmatpush.msra.mxu0 %v1803
        %3716 = vmatpush.msra.mxu0 %v1797
        %3717 = vmatpush.msra.mxu0 %v1791
        %3718 = vmatpush.msra.mxu0 %v1785
        %3719 = vmatpush.msra.mxu0 %v1779
        %3720 = vmatpush.msra.mxu0 %v1773
        %3721 = vmatpush.msra.mxu0 %v1767
        %3722 = vmatpush.msra.mxu0 %v1761
        %3723 = vmatpush.msra.mxu0 %v1755
        %3724 = vmatpush.msra.mxu0 %v1749
        %3725 = vmatmul.f32.gmra.mxu0 %v1282
        %v3726 = vpop.f32.mrf.mxu0
        %v3727 = vadd.f32 %v3707, %v3726
        %3728 = vdwg.mxu0
        %3729 = vmatpush.msra.mxu0 %v1935
        %3730 = vmatpush.msra.mxu0 %v1929
        %3731 = vmatpush.msra.mxu0 %v1923
        %3732 = vmatpush.msra.mxu0 %v1917
        %3733 = vmatpush.msra.mxu0 %v1911
        %3734 = vmatpush.msra.mxu0 %v1905
        %3735 = vmatpush.msra.mxu0 %v1899
        %3736 = vmatpush.msra.mxu0 %v1893
        %3737 = vmatpush.msra.mxu0 %v1887
        %3738 = vmatpush.msra.mxu0 %v1881
        %3739 = vmatpush.msra.mxu0 %v1875
        %3740 = vmatpush.msra.mxu0 %v1869
        %3741 = vmatpush.msra.mxu0 %v1863
        %3742 = vmatpush.msra.mxu0 %v1857
        %3743 = vmatpush.msra.mxu0 %v1851
        %3744 = vmatpush.msra.mxu0 %v1845
        %3745 = vmatmul.f32.gmra.mxu0 %v1283
        %v3746 = vpop.f32.mrf.mxu0
        %v3747 = vadd.f32 %v3727, %v3746
        %3748 = vdwg.mxu0
        %3749 = vmatpush.msra.mxu0 %v2031
        %3750 = vmatpush.msra.mxu0 %v2025
        %3751 = vmatpush.msra.mxu0 %v2019
        %3752 = vmatpush.msra.mxu0 %v2013
        %3753 = vmatpush.msra.mxu0 %v2007
        %3754 = vmatpush.msra.mxu0 %v2001
        %3755 = vmatpush.msra.mxu0 %v1995
        %3756 = vmatpush.msra.mxu0 %v1989
        %3757 = vmatpush.msra.mxu0 %v1983
        %3758 = vmatpush.msra.mxu0 %v1977
        %3759 = vmatpush.msra.mxu0 %v1971
        %3760 = vmatpush.msra.mxu0 %v1965
        %3761 = vmatpush.msra.mxu0 %v1959
        %3762 = vmatpush.msra.mxu0 %v1953
        %3763 = vmatpush.msra.mxu0 %v1947
        %3764 = vmatpush.msra.mxu0 %v1941
        %3765 = vmatmul.f32.gmra.mxu0 %v1284
        %v3766 = vpop.f32.mrf.mxu0
        %v3767 = vadd.f32 %v3747, %v3766
        %3768 = vdwg.mxu0
        %3769 = vmatpush.msra.mxu0 %v2127
        %3770 = vmatpush.msra.mxu0 %v2121
        %3771 = vmatpush.msra.mxu0 %v2115
        %3772 = vmatpush.msra.mxu0 %v2109
        %3773 = vmatpush.msra.mxu0 %v2103
        %3774 = vmatpush.msra.mxu0 %v2097
        %3775 = vmatpush.msra.mxu0 %v2091
        %3776 = vmatpush.msra.mxu0 %v2085
        %3777 = vmatpush.msra.mxu0 %v2079
        %3778 = vmatpush.msra.mxu0 %v2073
        %3779 = vmatpush.msra.mxu0 %v2067
        %3780 = vmatpush.msra.mxu0 %v2061
        %3781 = vmatpush.msra.mxu0 %v2055
        %3782 = vmatpush.msra.mxu0 %v2049
        %3783 = vmatpush.msra.mxu0 %v2043
        %3784 = vmatpush.msra.mxu0 %v2037
        %3785 = vmatmul.f32.gmra.mxu0 %v1285
        %v3786 = vpop.f32.mrf.mxu0
        %v3787 = vadd.f32 %v3767, %v3786
        %3788 = vdwg.mxu0
        %3789 = vmatpush.msra.mxu0 %v2223
        %3790 = vmatpush.msra.mxu0 %v2217
        %3791 = vmatpush.msra.mxu0 %v2211
        %3792 = vmatpush.msra.mxu0 %v2205
        %3793 = vmatpush.msra.mxu0 %v2199
        %3794 = vmatpush.msra.mxu0 %v2193
        %3795 = vmatpush.msra.mxu0 %v2187
        %3796 = vmatpush.msra.mxu0 %v2181
        %3797 = vmatpush.msra.mxu0 %v2175
        %3798 = vmatpush.msra.mxu0 %v2169
        %3799 = vmatpush.msra.mxu0 %v2163
        %3800 = vmatpush.msra.mxu0 %v2157
        %3801 = vmatpush.msra.mxu0 %v2151
        %3802 = vmatpush.msra.mxu0 %v2145
        %3803 = vmatpush.msra.mxu0 %v2139
        %3804 = vmatpush.msra.mxu0 %v2133
        %3805 = vmatmul.f32.gmra.mxu0 %v1286
        %v3806 = vpop.f32.mrf.mxu0
        %v3807 = vadd.f32 %v3787, %v3806
        %3808 = vdwg.mxu0
        %3809 = vmatpush.msra.mxu0 %v2319
        %3810 = vmatpush.msra.mxu0 %v2313
        %3811 = vmatpush.msra.mxu0 %v2307
        %3812 = vmatpush.msra.mxu0 %v2301
        %3813 = vmatpush.msra.mxu0 %v2295
        %3814 = vmatpush.msra.mxu0 %v2289
        %3815 = vmatpush.msra.mxu0 %v2283
        %3816 = vmatpush.msra.mxu0 %v2277
        %3817 = vmatpush.msra.mxu0 %v2271
        %3818 = vmatpush.msra.mxu0 %v2265
        %3819 = vmatpush.msra.mxu0 %v2259
        %3820 = vmatpush.msra.mxu0 %v2253
        %3821 = vmatpush.msra.mxu0 %v2247
        %3822 = vmatpush.msra.mxu0 %v2241
        %3823 = vmatpush.msra.mxu0 %v2235
        %3824 = vmatpush.msra.mxu0 %v2229
        %3825 = vmatmul.f32.gmra.mxu0 %v1451
        %v3826 = vpop.f32.mrf.mxu0
        %v3827 = vadd.f32 %v3807, %v3826
        %3828 = vdwg.mxu0
        %3829 = vmatpush.msra.mxu0 %v2415
        %3830 = vmatpush.msra.mxu0 %v2409
        %3831 = vmatpush.msra.mxu0 %v2403
        %3832 = vmatpush.msra.mxu0 %v2397
        %3833 = vmatpush.msra.mxu0 %v2391
        %3834 = vmatpush.msra.mxu0 %v2385
        %3835 = vmatpush.msra.mxu0 %v2379
        %3836 = vmatpush.msra.mxu0 %v2373
        %3837 = vmatpush.msra.mxu0 %v2367
        %3838 = vmatpush.msra.mxu0 %v2361
        %3839 = vmatpush.msra.mxu0 %v2355
        %3840 = vmatpush.msra.mxu0 %v2349
        %3841 = vmatpush.msra.mxu0 %v2343
        %3842 = vmatpush.msra.mxu0 %v2337
        %3843 = vmatpush.msra.mxu0 %v2331
        %3844 = vmatpush.msra.mxu0 %v2325
        %3845 = vmatmul.f32.gmra.mxu0 %v1452
        %v3846 = vpop.f32.mrf.mxu0
        %v3847 = vadd.f32 %v3827, %v3846
        %3848 = vdwg.mxu0
        %3849 = vmatpush.msra.mxu0 %v2511
        %3850 = vmatpush.msra.mxu0 %v2505
        %3851 = vmatpush.msra.mxu0 %v2499
        %3852 = vmatpush.msra.mxu0 %v2493
        %3853 = vmatpush.msra.mxu0 %v2487
        %3854 = vmatpush.msra.mxu0 %v2481
        %3855 = vmatpush.msra.mxu0 %v2475
        %3856 = vmatpush.msra.mxu0 %v2469
        %3857 = vmatpush.msra.mxu0 %v2463
        %3858 = vmatpush.msra.mxu0 %v2457
        %3859 = vmatpush.msra.mxu0 %v2451
        %3860 = vmatpush.msra.mxu0 %v2445
        %3861 = vmatpush.msra.mxu0 %v2439
        %3862 = vmatpush.msra.mxu0 %v2433
        %3863 = vmatpush.msra.mxu0 %v2427
        %3864 = vmatpush.msra.mxu0 %v2421
        %3865 = vmatmul.f32.gmra.mxu0 %v1453
        %v3866 = vpop.f32.mrf.mxu0
        %v3867 = vadd.f32 %v3847, %v3866
        %3868 = vdwg.mxu0
        %3869 = vmatpush.msra.mxu0 %v2607
        %3870 = vmatpush.msra.mxu0 %v2601
        %3871 = vmatpush.msra.mxu0 %v2595
        %3872 = vmatpush.msra.mxu0 %v2589
        %3873 = vmatpush.msra.mxu0 %v2583
        %3874 = vmatpush.msra.mxu0 %v2577
        %3875 = vmatpush.msra.mxu0 %v2571
        %3876 = vmatpush.msra.mxu0 %v2565
        %3877 = vmatpush.msra.mxu0 %v2559
        %3878 = vmatpush.msra.mxu0 %v2553
        %3879 = vmatpush.msra.mxu0 %v2547
        %3880 = vmatpush.msra.mxu0 %v2541
        %3881 = vmatpush.msra.mxu0 %v2535
        %3882 = vmatpush.msra.mxu0 %v2529
        %3883 = vmatpush.msra.mxu0 %v2523
        %3884 = vmatpush.msra.mxu0 %v2517
        %3885 = vmatmul.f32.gmra.mxu0 %v1454
        %v3886 = vpop.f32.mrf.mxu0
        %v3887 = vadd.f32 %v3867, %v3886
        %3888 = vdwg.mxu0
        %3889 = vmatpush.msra.mxu0 %v2703
        %3890 = vmatpush.msra.mxu0 %v2697
        %3891 = vmatpush.msra.mxu0 %v2691
        %3892 = vmatpush.msra.mxu0 %v2685
        %3893 = vmatpush.msra.mxu0 %v2679
        %3894 = vmatpush.msra.mxu0 %v2673
        %3895 = vmatpush.msra.mxu0 %v2667
        %3896 = vmatpush.msra.mxu0 %v2661
        %3897 = vmatpush.msra.mxu0 %v2655
        %3898 = vmatpush.msra.mxu0 %v2649
        %3899 = vmatpush.msra.mxu0 %v2643
        %3900 = vmatpush.msra.mxu0 %v2637
        %3901 = vmatpush.msra.mxu0 %v2631
        %3902 = vmatpush.msra.mxu0 %v2625
        %3903 = vmatpush.msra.mxu0 %v2619
        %3904 = vmatpush.msra.mxu0 %v2613
        %3905 = vmatmul.f32.gmra.mxu0 %v1455
        %v3906 = vpop.f32.mrf.mxu0
        %v3907 = vadd.f32 %v3887, %v3906
        %3908 = vdwg.mxu0
        %3909 = vmatpush.msra.mxu0 %v2799
        %3910 = vmatpush.msra.mxu0 %v2793
        %3911 = vmatpush.msra.mxu0 %v2787
        %3912 = vmatpush.msra.mxu0 %v2781
        %3913 = vmatpush.msra.mxu0 %v2775
        %3914 = vmatpush.msra.mxu0 %v2769
        %3915 = vmatpush.msra.mxu0 %v2763
        %3916 = vmatpush.msra.mxu0 %v2757
        %3917 = vmatpush.msra.mxu0 %v2751
        %3918 = vmatpush.msra.mxu0 %v2745
        %3919 = vmatpush.msra.mxu0 %v2739
        %3920 = vmatpush.msra.mxu0 %v2733
        %3921 = vmatpush.msra.mxu0 %v2727
        %3922 = vmatpush.msra.mxu0 %v2721
        %3923 = vmatpush.msra.mxu0 %v2715
        %3924 = vmatpush.msra.mxu0 %v2709
        %3925 = vmatmul.f32.gmra.mxu0 %v1456
        %v3926 = vpop.f32.mrf.mxu0
        %v3927 = vadd.f32 %v3907, %v3926
        %3928 = vdwg.mxu0
        %3929 = vmatpush.msra.mxu0 %v2895
        %3930 = vmatpush.msra.mxu0 %v2889
        %3931 = vmatpush.msra.mxu0 %v2883
        %3932 = vmatpush.msra.mxu0 %v2877
        %3933 = vmatpush.msra.mxu0 %v2871
        %3934 = vmatpush.msra.mxu0 %v2865
        %3935 = vmatpush.msra.mxu0 %v2859
        %3936 = vmatpush.msra.mxu0 %v2853
        %3937 = vmatpush.msra.mxu0 %v2847
        %3938 = vmatpush.msra.mxu0 %v2841
        %3939 = vmatpush.msra.mxu0 %v2835
        %3940 = vmatpush.msra.mxu0 %v2829
        %3941 = vmatpush.msra.mxu0 %v2823
        %3942 = vmatpush.msra.mxu0 %v2817
        %3943 = vmatpush.msra.mxu0 %v2811
        %3944 = vmatpush.msra.mxu0 %v2805
        %3945 = vmatmul.f32.gmra.mxu0 %v1457
        %v3946 = vpop.f32.mrf.mxu0
        %v3947 = vadd.f32 %v3927, %v3946
        %3948 = vdwg.mxu0
        %3949 = vmatpush.msra.mxu0 %v2991
        %3950 = vmatpush.msra.mxu0 %v2985
        %3951 = vmatpush.msra.mxu0 %v2979
        %3952 = vmatpush.msra.mxu0 %v2973
        %3953 = vmatpush.msra.mxu0 %v2967
        %3954 = vmatpush.msra.mxu0 %v2961
        %3955 = vmatpush.msra.mxu0 %v2955
        %3956 = vmatpush.msra.mxu0 %v2949
        %3957 = vmatpush.msra.mxu0 %v2943
        %3958 = vmatpush.msra.mxu0 %v2937
        %3959 = vmatpush.msra.mxu0 %v2931
        %3960 = vmatpush.msra.mxu0 %v2925
        %3961 = vmatpush.msra.mxu0 %v2919
        %3962 = vmatpush.msra.mxu0 %v2913
        %3963 = vmatpush.msra.mxu0 %v2907
        %3964 = vmatpush.msra.mxu0 %v2901
        %3965 = vmatmul.f32.gmra.mxu0 %v1458
        %v3966 = vpop.f32.mrf.mxu0
        %v3967 = vadd.f32 %v3947, %v3966
        %3968 = vdwg.mxu0
        %3969 = vmatpush.msra.mxu0 %v1552
        %3970 = vmatpush.msra.mxu0 %v1546
        %3971 = vmatpush.msra.mxu0 %v1540
        %3972 = vmatpush.msra.mxu0 %v1534
        %3973 = vmatpush.msra.mxu0 %v1528
        %3974 = vmatpush.msra.mxu0 %v1522
        %3975 = vmatpush.msra.mxu0 %v1516
        %3976 = vmatpush.msra.mxu0 %v1510
        %3977 = vmatpush.msra.mxu0 %v1504
        %3978 = vmatpush.msra.mxu0 %v1498
        %3979 = vmatpush.msra.mxu0 %v1492
        %3980 = vmatpush.msra.mxu0 %v1486
        %3981 = vmatpush.msra.mxu0 %v1480
        %3982 = vmatpush.msra.mxu0 %v1474
        %3983 = vmatpush.msra.mxu0 %v1468
        %3984 = vmatpush.msra.mxu0 %v1462
        %3985 = vmatmul.f32.gmra.mxu0 %v1279
        %v3986 = vpop.f32.mrf.mxu0
        %v3987 = vadd.f32 %v3000, %v3986
        %3988 = vdwg.mxu0
        %3989 = vmatpush.msra.mxu0 %v1648
        %3990 = vmatpush.msra.mxu0 %v1642
        %3991 = vmatpush.msra.mxu0 %v1636
        %3992 = vmatpush.msra.mxu0 %v1630
        %3993 = vmatpush.msra.mxu0 %v1624
        %3994 = vmatpush.msra.mxu0 %v1618
        %3995 = vmatpush.msra.mxu0 %v1612
        %3996 = vmatpush.msra.mxu0 %v1606
        %3997 = vmatpush.msra.mxu0 %v1600
        %3998 = vmatpush.msra.mxu0 %v1594
        %3999 = vmatpush.msra.mxu0 %v1588
        %4000 = vmatpush.msra.mxu0 %v1582
        %4001 = vmatpush.msra.mxu0 %v1576
        %4002 = vmatpush.msra.mxu0 %v1570
        %4003 = vmatpush.msra.mxu0 %v1564
        %4004 = vmatpush.msra.mxu0 %v1558
        %4005 = vmatmul.f32.gmra.mxu0 %v1280
        %v4006 = vpop.f32.mrf.mxu0
        %v4007 = vadd.f32 %v3987, %v4006
        %4008 = vdwg.mxu0
        %4009 = vmatpush.msra.mxu0 %v1744
        %4010 = vmatpush.msra.mxu0 %v1738
        %4011 = vmatpush.msra.mxu0 %v1732
        %4012 = vmatpush.msra.mxu0 %v1726
        %4013 = vmatpush.msra.mxu0 %v1720
        %4014 = vmatpush.msra.mxu0 %v1714
        %4015 = vmatpush.msra.mxu0 %v1708
        %4016 = vmatpush.msra.mxu0 %v1702
        %4017 = vmatpush.msra.mxu0 %v1696
        %4018 = vmatpush.msra.mxu0 %v1690
        %4019 = vmatpush.msra.mxu0 %v1684
        %4020 = vmatpush.msra.mxu0 %v1678
        %4021 = vmatpush.msra.mxu0 %v1672
        %4022 = vmatpush.msra.mxu0 %v1666
        %4023 = vmatpush.msra.mxu0 %v1660
        %4024 = vmatpush.msra.mxu0 %v1654
        %4025 = vmatmul.f32.gmra.mxu0 %v1281
        %v4026 = vpop.f32.mrf.mxu0
        %v4027 = vadd.f32 %v4007, %v4026
        %4028 = vdwg.mxu0
        %4029 = vmatpush.msra.mxu0 %v1840
        %4030 = vmatpush.msra.mxu0 %v1834
        %4031 = vmatpush.msra.mxu0 %v1828
        %4032 = vmatpush.msra.mxu0 %v1822
        %4033 = vmatpush.msra.mxu0 %v1816
        %4034 = vmatpush.msra.mxu0 %v1810
        %4035 = vmatpush.msra.mxu0 %v1804
        %4036 = vmatpush.msra.mxu0 %v1798
        %4037 = vmatpush.msra.mxu0 %v1792
        %4038 = vmatpush.msra.mxu0 %v1786
        %4039 = vmatpush.msra.mxu0 %v1780
        %4040 = vmatpush.msra.mxu0 %v1774
        %4041 = vmatpush.msra.mxu0 %v1768
        %4042 = vmatpush.msra.mxu0 %v1762
        %4043 = vmatpush.msra.mxu0 %v1756
        %4044 = vmatpush.msra.mxu0 %v1750
        %4045 = vmatmul.f32.gmra.mxu0 %v1282
        %v4046 = vpop.f32.mrf.mxu0
        %v4047 = vadd.f32 %v4027, %v4046
        %4048 = vdwg.mxu0
        %4049 = vmatpush.msra.mxu0 %v1936
        %4050 = vmatpush.msra.mxu0 %v1930
        %4051 = vmatpush.msra.mxu0 %v1924
        %4052 = vmatpush.msra.mxu0 %v1918
        %4053 = vmatpush.msra.mxu0 %v1912
        %4054 = vmatpush.msra.mxu0 %v1906
        %4055 = vmatpush.msra.mxu0 %v1900
        %4056 = vmatpush.msra.mxu0 %v1894
        %4057 = vmatpush.msra.mxu0 %v1888
        %4058 = vmatpush.msra.mxu0 %v1882
        %4059 = vmatpush.msra.mxu0 %v1876
        %4060 = vmatpush.msra.mxu0 %v1870
        %4061 = vmatpush.msra.mxu0 %v1864
        %4062 = vmatpush.msra.mxu0 %v1858
        %4063 = vmatpush.msra.mxu0 %v1852
        %4064 = vmatpush.msra.mxu0 %v1846
        %4065 = vmatmul.f32.gmra.mxu0 %v1283
        %v4066 = vpop.f32.mrf.mxu0
        %v4067 = vadd.f32 %v4047, %v4066
        %4068 = vdwg.mxu0
        %4069 = vmatpush.msra.mxu0 %v2032
        %4070 = vmatpush.msra.mxu0 %v2026
        %4071 = vmatpush.msra.mxu0 %v2020
        %4072 = vmatpush.msra.mxu0 %v2014
        %4073 = vmatpush.msra.mxu0 %v2008
        %4074 = vmatpush.msra.mxu0 %v2002
        %4075 = vmatpush.msra.mxu0 %v1996
        %4076 = vmatpush.msra.mxu0 %v1990
        %4077 = vmatpush.msra.mxu0 %v1984
        %4078 = vmatpush.msra.mxu0 %v1978
        %4079 = vmatpush.msra.mxu0 %v1972
        %4080 = vmatpush.msra.mxu0 %v1966
        %4081 = vmatpush.msra.mxu0 %v1960
        %4082 = vmatpush.msra.mxu0 %v1954
        %4083 = vmatpush.msra.mxu0 %v1948
        %4084 = vmatpush.msra.mxu0 %v1942
        %4085 = vmatmul.f32.gmra.mxu0 %v1284
        %v4086 = vpop.f32.mrf.mxu0
        %v4087 = vadd.f32 %v4067, %v4086
        %4088 = vdwg.mxu0
        %4089 = vmatpush.msra.mxu0 %v2128
        %4090 = vmatpush.msra.mxu0 %v2122
        %4091 = vmatpush.msra.mxu0 %v2116
        %4092 = vmatpush.msra.mxu0 %v2110
        %4093 = vmatpush.msra.mxu0 %v2104
        %4094 = vmatpush.msra.mxu0 %v2098
        %4095 = vmatpush.msra.mxu0 %v2092
        %4096 = vmatpush.msra.mxu0 %v2086
        %4097 = vmatpush.msra.mxu0 %v2080
        %4098 = vmatpush.msra.mxu0 %v2074
        %4099 = vmatpush.msra.mxu0 %v2068
        %4100 = vmatpush.msra.mxu0 %v2062
        %4101 = vmatpush.msra.mxu0 %v2056
        %4102 = vmatpush.msra.mxu0 %v2050
        %4103 = vmatpush.msra.mxu0 %v2044
        %4104 = vmatpush.msra.mxu0 %v2038
        %4105 = vmatmul.f32.gmra.mxu0 %v1285
        %v4106 = vpop.f32.mrf.mxu0
        %v4107 = vadd.f32 %v4087, %v4106
        %4108 = vdwg.mxu0
        %4109 = vmatpush.msra.mxu0 %v2224
        %4110 = vmatpush.msra.mxu0 %v2218
        %4111 = vmatpush.msra.mxu0 %v2212
        %4112 = vmatpush.msra.mxu0 %v2206
        %4113 = vmatpush.msra.mxu0 %v2200
        %4114 = vmatpush.msra.mxu0 %v2194
        %4115 = vmatpush.msra.mxu0 %v2188
        %4116 = vmatpush.msra.mxu0 %v2182
        %4117 = vmatpush.msra.mxu0 %v2176
        %4118 = vmatpush.msra.mxu0 %v2170
        %4119 = vmatpush.msra.mxu0 %v2164
        %4120 = vmatpush.msra.mxu0 %v2158
        %4121 = vmatpush.msra.mxu0 %v2152
        %4122 = vmatpush.msra.mxu0 %v2146
        %4123 = vmatpush.msra.mxu0 %v2140
        %4124 = vmatpush.msra.mxu0 %v2134
        %4125 = vmatmul.f32.gmra.mxu0 %v1286
        %v4126 = vpop.f32.mrf.mxu0
        %v4127 = vadd.f32 %v4107, %v4126
        %4128 = vdwg.mxu0
        %4129 = vmatpush.msra.mxu0 %v2320
        %4130 = vmatpush.msra.mxu0 %v2314
        %4131 = vmatpush.msra.mxu0 %v2308
        %4132 = vmatpush.msra.mxu0 %v2302
        %4133 = vmatpush.msra.mxu0 %v2296
        %4134 = vmatpush.msra.mxu0 %v2290
        %4135 = vmatpush.msra.mxu0 %v2284
        %4136 = vmatpush.msra.mxu0 %v2278
        %4137 = vmatpush.msra.mxu0 %v2272
        %4138 = vmatpush.msra.mxu0 %v2266
        %4139 = vmatpush.msra.mxu0 %v2260
        %4140 = vmatpush.msra.mxu0 %v2254
        %4141 = vmatpush.msra.mxu0 %v2248
        %4142 = vmatpush.msra.mxu0 %v2242
        %4143 = vmatpush.msra.mxu0 %v2236
        %4144 = vmatpush.msra.mxu0 %v2230
        %4145 = vmatmul.f32.gmra.mxu0 %v1451
        %v4146 = vpop.f32.mrf.mxu0
        %v4147 = vadd.f32 %v4127, %v4146
        %4148 = vdwg.mxu0
        %4149 = vmatpush.msra.mxu0 %v2416
        %4150 = vmatpush.msra.mxu0 %v2410
        %4151 = vmatpush.msra.mxu0 %v2404
        %4152 = vmatpush.msra.mxu0 %v2398
        %4153 = vmatpush.msra.mxu0 %v2392
        %4154 = vmatpush.msra.mxu0 %v2386
        %4155 = vmatpush.msra.mxu0 %v2380
        %4156 = vmatpush.msra.mxu0 %v2374
        %4157 = vmatpush.msra.mxu0 %v2368
        %4158 = vmatpush.msra.mxu0 %v2362
        %4159 = vmatpush.msra.mxu0 %v2356
        %4160 = vmatpush.msra.mxu0 %v2350
        %4161 = vmatpush.msra.mxu0 %v2344
        %4162 = vmatpush.msra.mxu0 %v2338
        %4163 = vmatpush.msra.mxu0 %v2332
        %4164 = vmatpush.msra.mxu0 %v2326
        %4165 = vmatmul.f32.gmra.mxu0 %v1452
        %v4166 = vpop.f32.mrf.mxu0
        %v4167 = vadd.f32 %v4147, %v4166
        %4168 = vdwg.mxu0
        %4169 = vmatpush.msra.mxu0 %v2512
        %4170 = vmatpush.msra.mxu0 %v2506
        %4171 = vmatpush.msra.mxu0 %v2500
        %4172 = vmatpush.msra.mxu0 %v2494
        %4173 = vmatpush.msra.mxu0 %v2488
        %4174 = vmatpush.msra.mxu0 %v2482
        %4175 = vmatpush.msra.mxu0 %v2476
        %4176 = vmatpush.msra.mxu0 %v2470
        %4177 = vmatpush.msra.mxu0 %v2464
        %4178 = vmatpush.msra.mxu0 %v2458
        %4179 = vmatpush.msra.mxu0 %v2452
        %4180 = vmatpush.msra.mxu0 %v2446
        %4181 = vmatpush.msra.mxu0 %v2440
        %4182 = vmatpush.msra.mxu0 %v2434
        %4183 = vmatpush.msra.mxu0 %v2428
        %4184 = vmatpush.msra.mxu0 %v2422
        %4185 = vmatmul.f32.gmra.mxu0 %v1453
        %v4186 = vpop.f32.mrf.mxu0
        %v4187 = vadd.f32 %v4167, %v4186
        %4188 = vdwg.mxu0
        %4189 = vmatpush.msra.mxu0 %v2608
        %4190 = vmatpush.msra.mxu0 %v2602
        %4191 = vmatpush.msra.mxu0 %v2596
        %4192 = vmatpush.msra.mxu0 %v2590
        %4193 = vmatpush.msra.mxu0 %v2584
        %4194 = vmatpush.msra.mxu0 %v2578
        %4195 = vmatpush.msra.mxu0 %v2572
        %4196 = vmatpush.msra.mxu0 %v2566
        %4197 = vmatpush.msra.mxu0 %v2560
        %4198 = vmatpush.msra.mxu0 %v2554
        %4199 = vmatpush.msra.mxu0 %v2548
        %4200 = vmatpush.msra.mxu0 %v2542
        %4201 = vmatpush.msra.mxu0 %v2536
        %4202 = vmatpush.msra.mxu0 %v2530
        %4203 = vmatpush.msra.mxu0 %v2524
        %4204 = vmatpush.msra.mxu0 %v2518
        %4205 = vmatmul.f32.gmra.mxu0 %v1454
        %v4206 = vpop.f32.mrf.mxu0
        %v4207 = vadd.f32 %v4187, %v4206
        %4208 = vdwg.mxu0
        %4209 = vmatpush.msra.mxu0 %v2704
        %4210 = vmatpush.msra.mxu0 %v2698
        %4211 = vmatpush.msra.mxu0 %v2692
        %4212 = vmatpush.msra.mxu0 %v2686
        %4213 = vmatpush.msra.mxu0 %v2680
        %4214 = vmatpush.msra.mxu0 %v2674
        %4215 = vmatpush.msra.mxu0 %v2668
        %4216 = vmatpush.msra.mxu0 %v2662
        %4217 = vmatpush.msra.mxu0 %v2656
        %4218 = vmatpush.msra.mxu0 %v2650
        %4219 = vmatpush.msra.mxu0 %v2644
        %4220 = vmatpush.msra.mxu0 %v2638
        %4221 = vmatpush.msra.mxu0 %v2632
        %4222 = vmatpush.msra.mxu0 %v2626
        %4223 = vmatpush.msra.mxu0 %v2620
        %4224 = vmatpush.msra.mxu0 %v2614
        %4225 = vmatmul.f32.gmra.mxu0 %v1455
        %v4226 = vpop.f32.mrf.mxu0
        %v4227 = vadd.f32 %v4207, %v4226
        %4228 = vdwg.mxu0
        %4229 = vmatpush.msra.mxu0 %v2800
        %4230 = vmatpush.msra.mxu0 %v2794
        %4231 = vmatpush.msra.mxu0 %v2788
        %4232 = vmatpush.msra.mxu0 %v2782
        %4233 = vmatpush.msra.mxu0 %v2776
        %4234 = vmatpush.msra.mxu0 %v2770
        %4235 = vmatpush.msra.mxu0 %v2764
        %4236 = vmatpush.msra.mxu0 %v2758
        %4237 = vmatpush.msra.mxu0 %v2752
        %4238 = vmatpush.msra.mxu0 %v2746
        %4239 = vmatpush.msra.mxu0 %v2740
        %4240 = vmatpush.msra.mxu0 %v2734
        %4241 = vmatpush.msra.mxu0 %v2728
        %4242 = vmatpush.msra.mxu0 %v2722
        %4243 = vmatpush.msra.mxu0 %v2716
        %4244 = vmatpush.msra.mxu0 %v2710
        %4245 = vmatmul.f32.gmra.mxu0 %v1456
        %v4246 = vpop.f32.mrf.mxu0
        %v4247 = vadd.f32 %v4227, %v4246
        %4248 = vdwg.mxu0
        %4249 = vmatpush.msra.mxu0 %v2896
        %4250 = vmatpush.msra.mxu0 %v2890
        %4251 = vmatpush.msra.mxu0 %v2884
        %4252 = vmatpush.msra.mxu0 %v2878
        %4253 = vmatpush.msra.mxu0 %v2872
        %4254 = vmatpush.msra.mxu0 %v2866
        %4255 = vmatpush.msra.mxu0 %v2860
        %4256 = vmatpush.msra.mxu0 %v2854
        %4257 = vmatpush.msra.mxu0 %v2848
        %4258 = vmatpush.msra.mxu0 %v2842
        %4259 = vmatpush.msra.mxu0 %v2836
        %4260 = vmatpush.msra.mxu0 %v2830
        %4261 = vmatpush.msra.mxu0 %v2824
        %4262 = vmatpush.msra.mxu0 %v2818
        %4263 = vmatpush.msra.mxu0 %v2812
        %4264 = vmatpush.msra.mxu0 %v2806
        %4265 = vmatmul.f32.gmra.mxu0 %v1457
        %v4266 = vpop.f32.mrf.mxu0
        %v4267 = vadd.f32 %v4247, %v4266
        %4268 = vdwg.mxu0
        %4269 = vmatpush.msra.mxu0 %v2992
        %4270 = vmatpush.msra.mxu0 %v2986
        %4271 = vmatpush.msra.mxu0 %v2980
        %4272 = vmatpush.msra.mxu0 %v2974
        %4273 = vmatpush.msra.mxu0 %v2968
        %4274 = vmatpush.msra.mxu0 %v2962
        %4275 = vmatpush.msra.mxu0 %v2956
        %4276 = vmatpush.msra.mxu0 %v2950
        %4277 = vmatpush.msra.mxu0 %v2944
        %4278 = vmatpush.msra.mxu0 %v2938
        %4279 = vmatpush.msra.mxu0 %v2932
        %4280 = vmatpush.msra.mxu0 %v2926
        %4281 = vmatpush.msra.mxu0 %v2920
        %4282 = vmatpush.msra.mxu0 %v2914
        %4283 = vmatpush.msra.mxu0 %v2908
        %4284 = vmatpush.msra.mxu0 %v2902
        %4285 = vmatmul.f32.gmra.mxu0 %v1458
        %v4286 = vpop.f32.mrf.mxu0
        %v4287 = vadd.f32 %v4267, %v4286
        %4288 = vdwg.mxu0
        %4289 = vmatpush.msra.mxu0 %v1553
        %4290 = vmatpush.msra.mxu0 %v1547
        %4291 = vmatpush.msra.mxu0 %v1541
        %4292 = vmatpush.msra.mxu0 %v1535
        %4293 = vmatpush.msra.mxu0 %v1529
        %4294 = vmatpush.msra.mxu0 %v1523
        %4295 = vmatpush.msra.mxu0 %v1517
        %4296 = vmatpush.msra.mxu0 %v1511
        %4297 = vmatpush.msra.mxu0 %v1505
        %4298 = vmatpush.msra.mxu0 %v1499
        %4299 = vmatpush.msra.mxu0 %v1493
        %4300 = vmatpush.msra.mxu0 %v1487
        %4301 = vmatpush.msra.mxu0 %v1481
        %4302 = vmatpush.msra.mxu0 %v1475
        %4303 = vmatpush.msra.mxu0 %v1469
        %4304 = vmatpush.msra.mxu0 %v1463
        %4305 = vmatmul.f32.gmra.mxu0 %v1279
        %v4306 = vpop.f32.mrf.mxu0
        %v4307 = vadd.f32 %v3001, %v4306
        %4308 = vdwg.mxu0
        %4309 = vmatpush.msra.mxu0 %v1649
        %4310 = vmatpush.msra.mxu0 %v1643
        %4311 = vmatpush.msra.mxu0 %v1637
        %4312 = vmatpush.msra.mxu0 %v1631
        %4313 = vmatpush.msra.mxu0 %v1625
        %4314 = vmatpush.msra.mxu0 %v1619
        %4315 = vmatpush.msra.mxu0 %v1613
        %4316 = vmatpush.msra.mxu0 %v1607
        %4317 = vmatpush.msra.mxu0 %v1601
        %4318 = vmatpush.msra.mxu0 %v1595
        %4319 = vmatpush.msra.mxu0 %v1589
        %4320 = vmatpush.msra.mxu0 %v1583
        %4321 = vmatpush.msra.mxu0 %v1577
        %4322 = vmatpush.msra.mxu0 %v1571
        %4323 = vmatpush.msra.mxu0 %v1565
        %4324 = vmatpush.msra.mxu0 %v1559
        %4325 = vmatmul.f32.gmra.mxu0 %v1280
        %v4326 = vpop.f32.mrf.mxu0
        %v4327 = vadd.f32 %v4307, %v4326
        %4328 = vdwg.mxu0
        %4329 = vmatpush.msra.mxu0 %v1745
        %4330 = vmatpush.msra.mxu0 %v1739
        %4331 = vmatpush.msra.mxu0 %v1733
        %4332 = vmatpush.msra.mxu0 %v1727
        %4333 = vmatpush.msra.mxu0 %v1721
        %4334 = vmatpush.msra.mxu0 %v1715
        %4335 = vmatpush.msra.mxu0 %v1709
        %4336 = vmatpush.msra.mxu0 %v1703
        %4337 = vmatpush.msra.mxu0 %v1697
        %4338 = vmatpush.msra.mxu0 %v1691
        %4339 = vmatpush.msra.mxu0 %v1685
        %4340 = vmatpush.msra.mxu0 %v1679
        %4341 = vmatpush.msra.mxu0 %v1673
        %4342 = vmatpush.msra.mxu0 %v1667
        %4343 = vmatpush.msra.mxu0 %v1661
        %4344 = vmatpush.msra.mxu0 %v1655
        %4345 = vmatmul.f32.gmra.mxu0 %v1281
        %v4346 = vpop.f32.mrf.mxu0
        %v4347 = vadd.f32 %v4327, %v4346
        %4348 = vdwg.mxu0
        %4349 = vmatpush.msra.mxu0 %v1841
        %4350 = vmatpush.msra.mxu0 %v1835
        %4351 = vmatpush.msra.mxu0 %v1829
        %4352 = vmatpush.msra.mxu0 %v1823
        %4353 = vmatpush.msra.mxu0 %v1817
        %4354 = vmatpush.msra.mxu0 %v1811
        %4355 = vmatpush.msra.mxu0 %v1805
        %4356 = vmatpush.msra.mxu0 %v1799
        %4357 = vmatpush.msra.mxu0 %v1793
        %4358 = vmatpush.msra.mxu0 %v1787
        %4359 = vmatpush.msra.mxu0 %v1781
        %4360 = vmatpush.msra.mxu0 %v1775
        %4361 = vmatpush.msra.mxu0 %v1769
        %4362 = vmatpush.msra.mxu0 %v1763
        %4363 = vmatpush.msra.mxu0 %v1757
        %4364 = vmatpush.msra.mxu0 %v1751
        %4365 = vmatmul.f32.gmra.mxu0 %v1282
        %v4366 = vpop.f32.mrf.mxu0
        %v4367 = vadd.f32 %v4347, %v4366
        %4368 = vdwg.mxu0
        %4369 = vmatpush.msra.mxu0 %v1937
        %4370 = vmatpush.msra.mxu0 %v1931
        %4371 = vmatpush.msra.mxu0 %v1925
        %4372 = vmatpush.msra.mxu0 %v1919
        %4373 = vmatpush.msra.mxu0 %v1913
        %4374 = vmatpush.msra.mxu0 %v1907
        %4375 = vmatpush.msra.mxu0 %v1901
        %4376 = vmatpush.msra.mxu0 %v1895
        %4377 = vmatpush.msra.mxu0 %v1889
        %4378 = vmatpush.msra.mxu0 %v1883
        %4379 = vmatpush.msra.mxu0 %v1877
        %4380 = vmatpush.msra.mxu0 %v1871
        %4381 = vmatpush.msra.mxu0 %v1865
        %4382 = vmatpush.msra.mxu0 %v1859
        %4383 = vmatpush.msra.mxu0 %v1853
        %4384 = vmatpush.msra.mxu0 %v1847
        %4385 = vmatmul.f32.gmra.mxu0 %v1283
        %v4386 = vpop.f32.mrf.mxu0
        %v4387 = vadd.f32 %v4367, %v4386
        %4388 = vdwg.mxu0
        %4389 = vmatpush.msra.mxu0 %v2033
        %4390 = vmatpush.msra.mxu0 %v2027
        %4391 = vmatpush.msra.mxu0 %v2021
        %4392 = vmatpush.msra.mxu0 %v2015
        %4393 = vmatpush.msra.mxu0 %v2009
        %4394 = vmatpush.msra.mxu0 %v2003
        %4395 = vmatpush.msra.mxu0 %v1997
        %4396 = vmatpush.msra.mxu0 %v1991
        %4397 = vmatpush.msra.mxu0 %v1985
        %4398 = vmatpush.msra.mxu0 %v1979
        %4399 = vmatpush.msra.mxu0 %v1973
        %4400 = vmatpush.msra.mxu0 %v1967
        %4401 = vmatpush.msra.mxu0 %v1961
        %4402 = vmatpush.msra.mxu0 %v1955
        %4403 = vmatpush.msra.mxu0 %v1949
        %4404 = vmatpush.msra.mxu0 %v1943
        %4405 = vmatmul.f32.gmra.mxu0 %v1284
        %v4406 = vpop.f32.mrf.mxu0
        %v4407 = vadd.f32 %v4387, %v4406
        %4408 = vdwg.mxu0
        %4409 = vmatpush.msra.mxu0 %v2129
        %4410 = vmatpush.msra.mxu0 %v2123
        %4411 = vmatpush.msra.mxu0 %v2117
        %4412 = vmatpush.msra.mxu0 %v2111
        %4413 = vmatpush.msra.mxu0 %v2105
        %4414 = vmatpush.msra.mxu0 %v2099
        %4415 = vmatpush.msra.mxu0 %v2093
        %4416 = vmatpush.msra.mxu0 %v2087
        %4417 = vmatpush.msra.mxu0 %v2081
        %4418 = vmatpush.msra.mxu0 %v2075
        %4419 = vmatpush.msra.mxu0 %v2069
        %4420 = vmatpush.msra.mxu0 %v2063
        %4421 = vmatpush.msra.mxu0 %v2057
        %4422 = vmatpush.msra.mxu0 %v2051
        %4423 = vmatpush.msra.mxu0 %v2045
        %4424 = vmatpush.msra.mxu0 %v2039
        %4425 = vmatmul.f32.gmra.mxu0 %v1285
        %v4426 = vpop.f32.mrf.mxu0
        %v4427 = vadd.f32 %v4407, %v4426
        %4428 = vdwg.mxu0
        %4429 = vmatpush.msra.mxu0 %v2225
        %4430 = vmatpush.msra.mxu0 %v2219
        %4431 = vmatpush.msra.mxu0 %v2213
        %4432 = vmatpush.msra.mxu0 %v2207
        %4433 = vmatpush.msra.mxu0 %v2201
        %4434 = vmatpush.msra.mxu0 %v2195
        %4435 = vmatpush.msra.mxu0 %v2189
        %4436 = vmatpush.msra.mxu0 %v2183
        %4437 = vmatpush.msra.mxu0 %v2177
        %4438 = vmatpush.msra.mxu0 %v2171
        %4439 = vmatpush.msra.mxu0 %v2165
        %4440 = vmatpush.msra.mxu0 %v2159
        %4441 = vmatpush.msra.mxu0 %v2153
        %4442 = vmatpush.msra.mxu0 %v2147
        %4443 = vmatpush.msra.mxu0 %v2141
        %4444 = vmatpush.msra.mxu0 %v2135
        %4445 = vmatmul.f32.gmra.mxu0 %v1286
        %v4446 = vpop.f32.mrf.mxu0
        %v4447 = vadd.f32 %v4427, %v4446
        %4448 = vdwg.mxu0
        %4449 = vmatpush.msra.mxu0 %v2321
        %4450 = vmatpush.msra.mxu0 %v2315
        %4451 = vmatpush.msra.mxu0 %v2309
        %4452 = vmatpush.msra.mxu0 %v2303
        %4453 = vmatpush.msra.mxu0 %v2297
        %4454 = vmatpush.msra.mxu0 %v2291
        %4455 = vmatpush.msra.mxu0 %v2285
        %4456 = vmatpush.msra.mxu0 %v2279
        %4457 = vmatpush.msra.mxu0 %v2273
        %4458 = vmatpush.msra.mxu0 %v2267
        %4459 = vmatpush.msra.mxu0 %v2261
        %4460 = vmatpush.msra.mxu0 %v2255
        %4461 = vmatpush.msra.mxu0 %v2249
        %4462 = vmatpush.msra.mxu0 %v2243
        %4463 = vmatpush.msra.mxu0 %v2237
        %4464 = vmatpush.msra.mxu0 %v2231
        %4465 = vmatmul.f32.gmra.mxu0 %v1451
        %v4466 = vpop.f32.mrf.mxu0
        %v4467 = vadd.f32 %v4447, %v4466
        %4468 = vdwg.mxu0
        %4469 = vmatpush.msra.mxu0 %v2417
        %4470 = vmatpush.msra.mxu0 %v2411
        %4471 = vmatpush.msra.mxu0 %v2405
        %4472 = vmatpush.msra.mxu0 %v2399
        %4473 = vmatpush.msra.mxu0 %v2393
        %4474 = vmatpush.msra.mxu0 %v2387
        %4475 = vmatpush.msra.mxu0 %v2381
        %4476 = vmatpush.msra.mxu0 %v2375
        %4477 = vmatpush.msra.mxu0 %v2369
        %4478 = vmatpush.msra.mxu0 %v2363
        %4479 = vmatpush.msra.mxu0 %v2357
        %4480 = vmatpush.msra.mxu0 %v2351
        %4481 = vmatpush.msra.mxu0 %v2345
        %4482 = vmatpush.msra.mxu0 %v2339
        %4483 = vmatpush.msra.mxu0 %v2333
        %4484 = vmatpush.msra.mxu0 %v2327
        %4485 = vmatmul.f32.gmra.mxu0 %v1452
        %v4486 = vpop.f32.mrf.mxu0
        %v4487 = vadd.f32 %v4467, %v4486
        %4488 = vdwg.mxu0
        %4489 = vmatpush.msra.mxu0 %v2513
        %4490 = vmatpush.msra.mxu0 %v2507
        %4491 = vmatpush.msra.mxu0 %v2501
        %4492 = vmatpush.msra.mxu0 %v2495
        %4493 = vmatpush.msra.mxu0 %v2489
        %4494 = vmatpush.msra.mxu0 %v2483
        %4495 = vmatpush.msra.mxu0 %v2477
        %4496 = vmatpush.msra.mxu0 %v2471
        %4497 = vmatpush.msra.mxu0 %v2465
        %4498 = vmatpush.msra.mxu0 %v2459
        %4499 = vmatpush.msra.mxu0 %v2453
        %4500 = vmatpush.msra.mxu0 %v2447
        %4501 = vmatpush.msra.mxu0 %v2441
        %4502 = vmatpush.msra.mxu0 %v2435
        %4503 = vmatpush.msra.mxu0 %v2429
        %4504 = vmatpush.msra.mxu0 %v2423
        %4505 = vmatmul.f32.gmra.mxu0 %v1453
        %v4506 = vpop.f32.mrf.mxu0
        %v4507 = vadd.f32 %v4487, %v4506
        %4508 = vdwg.mxu0
        %4509 = vmatpush.msra.mxu0 %v2609
        %4510 = vmatpush.msra.mxu0 %v2603
        %4511 = vmatpush.msra.mxu0 %v2597
        %4512 = vmatpush.msra.mxu0 %v2591
        %4513 = vmatpush.msra.mxu0 %v2585
        %4514 = vmatpush.msra.mxu0 %v2579
        %4515 = vmatpush.msra.mxu0 %v2573
        %4516 = vmatpush.msra.mxu0 %v2567
        %4517 = vmatpush.msra.mxu0 %v2561
        %4518 = vmatpush.msra.mxu0 %v2555
        %4519 = vmatpush.msra.mxu0 %v2549
        %4520 = vmatpush.msra.mxu0 %v2543
        %4521 = vmatpush.msra.mxu0 %v2537
        %4522 = vmatpush.msra.mxu0 %v2531
        %4523 = vmatpush.msra.mxu0 %v2525
        %4524 = vmatpush.msra.mxu0 %v2519
        %4525 = vmatmul.f32.gmra.mxu0 %v1454
        %v4526 = vpop.f32.mrf.mxu0
        %v4527 = vadd.f32 %v4507, %v4526
        %4528 = vdwg.mxu0
        %4529 = vmatpush.msra.mxu0 %v2705
        %4530 = vmatpush.msra.mxu0 %v2699
        %4531 = vmatpush.msra.mxu0 %v2693
        %4532 = vmatpush.msra.mxu0 %v2687
        %4533 = vmatpush.msra.mxu0 %v2681
        %4534 = vmatpush.msra.mxu0 %v2675
        %4535 = vmatpush.msra.mxu0 %v2669
        %4536 = vmatpush.msra.mxu0 %v2663
        %4537 = vmatpush.msra.mxu0 %v2657
        %4538 = vmatpush.msra.mxu0 %v2651
        %4539 = vmatpush.msra.mxu0 %v2645
        %4540 = vmatpush.msra.mxu0 %v2639
        %4541 = vmatpush.msra.mxu0 %v2633
        %4542 = vmatpush.msra.mxu0 %v2627
        %4543 = vmatpush.msra.mxu0 %v2621
        %4544 = vmatpush.msra.mxu0 %v2615
        %4545 = vmatmul.f32.gmra.mxu0 %v1455
        %v4546 = vpop.f32.mrf.mxu0
        %v4547 = vadd.f32 %v4527, %v4546
        %4548 = vdwg.mxu0
        %4549 = vmatpush.msra.mxu0 %v2801
        %4550 = vmatpush.msra.mxu0 %v2795
        %4551 = vmatpush.msra.mxu0 %v2789
        %4552 = vmatpush.msra.mxu0 %v2783
        %4553 = vmatpush.msra.mxu0 %v2777
        %4554 = vmatpush.msra.mxu0 %v2771
        %4555 = vmatpush.msra.mxu0 %v2765
        %4556 = vmatpush.msra.mxu0 %v2759
        %4557 = vmatpush.msra.mxu0 %v2753
        %4558 = vmatpush.msra.mxu0 %v2747
        %4559 = vmatpush.msra.mxu0 %v2741
        %4560 = vmatpush.msra.mxu0 %v2735
        %4561 = vmatpush.msra.mxu0 %v2729
        %4562 = vmatpush.msra.mxu0 %v2723
        %4563 = vmatpush.msra.mxu0 %v2717
        %4564 = vmatpush.msra.mxu0 %v2711
        %4565 = vmatmul.f32.gmra.mxu0 %v1456
        %v4566 = vpop.f32.mrf.mxu0
        %v4567 = vadd.f32 %v4547, %v4566
        %4568 = vdwg.mxu0
        %4569 = vmatpush.msra.mxu0 %v2897
        %4570 = vmatpush.msra.mxu0 %v2891
        %4571 = vmatpush.msra.mxu0 %v2885
        %4572 = vmatpush.msra.mxu0 %v2879
        %4573 = vmatpush.msra.mxu0 %v2873
        %4574 = vmatpush.msra.mxu0 %v2867
        %4575 = vmatpush.msra.mxu0 %v2861
        %4576 = vmatpush.msra.mxu0 %v2855
        %4577 = vmatpush.msra.mxu0 %v2849
        %4578 = vmatpush.msra.mxu0 %v2843
        %4579 = vmatpush.msra.mxu0 %v2837
        %4580 = vmatpush.msra.mxu0 %v2831
        %4581 = vmatpush.msra.mxu0 %v2825
        %4582 = vmatpush.msra.mxu0 %v2819
        %4583 = vmatpush.msra.mxu0 %v2813
        %4584 = vmatpush.msra.mxu0 %v2807
        %4585 = vmatmul.f32.gmra.mxu0 %v1457
        %v4586 = vpop.f32.mrf.mxu0
        %v4587 = vadd.f32 %v4567, %v4586
        %4588 = vdwg.mxu0
        %4589 = vmatpush.msra.mxu0 %v2993
        %4590 = vmatpush.msra.mxu0 %v2987
        %4591 = vmatpush.msra.mxu0 %v2981
        %4592 = vmatpush.msra.mxu0 %v2975
        %4593 = vmatpush.msra.mxu0 %v2969
        %4594 = vmatpush.msra.mxu0 %v2963
        %4595 = vmatpush.msra.mxu0 %v2957
        %4596 = vmatpush.msra.mxu0 %v2951
        %4597 = vmatpush.msra.mxu0 %v2945
        %4598 = vmatpush.msra.mxu0 %v2939
        %4599 = vmatpush.msra.mxu0 %v2933
        %4600 = vmatpush.msra.mxu0 %v2927
        %4601 = vmatpush.msra.mxu0 %v2921
        %4602 = vmatpush.msra.mxu0 %v2915
        %4603 = vmatpush.msra.mxu0 %v2909
        %4604 = vmatpush.msra.mxu0 %v2903
        %4605 = vmatmul.f32.gmra.mxu0 %v1458
        %v4606 = vpop.f32.mrf.mxu0
        %v4607 = vadd.f32 %v4587, %v4606
        %4608 = vdwg.mxu0
        %4609 = vmatpush.msra.mxu0 %v1554
        %4610 = vmatpush.msra.mxu0 %v1548
        %4611 = vmatpush.msra.mxu0 %v1542
        %4612 = vmatpush.msra.mxu0 %v1536
        %4613 = vmatpush.msra.mxu0 %v1530
        %4614 = vmatpush.msra.mxu0 %v1524
        %4615 = vmatpush.msra.mxu0 %v1518
        %4616 = vmatpush.msra.mxu0 %v1512
        %4617 = vmatpush.msra.mxu0 %v1506
        %4618 = vmatpush.msra.mxu0 %v1500
        %4619 = vmatpush.msra.mxu0 %v1494
        %4620 = vmatpush.msra.mxu0 %v1488
        %4621 = vmatpush.msra.mxu0 %v1482
        %4622 = vmatpush.msra.mxu0 %v1476
        %4623 = vmatpush.msra.mxu0 %v1470
        %4624 = vmatpush.msra.mxu0 %v1464
        %4625 = vmatmul.f32.gmra.mxu0 %v1279
        %v4626 = vpop.f32.mrf.mxu0
        %v4627 = vadd.f32 %v3002, %v4626
        %4628 = vdwg.mxu0
        %4629 = vmatpush.msra.mxu0 %v1650
        %4630 = vmatpush.msra.mxu0 %v1644
        %4631 = vmatpush.msra.mxu0 %v1638
        %4632 = vmatpush.msra.mxu0 %v1632
        %4633 = vmatpush.msra.mxu0 %v1626
        %4634 = vmatpush.msra.mxu0 %v1620
        %4635 = vmatpush.msra.mxu0 %v1614
        %4636 = vmatpush.msra.mxu0 %v1608
        %4637 = vmatpush.msra.mxu0 %v1602
        %4638 = vmatpush.msra.mxu0 %v1596
        %4639 = vmatpush.msra.mxu0 %v1590
        %4640 = vmatpush.msra.mxu0 %v1584
        %4641 = vmatpush.msra.mxu0 %v1578
        %4642 = vmatpush.msra.mxu0 %v1572
        %4643 = vmatpush.msra.mxu0 %v1566
        %4644 = vmatpush.msra.mxu0 %v1560
        %4645 = vmatmul.f32.gmra.mxu0 %v1280
        %v4646 = vpop.f32.mrf.mxu0
        %v4647 = vadd.f32 %v4627, %v4646
        %4648 = vdwg.mxu0
        %4649 = vmatpush.msra.mxu0 %v1746
        %4650 = vmatpush.msra.mxu0 %v1740
        %4651 = vmatpush.msra.mxu0 %v1734
        %4652 = vmatpush.msra.mxu0 %v1728
        %4653 = vmatpush.msra.mxu0 %v1722
        %4654 = vmatpush.msra.mxu0 %v1716
        %4655 = vmatpush.msra.mxu0 %v1710
        %4656 = vmatpush.msra.mxu0 %v1704
        %4657 = vmatpush.msra.mxu0 %v1698
        %4658 = vmatpush.msra.mxu0 %v1692
        %4659 = vmatpush.msra.mxu0 %v1686
        %4660 = vmatpush.msra.mxu0 %v1680
        %4661 = vmatpush.msra.mxu0 %v1674
        %4662 = vmatpush.msra.mxu0 %v1668
        %4663 = vmatpush.msra.mxu0 %v1662
        %4664 = vmatpush.msra.mxu0 %v1656
        %4665 = vmatmul.f32.gmra.mxu0 %v1281
        %v4666 = vpop.f32.mrf.mxu0
        %v4667 = vadd.f32 %v4647, %v4666
        %4668 = vdwg.mxu0
        %4669 = vmatpush.msra.mxu0 %v1842
        %4670 = vmatpush.msra.mxu0 %v1836
        %4671 = vmatpush.msra.mxu0 %v1830
        %4672 = vmatpush.msra.mxu0 %v1824
        %4673 = vmatpush.msra.mxu0 %v1818
        %4674 = vmatpush.msra.mxu0 %v1812
        %4675 = vmatpush.msra.mxu0 %v1806
        %4676 = vmatpush.msra.mxu0 %v1800
        %4677 = vmatpush.msra.mxu0 %v1794
        %4678 = vmatpush.msra.mxu0 %v1788
        %4679 = vmatpush.msra.mxu0 %v1782
        %4680 = vmatpush.msra.mxu0 %v1776
        %4681 = vmatpush.msra.mxu0 %v1770
        %4682 = vmatpush.msra.mxu0 %v1764
        %4683 = vmatpush.msra.mxu0 %v1758
        %4684 = vmatpush.msra.mxu0 %v1752
        %4685 = vmatmul.f32.gmra.mxu0 %v1282
        %v4686 = vpop.f32.mrf.mxu0
        %v4687 = vadd.f32 %v4667, %v4686
        %4688 = vdwg.mxu0
        %4689 = vmatpush.msra.mxu0 %v1938
        %4690 = vmatpush.msra.mxu0 %v1932
        %4691 = vmatpush.msra.mxu0 %v1926
        %4692 = vmatpush.msra.mxu0 %v1920
        %4693 = vmatpush.msra.mxu0 %v1914
        %4694 = vmatpush.msra.mxu0 %v1908
        %4695 = vmatpush.msra.mxu0 %v1902
        %4696 = vmatpush.msra.mxu0 %v1896
        %4697 = vmatpush.msra.mxu0 %v1890
        %4698 = vmatpush.msra.mxu0 %v1884
        %4699 = vmatpush.msra.mxu0 %v1878
        %4700 = vmatpush.msra.mxu0 %v1872
        %4701 = vmatpush.msra.mxu0 %v1866
        %4702 = vmatpush.msra.mxu0 %v1860
        %4703 = vmatpush.msra.mxu0 %v1854
        %4704 = vmatpush.msra.mxu0 %v1848
        %4705 = vmatmul.f32.gmra.mxu0 %v1283
        %v4706 = vpop.f32.mrf.mxu0
        %v4707 = vadd.f32 %v4687, %v4706
        %4708 = vdwg.mxu0
        %4709 = vmatpush.msra.mxu0 %v2034
        %4710 = vmatpush.msra.mxu0 %v2028
        %4711 = vmatpush.msra.mxu0 %v2022
        %4712 = vmatpush.msra.mxu0 %v2016
        %4713 = vmatpush.msra.mxu0 %v2010
        %4714 = vmatpush.msra.mxu0 %v2004
        %4715 = vmatpush.msra.mxu0 %v1998
        %4716 = vmatpush.msra.mxu0 %v1992
        %4717 = vmatpush.msra.mxu0 %v1986
        %4718 = vmatpush.msra.mxu0 %v1980
        %4719 = vmatpush.msra.mxu0 %v1974
        %4720 = vmatpush.msra.mxu0 %v1968
        %4721 = vmatpush.msra.mxu0 %v1962
        %4722 = vmatpush.msra.mxu0 %v1956
        %4723 = vmatpush.msra.mxu0 %v1950
        %4724 = vmatpush.msra.mxu0 %v1944
        %4725 = vmatmul.f32.gmra.mxu0 %v1284
        %v4726 = vpop.f32.mrf.mxu0
        %v4727 = vadd.f32 %v4707, %v4726
        %4728 = vdwg.mxu0
        %4729 = vmatpush.msra.mxu0 %v2130
        %4730 = vmatpush.msra.mxu0 %v2124
        %4731 = vmatpush.msra.mxu0 %v2118
        %4732 = vmatpush.msra.mxu0 %v2112
        %4733 = vmatpush.msra.mxu0 %v2106
        %4734 = vmatpush.msra.mxu0 %v2100
        %4735 = vmatpush.msra.mxu0 %v2094
        %4736 = vmatpush.msra.mxu0 %v2088
        %4737 = vmatpush.msra.mxu0 %v2082
        %4738 = vmatpush.msra.mxu0 %v2076
        %4739 = vmatpush.msra.mxu0 %v2070
        %4740 = vmatpush.msra.mxu0 %v2064
        %4741 = vmatpush.msra.mxu0 %v2058
        %4742 = vmatpush.msra.mxu0 %v2052
        %4743 = vmatpush.msra.mxu0 %v2046
        %4744 = vmatpush.msra.mxu0 %v2040
        %4745 = vmatmul.f32.gmra.mxu0 %v1285
        %v4746 = vpop.f32.mrf.mxu0
        %v4747 = vadd.f32 %v4727, %v4746
        %4748 = vdwg.mxu0
        %4749 = vmatpush.msra.mxu0 %v2226
        %4750 = vmatpush.msra.mxu0 %v2220
        %4751 = vmatpush.msra.mxu0 %v2214
        %4752 = vmatpush.msra.mxu0 %v2208
        %4753 = vmatpush.msra.mxu0 %v2202
        %4754 = vmatpush.msra.mxu0 %v2196
        %4755 = vmatpush.msra.mxu0 %v2190
        %4756 = vmatpush.msra.mxu0 %v2184
        %4757 = vmatpush.msra.mxu0 %v2178
        %4758 = vmatpush.msra.mxu0 %v2172
        %4759 = vmatpush.msra.mxu0 %v2166
        %4760 = vmatpush.msra.mxu0 %v2160
        %4761 = vmatpush.msra.mxu0 %v2154
        %4762 = vmatpush.msra.mxu0 %v2148
        %4763 = vmatpush.msra.mxu0 %v2142
        %4764 = vmatpush.msra.mxu0 %v2136
        %4765 = vmatmul.f32.gmra.mxu0 %v1286
        %v4766 = vpop.f32.mrf.mxu0
        %v4767 = vadd.f32 %v4747, %v4766
        %4768 = vdwg.mxu0
        %4769 = vmatpush.msra.mxu0 %v2322
        %4770 = vmatpush.msra.mxu0 %v2316
        %4771 = vmatpush.msra.mxu0 %v2310
        %4772 = vmatpush.msra.mxu0 %v2304
        %4773 = vmatpush.msra.mxu0 %v2298
        %4774 = vmatpush.msra.mxu0 %v2292
        %4775 = vmatpush.msra.mxu0 %v2286
        %4776 = vmatpush.msra.mxu0 %v2280
        %4777 = vmatpush.msra.mxu0 %v2274
        %4778 = vmatpush.msra.mxu0 %v2268
        %4779 = vmatpush.msra.mxu0 %v2262
        %4780 = vmatpush.msra.mxu0 %v2256
        %4781 = vmatpush.msra.mxu0 %v2250
        %4782 = vmatpush.msra.mxu0 %v2244
        %4783 = vmatpush.msra.mxu0 %v2238
        %4784 = vmatpush.msra.mxu0 %v2232
        %4785 = vmatmul.f32.gmra.mxu0 %v1451
        %v4786 = vpop.f32.mrf.mxu0
        %v4787 = vadd.f32 %v4767, %v4786
        %4788 = vdwg.mxu0
        %4789 = vmatpush.msra.mxu0 %v2418
        %4790 = vmatpush.msra.mxu0 %v2412
        %4791 = vmatpush.msra.mxu0 %v2406
        %4792 = vmatpush.msra.mxu0 %v2400
        %4793 = vmatpush.msra.mxu0 %v2394
        %4794 = vmatpush.msra.mxu0 %v2388
        %4795 = vmatpush.msra.mxu0 %v2382
        %4796 = vmatpush.msra.mxu0 %v2376
        %4797 = vmatpush.msra.mxu0 %v2370
        %4798 = vmatpush.msra.mxu0 %v2364
        %4799 = vmatpush.msra.mxu0 %v2358
        %4800 = vmatpush.msra.mxu0 %v2352
        %4801 = vmatpush.msra.mxu0 %v2346
        %4802 = vmatpush.msra.mxu0 %v2340
        %4803 = vmatpush.msra.mxu0 %v2334
        %4804 = vmatpush.msra.mxu0 %v2328
        %4805 = vmatmul.f32.gmra.mxu0 %v1452
        %v4806 = vpop.f32.mrf.mxu0
        %v4807 = vadd.f32 %v4787, %v4806
        %4808 = vdwg.mxu0
        %4809 = vmatpush.msra.mxu0 %v2514
        %4810 = vmatpush.msra.mxu0 %v2508
        %4811 = vmatpush.msra.mxu0 %v2502
        %4812 = vmatpush.msra.mxu0 %v2496
        %4813 = vmatpush.msra.mxu0 %v2490
        %4814 = vmatpush.msra.mxu0 %v2484
        %4815 = vmatpush.msra.mxu0 %v2478
        %4816 = vmatpush.msra.mxu0 %v2472
        %4817 = vmatpush.msra.mxu0 %v2466
        %4818 = vmatpush.msra.mxu0 %v2460
        %4819 = vmatpush.msra.mxu0 %v2454
        %4820 = vmatpush.msra.mxu0 %v2448
        %4821 = vmatpush.msra.mxu0 %v2442
        %4822 = vmatpush.msra.mxu0 %v2436
        %4823 = vmatpush.msra.mxu0 %v2430
        %4824 = vmatpush.msra.mxu0 %v2424
        %4825 = vmatmul.f32.gmra.mxu0 %v1453
        %v4826 = vpop.f32.mrf.mxu0
        %v4827 = vadd.f32 %v4807, %v4826
        %4828 = vdwg.mxu0
        %4829 = vmatpush.msra.mxu0 %v2610
        %4830 = vmatpush.msra.mxu0 %v2604
        %4831 = vmatpush.msra.mxu0 %v2598
        %4832 = vmatpush.msra.mxu0 %v2592
        %4833 = vmatpush.msra.mxu0 %v2586
        %4834 = vmatpush.msra.mxu0 %v2580
        %4835 = vmatpush.msra.mxu0 %v2574
        %4836 = vmatpush.msra.mxu0 %v2568
        %4837 = vmatpush.msra.mxu0 %v2562
        %4838 = vmatpush.msra.mxu0 %v2556
        %4839 = vmatpush.msra.mxu0 %v2550
        %4840 = vmatpush.msra.mxu0 %v2544
        %4841 = vmatpush.msra.mxu0 %v2538
        %4842 = vmatpush.msra.mxu0 %v2532
        %4843 = vmatpush.msra.mxu0 %v2526
        %4844 = vmatpush.msra.mxu0 %v2520
        %4845 = vmatmul.f32.gmra.mxu0 %v1454
        %v4846 = vpop.f32.mrf.mxu0
        %v4847 = vadd.f32 %v4827, %v4846
        %4848 = vdwg.mxu0
        %4849 = vmatpush.msra.mxu0 %v2706
        %4850 = vmatpush.msra.mxu0 %v2700
        %4851 = vmatpush.msra.mxu0 %v2694
        %4852 = vmatpush.msra.mxu0 %v2688
        %4853 = vmatpush.msra.mxu0 %v2682
        %4854 = vmatpush.msra.mxu0 %v2676
        %4855 = vmatpush.msra.mxu0 %v2670
        %4856 = vmatpush.msra.mxu0 %v2664
        %4857 = vmatpush.msra.mxu0 %v2658
        %4858 = vmatpush.msra.mxu0 %v2652
        %4859 = vmatpush.msra.mxu0 %v2646
        %4860 = vmatpush.msra.mxu0 %v2640
        %4861 = vmatpush.msra.mxu0 %v2634
        %4862 = vmatpush.msra.mxu0 %v2628
        %4863 = vmatpush.msra.mxu0 %v2622
        %4864 = vmatpush.msra.mxu0 %v2616
        %4865 = vmatmul.f32.gmra.mxu0 %v1455
        %v4866 = vpop.f32.mrf.mxu0
        %v4867 = vadd.f32 %v4847, %v4866
        %4868 = vdwg.mxu0
        %4869 = vmatpush.msra.mxu0 %v2802
        %4870 = vmatpush.msra.mxu0 %v2796
        %4871 = vmatpush.msra.mxu0 %v2790
        %4872 = vmatpush.msra.mxu0 %v2784
        %4873 = vmatpush.msra.mxu0 %v2778
        %4874 = vmatpush.msra.mxu0 %v2772
        %4875 = vmatpush.msra.mxu0 %v2766
        %4876 = vmatpush.msra.mxu0 %v2760
        %4877 = vmatpush.msra.mxu0 %v2754
        %4878 = vmatpush.msra.mxu0 %v2748
        %4879 = vmatpush.msra.mxu0 %v2742
        %4880 = vmatpush.msra.mxu0 %v2736
        %4881 = vmatpush.msra.mxu0 %v2730
        %4882 = vmatpush.msra.mxu0 %v2724
        %4883 = vmatpush.msra.mxu0 %v2718
        %4884 = vmatpush.msra.mxu0 %v2712
        %4885 = vmatmul.f32.gmra.mxu0 %v1456
        %v4886 = vpop.f32.mrf.mxu0
        %v4887 = vadd.f32 %v4867, %v4886
        %4888 = vdwg.mxu0
        %4889 = vmatpush.msra.mxu0 %v2898
        %4890 = vmatpush.msra.mxu0 %v2892
        %4891 = vmatpush.msra.mxu0 %v2886
        %4892 = vmatpush.msra.mxu0 %v2880
        %4893 = vmatpush.msra.mxu0 %v2874
        %4894 = vmatpush.msra.mxu0 %v2868
        %4895 = vmatpush.msra.mxu0 %v2862
        %4896 = vmatpush.msra.mxu0 %v2856
        %4897 = vmatpush.msra.mxu0 %v2850
        %4898 = vmatpush.msra.mxu0 %v2844
        %4899 = vmatpush.msra.mxu0 %v2838
        %4900 = vmatpush.msra.mxu0 %v2832
        %4901 = vmatpush.msra.mxu0 %v2826
        %4902 = vmatpush.msra.mxu0 %v2820
        %4903 = vmatpush.msra.mxu0 %v2814
        %4904 = vmatpush.msra.mxu0 %v2808
        %4905 = vmatmul.f32.gmra.mxu0 %v1457
        %v4906 = vpop.f32.mrf.mxu0
        %v4907 = vadd.f32 %v4887, %v4906
        %4908 = vdwg.mxu0
        %4909 = vmatpush.msra.mxu0 %v2994
        %4910 = vmatpush.msra.mxu0 %v2988
        %4911 = vmatpush.msra.mxu0 %v2982
        %4912 = vmatpush.msra.mxu0 %v2976
        %4913 = vmatpush.msra.mxu0 %v2970
        %4914 = vmatpush.msra.mxu0 %v2964
        %4915 = vmatpush.msra.mxu0 %v2958
        %4916 = vmatpush.msra.mxu0 %v2952
        %4917 = vmatpush.msra.mxu0 %v2946
        %4918 = vmatpush.msra.mxu0 %v2940
        %4919 = vmatpush.msra.mxu0 %v2934
        %4920 = vmatpush.msra.mxu0 %v2928
        %4921 = vmatpush.msra.mxu0 %v2922
        %4922 = vmatpush.msra.mxu0 %v2916
        %4923 = vmatpush.msra.mxu0 %v2910
        %4924 = vmatpush.msra.mxu0 %v2904
        %4925 = vmatmul.f32.gmra.mxu0 %v1458
        %v4926 = vpop.f32.mrf.mxu0
        %v4927 = vadd.f32 %v4907, %v4926
        %4928 = vdwg.mxu0
        %vm4929 = vcmp.gt.f32.partialorder %v3327, 0.0
        %vm4930 = vcmp.gt.f32.partialorder %v3647, 0.0
        %vm4931 = vcmp.gt.f32.partialorder %v3967, 0.0
        %vm4932 = vcmp.gt.f32.partialorder %v4287, 0.0
        %vm4933 = vcmp.gt.f32.partialorder %v4607, 0.0
        %vm4934 = vcmp.gt.f32.partialorder %v4927, 0.0
        %v4935 = vmin.f32 %v3327, 0.0
        %v4936 = vmin.f32 %v3647, 0.0
        %v4937 = vmin.f32 %v3967, 0.0
        %v4938 = vmin.f32 %v4287, 0.0
        %v4939 = vmin.f32 %v4607, 0.0
        %v4940 = vmin.f32 %v4927, 0.0
        %v4941 = vmul.f32 %v4935, 1.442695
        %v4942 = vpow.pop %v4941
        %v4943 = vmul.f32 %v4936, 1.442695
        %v4944 = vpow.pop %v4943
        %v4945 = vmul.f32 %v4937, 1.442695
        %v4946 = vpow.pop %v4945
        %v4947 = vmul.f32 %v4938, 1.442695
        %v4948 = vpow.pop %v4947
        %v4949 = vmul.f32 %v4939, 1.442695
        %v4950 = vpow.pop %v4949
        %v4951 = vmul.f32 %v4940, 1.442695
        %v4952 = vpow.pop %v4951
        %v4953 = vsub.f32 %v4942, 1.0
        %v4954 = vsub.f32 %v4944, 1.0
        %v4955 = vsub.f32 %v4946, 1.0
        %v4956 = vsub.f32 %v4948, 1.0
        %v4957 = vsub.f32 %v4950, 1.0
        %v4958 = vsub.f32 %v4952, 1.0
        %v4959 = vsel %vm4929, %v3327, %v4953
        %v4960 = vsel %vm4930, %v3647, %v4954
        %v4961 = vsel %vm4931, %v3967, %v4955
        %v4962 = vsel %vm4932, %v4287, %v4956
        %v4963 = vsel %vm4933, %v4607, %v4957
        %v4964 = vsel %vm4934, %v4927, %v4958
        %v4965 = vld [vmem:[%s7] sm:$0xff]
        %v4966 = vld [vmem:[%s7 + $0x8] sm:$0xff]
        %v4967 = vld [vmem:[%s7 + $0x10] sm:$0xff]
        %v4968 = vld [vmem:[%s7 + $0x18] sm:$0xff]
        %v4969 = vld [vmem:[%s7 + $0x20] sm:$0xff]
        %v4970 = vld [vmem:[%s7 + $0x28] sm:$0xff]
        %v4971 = vld [vmem:[%s7 + $0x30] sm:$0xff]
        %v4972 = vld [vmem:[%s7 + $0x38] sm:$0xff]
        %v4973 = vld [vmem:[%s7 + $0x40] sm:$0xff]
        %v4974 = vld [vmem:[%s7 + $0x48] sm:$0xff]
        %v4975 = vld [vmem:[%s7 + $0x50] sm:$0xff]
        %v4976 = vld [vmem:[%s7 + $0x58] sm:$0xff]
        %v4977 = vld [vmem:[%s7 + $0x60] sm:$0xff]
        %v4978 = vld [vmem:[%s7 + $0x68] sm:$0xff]
        %v4979 = vld [vmem:[%s7 + $0x70] sm:$0xff]
        %v4980 = vld [vmem:[%s7 + $0x78] sm:$0xff]
        %v4981 = vld [vmem:[%s7 + $0x80] sm:$0xff]
        %v4982 = vld [vmem:[%s7 + $0x88] sm:$0xff]
        %v4983 = vld [vmem:[%s7 + $0x90] sm:$0xff]
        %v4984 = vld [vmem:[%s7 + $0x98] sm:$0xff]
        %v4985 = vld [vmem:[%s7 + $0xa0] sm:$0xff]
        %v4986 = vld [vmem:[%s7 + $0xa8] sm:$0xff]
        %v4987 = vld [vmem:[%s7 + $0xb0] sm:$0xff]
        %v4988 = vld [vmem:[%s7 + $0xb8] sm:$0xff]
        %v4989 = vld [vmem:[%s7 + $0xc0] sm:$0xff]
        %v4990 = vld [vmem:[%s7 + $0xc8] sm:$0xff]
        %v4991 = vld [vmem:[%s7 + $0xd0] sm:$0xff]
        %v4992 = vld [vmem:[%s7 + $0xd8] sm:$0xff]
        %v4993 = vld [vmem:[%s7 + $0xe0] sm:$0xff]
        %v4994 = vld [vmem:[%s7 + $0xe8] sm:$0xff]
        %v4995 = vld [vmem:[%s7 + $0xf0] sm:$0xff]
        %v4996 = vld [vmem:[%s7 + $0xf8] sm:$0xff]
        %v4997 = vld [vmem:[%s7 + $0x100] sm:$0xff]
        %v4998 = vld [vmem:[%s7 + $0x108] sm:$0xff]
        %v4999 = vld [vmem:[%s7 + $0x110] sm:$0xff]
        %v5000 = vld [vmem:[%s7 + $0x118] sm:$0xff]
        %v5001 = vld [vmem:[%s7 + $0x120] sm:$0xff]
        %v5002 = vld [vmem:[%s7 + $0x128] sm:$0xff]
        %v5003 = vld [vmem:[%s7 + $0x130] sm:$0xff]
        %v5004 = vld [vmem:[%s7 + $0x138] sm:$0xff]
        %v5005 = vld [vmem:[%s7 + $0x140] sm:$0xff]
        %v5006 = vld [vmem:[%s7 + $0x148] sm:$0xff]
        %v5007 = vld [vmem:[%s7 + $0x150] sm:$0xff]
        %v5008 = vld [vmem:[%s7 + $0x158] sm:$0xff]
        %v5009 = vld [vmem:[%s7 + $0x160] sm:$0xff]
        %v5010 = vld [vmem:[%s7 + $0x168] sm:$0xff]
        %v5011 = vld [vmem:[%s7 + $0x170] sm:$0xff]
        %v5012 = vld [vmem:[%s7 + $0x178] sm:$0xff]
        %v5013 = vld [vmem:[%s7 + $0x180] sm:$0xff]
        %v5014 = vld [vmem:[%s7 + $0x188] sm:$0xff]
        %v5015 = vld [vmem:[%s7 + $0x190] sm:$0xff]
        %v5016 = vld [vmem:[%s7 + $0x198] sm:$0xff]
        %v5017 = vld [vmem:[%s7 + $0x1a0] sm:$0xff]
        %v5018 = vld [vmem:[%s7 + $0x1a8] sm:$0xff]
        %v5019 = vld [vmem:[%s7 + $0x1b0] sm:$0xff]
        %v5020 = vld [vmem:[%s7 + $0x1b8] sm:$0xff]
        %v5021 = vld [vmem:[%s7 + $0x1c0] sm:$0xff]
        %v5022 = vld [vmem:[%s7 + $0x1c8] sm:$0xff]
        %v5023 = vld [vmem:[%s7 + $0x1d0] sm:$0xff]
        %v5024 = vld [vmem:[%s7 + $0x1d8] sm:$0xff]
        %v5025 = vld [vmem:[%s7 + $0x1e0] sm:$0xff]
        %v5026 = vld [vmem:[%s7 + $0x1e8] sm:$0xff]
        %v5027 = vld [vmem:[%s7 + $0x1f0] sm:$0xff]
        %v5028 = vld [vmem:[%s7 + $0x1f8] sm:$0xff]
        %v5029 = vld [vmem:[%s7 + $0x200] sm:$0xff]
        %v5030 = vld [vmem:[%s7 + $0x208] sm:$0xff]
        %v5031 = vld [vmem:[%s7 + $0x210] sm:$0xff]
        %v5032 = vld [vmem:[%s7 + $0x218] sm:$0xff]
        %v5033 = vld [vmem:[%s7 + $0x220] sm:$0xff]
        %v5034 = vld [vmem:[%s7 + $0x228] sm:$0xff]
        %v5035 = vld [vmem:[%s7 + $0x230] sm:$0xff]
        %v5036 = vld [vmem:[%s7 + $0x238] sm:$0xff]
        %v5037 = vld [vmem:[%s7 + $0x240] sm:$0xff]
        %v5038 = vld [vmem:[%s7 + $0x248] sm:$0xff]
        %v5039 = vld [vmem:[%s7 + $0x250] sm:$0xff]
        %v5040 = vld [vmem:[%s7 + $0x258] sm:$0xff]
        %v5041 = vld [vmem:[%s7 + $0x260] sm:$0xff]
        %v5042 = vld [vmem:[%s7 + $0x268] sm:$0xff]
        %v5043 = vld [vmem:[%s7 + $0x270] sm:$0xff]
        %v5044 = vld [vmem:[%s7 + $0x278] sm:$0xff]
        %v5045 = vld [vmem:[%s7 + $0x280] sm:$0xff]
        %v5046 = vld [vmem:[%s7 + $0x288] sm:$0xff]
        %v5047 = vld [vmem:[%s7 + $0x290] sm:$0xff]
        %v5048 = vld [vmem:[%s7 + $0x298] sm:$0xff]
        %v5049 = vld [vmem:[%s7 + $0x2a0] sm:$0xff]
        %v5050 = vld [vmem:[%s7 + $0x2a8] sm:$0xff]
        %v5051 = vld [vmem:[%s7 + $0x2b0] sm:$0xff]
        %v5052 = vld [vmem:[%s7 + $0x2b8] sm:$0xff]
        %v5053 = vld [vmem:[%s7 + $0x2c0] sm:$0xff]
        %v5054 = vld [vmem:[%s7 + $0x2c8] sm:$0xff]
        %v5055 = vld [vmem:[%s7 + $0x2d0] sm:$0xff]
        %v5056 = vld [vmem:[%s7 + $0x2d8] sm:$0xff]
        %v5057 = vld [vmem:[%s7 + $0x2e0] sm:$0xff]
        %v5058 = vld [vmem:[%s7 + $0x2e8] sm:$0xff]
        %v5059 = vld [vmem:[%s7 + $0x2f0] sm:$0xff]
        %v5060 = vld [vmem:[%s7 + $0x2f8] sm:$0xff]
        %v5061 = vld [vmem:[%s8] sm:$0x1]
        %v5063 = vperm.slane %v5061, 0
        %5065 = vmatpush.msra.mxu0 %v4980
        %5066 = vmatpush.msra.mxu0 %v4979
        %5067 = vmatpush.msra.mxu0 %v4978
        %5068 = vmatpush.msra.mxu0 %v4977
        %5069 = vmatpush.msra.mxu0 %v4976
        %5070 = vmatpush.msra.mxu0 %v4975
        %5071 = vmatpush.msra.mxu0 %v4974
        %5072 = vmatpush.msra.mxu0 %v4973
        %5073 = vmatpush.msra.mxu0 %v4972
        %5074 = vmatpush.msra.mxu0 %v4971
        %5075 = vmatpush.msra.mxu0 %v4970
        %5076 = vmatpush.msra.mxu0 %v4969
        %5077 = vmatpush.msra.mxu0 %v4968
        %5078 = vmatpush.msra.mxu0 %v4967
        %5079 = vmatpush.msra.mxu0 %v4966
        %5080 = vmatpush.msra.mxu0 %v4965
        %5081 = vmatmul.f32.gmra.mxu0 %v4959
        %v5082 = vpop.f32.mrf.mxu0
        %v5083 = vadd.f32 %v5063, %v5082
        %5084 = vdwg.mxu0
        %5085 = vmatpush.msra.mxu0 %v4996
        %5086 = vmatpush.msra.mxu0 %v4995
        %5087 = vmatpush.msra.mxu0 %v4994
        %5088 = vmatpush.msra.mxu0 %v4993
        %5089 = vmatpush.msra.mxu0 %v4992
        %5090 = vmatpush.msra.mxu0 %v4991
        %5091 = vmatpush.msra.mxu0 %v4990
        %5092 = vmatpush.msra.mxu0 %v4989
        %5093 = vmatpush.msra.mxu0 %v4988
        %5094 = vmatpush.msra.mxu0 %v4987
        %5095 = vmatpush.msra.mxu0 %v4986
        %5096 = vmatpush.msra.mxu0 %v4985
        %5097 = vmatpush.msra.mxu0 %v4984
        %5098 = vmatpush.msra.mxu0 %v4983
        %5099 = vmatpush.msra.mxu0 %v4982
        %5100 = vmatpush.msra.mxu0 %v4981
        %5101 = vmatmul.f32.gmra.mxu0 %v4960
        %v5102 = vpop.f32.mrf.mxu0
        %v5103 = vadd.f32 %v5083, %v5102
        %5104 = vdwg.mxu0
        %5105 = vmatpush.msra.mxu0 %v5012
        %5106 = vmatpush.msra.mxu0 %v5011
        %5107 = vmatpush.msra.mxu0 %v5010
        %5108 = vmatpush.msra.mxu0 %v5009
        %5109 = vmatpush.msra.mxu0 %v5008
        %5110 = vmatpush.msra.mxu0 %v5007
        %5111 = vmatpush.msra.mxu0 %v5006
        %5112 = vmatpush.msra.mxu0 %v5005
        %5113 = vmatpush.msra.mxu0 %v5004
        %5114 = vmatpush.msra.mxu0 %v5003
        %5115 = vmatpush.msra.mxu0 %v5002
        %5116 = vmatpush.msra.mxu0 %v5001
        %5117 = vmatpush.msra.mxu0 %v5000
        %5118 = vmatpush.msra.mxu0 %v4999
        %5119 = vmatpush.msra.mxu0 %v4998
        %5120 = vmatpush.msra.mxu0 %v4997
        %5121 = vmatmul.f32.gmra.mxu0 %v4961
        %v5122 = vpop.f32.mrf.mxu0
        %v5123 = vadd.f32 %v5103, %v5122
        %5124 = vdwg.mxu0
        %5125 = vmatpush.msra.mxu0 %v5028
        %5126 = vmatpush.msra.mxu0 %v5027
        %5127 = vmatpush.msra.mxu0 %v5026
        %5128 = vmatpush.msra.mxu0 %v5025
        %5129 = vmatpush.msra.mxu0 %v5024
        %5130 = vmatpush.msra.mxu0 %v5023
        %5131 = vmatpush.msra.mxu0 %v5022
        %5132 = vmatpush.msra.mxu0 %v5021
        %5133 = vmatpush.msra.mxu0 %v5020
        %5134 = vmatpush.msra.mxu0 %v5019
        %5135 = vmatpush.msra.mxu0 %v5018
        %5136 = vmatpush.msra.mxu0 %v5017
        %5137 = vmatpush.msra.mxu0 %v5016
        %5138 = vmatpush.msra.mxu0 %v5015
        %5139 = vmatpush.msra.mxu0 %v5014
        %5140 = vmatpush.msra.mxu0 %v5013
        %5141 = vmatmul.f32.gmra.mxu0 %v4962
        %v5142 = vpop.f32.mrf.mxu0
        %v5143 = vadd.f32 %v5123, %v5142
        %5144 = vdwg.mxu0
        %5145 = vmatpush.msra.mxu0 %v5044
        %5146 = vmatpush.msra.mxu0 %v5043
        %5147 = vmatpush.msra.mxu0 %v5042
        %5148 = vmatpush.msra.mxu0 %v5041
        %5149 = vmatpush.msra.mxu0 %v5040
        %5150 = vmatpush.msra.mxu0 %v5039
        %5151 = vmatpush.msra.mxu0 %v5038
        %5152 = vmatpush.msra.mxu0 %v5037
        %5153 = vmatpush.msra.mxu0 %v5036
        %5154 = vmatpush.msra.mxu0 %v5035
        %5155 = vmatpush.msra.mxu0 %v5034
        %5156 = vmatpush.msra.mxu0 %v5033
        %5157 = vmatpush.msra.mxu0 %v5032
        %5158 = vmatpush.msra.mxu0 %v5031
        %5159 = vmatpush.msra.mxu0 %v5030
        %5160 = vmatpush.msra.mxu0 %v5029
        %5161 = vmatmul.f32.gmra.mxu0 %v4963
        %v5162 = vpop.f32.mrf.mxu0
        %v5163 = vadd.f32 %v5143, %v5162
        %5164 = vdwg.mxu0
        %5165 = vmatpush.msra.mxu0 %v5060
        %5166 = vmatpush.msra.mxu0 %v5059
        %5167 = vmatpush.msra.mxu0 %v5058
        %5168 = vmatpush.msra.mxu0 %v5057
        %5169 = vmatpush.msra.mxu0 %v5056
        %5170 = vmatpush.msra.mxu0 %v5055
        %5171 = vmatpush.msra.mxu0 %v5054
        %5172 = vmatpush.msra.mxu0 %v5053
        %5173 = vmatpush.msra.mxu0 %v5052
        %5174 = vmatpush.msra.mxu0 %v5051
        %5175 = vmatpush.msra.mxu0 %v5050
        %5176 = vmatpush.msra.mxu0 %v5049
        %5177 = vmatpush.msra.mxu0 %v5048
        %5178 = vmatpush.msra.mxu0 %v5047
        %5179 = vmatpush.msra.mxu0 %v5046
        %5180 = vmatpush.msra.mxu0 %v5045
        %5181 = vmatmul.f32.gmra.mxu0 %v4964
        %v5182 = vpop.f32.mrf.mxu0
        %v5183 = vadd.f32 %v5163, %v5182
        %5184 = vdwg.mxu0
        %vm5185 = vcmask 80896
        %5186 = vst.msk [vmem:[%s325] sm:$0xff] %vm5185, %v5183
        %s5187 = sand.u32 %s225, 1
        %s5188 = scalar_lea.sflag [#allocation3], %s5187
        %s5189 = sand.u32 %s225, 1
        %s5190 = smul.addr %s5189, 8
        %s5191 = scalar_lea.vmem [#allocation2], %s5190
        // Predicated region
        $region57: #{dis_comnet_forward.1} parent=55 // pred_check
          %p5192 = pneg %p235
        $region58: #{dis_comnet_forward.1} parent=55 // pred_check_branch
          %5194 = sbr.rel (%p5192) target = $region60
        $region59: #{dis_comnet_forward.1} parent=55 // pred_region
          %5196 = vsyncadd %s5188, 0
          %s5197 = smul.addr %s23, 8
          %s5198 = scalar_lea.hbm %s9, %s5197
          %s5200 = sshll.u32 %s5191, 4
          %s5201 = int_to_ptr.vmem [resolvable:$true] %s5200
          %s5202 = sshll.u32 %s5198, 4
          %s5203 = int_to_ptr.hbm [resolvable:$true] %s5202
          %5205 = dma.vmem_to_hbm [thread:$0]  %s5201, 128, %s5203, %s5188
        $region60: #{dis_comnet_forward.1} parent=55 // pred_fallthru
          _
      $region56: #{dis_comnet_forward.1} parent=5 // pred_fallthru
        _
      %p5206 = scmp.le.s32.totalorder 2, %s18
      // Predicated region
      $region61: #{dis_comnet_forward.1} parent=5 // pred_check
        %p5207 = pneg %p5206
      $region62: #{dis_comnet_forward.1} parent=5 // pred_check_branch
        %5209 = sbr.rel (%p5207) target = $region64
      $region63: #{dis_comnet_forward.1} parent=5 // pred_region
        %s5210 = ssub.s32 %s18, 2
        // Predicated region
        $region65: #{dis_comnet_forward.1} parent=63 // pred_check
          %p5211 = pneg %p241
        $region66: #{dis_comnet_forward.1} parent=63 // pred_check_branch
          %5213 = sbr.rel (%p5211) target = $region68
        $region67: #{dis_comnet_forward.1} parent=63 // pred_region
          %s5214 = sand.u32 %s226, 1
          %s5215 = scalar_lea.sflag [#allocation3], %s5214
          %s5216 = sand.u32 %s226, 1
          %s5217 = smul.addr %s5216, 8
          %s5218 = scalar_lea.vmem [#allocation2], %s5217
          %5220 = dma.done %s5215, 128
        $region68: #{dis_comnet_forward.1} parent=63 // pred_fallthru
          _
      $region64: #{dis_comnet_forward.1} parent=5 // pred_fallthru
        _
    $region6: #{dis_comnet_forward.1} parent=1 // loop_footer
      %s22 = sadd.s32 1, %s18
    $region7: #{dis_comnet_forward.1} parent=1 // loop_footer_branch
      %17 = sbr.rel target = $region3
    $region8: #{dis_comnet_forward.1} parent=1 // loop_exit
      _
    %5221 = vsyncpa [#allocation3], 1
    %s5222 = scalar_lea.sflag [#allocation3], 1
    %5223 = vsyncpa %s5222, 1

</llo_original>
